<compile_context>
chip_gen: v7x
topology: tpu7x:2x2x1
jax: 0.10.0
libtpu: 0.0.40
codegen_flags: <defaults>
</compile_context>

<pallas_src>
import functools

import jax
import jax.numpy as jnp
from jax import lax
from jax.experimental import pallas as pl
from jax.experimental.pallas import tpu as pltpu


# ----------------------------------------------------------------------------- kernel


def _encoder_lstm_kernel(*refs, T, H, num_layers):
    """Fused bidirectional multi-layer LSTM.

    refs layout:
      inputs : len_ref [B,1] i32, x_ref [T,B,D] f32, (Wcat [K,8H], bcat [1,8H]) per layer
      outputs: hh_ref [T,B,2H], ht_ref [B,2H], ct_ref [B,2H]
      scratch: (hh_fwd [T,B,H], hh_bwd [T,B,H]) per non-final layer
    """
    n_in = 2 + 2 * num_layers
    len_ref, x_ref = refs[0], refs[1]
    wb_refs = refs[2:n_in]
    hh_ref, ht_ref, ct_ref = refs[n_in:n_in + 3]
    scratch = refs[n_in + 3:]

    B = x_ref.shape[1]
    H2, H8 = 2 * H, 8 * H

    # ---- loop-invariant values, hoisted (JAX does not CSE broadcasts) ----
    lens = len_ref[...].astype(jnp.int32)                       # [B, 1]
    lens2 = jnp.broadcast_to(lens, (B, H2))                     # [B, 2H]
    lane2 = lax.broadcasted_iota(jnp.int32, (B, H2), 1)
    is_fwd_lane = lane2 < H                                     # fwd state lanes
    lane8 = lax.broadcasted_iota(jnp.int32, (B, H8), 1)
    is_g_gate = (lane8 >= 4 * H) & (lane8 < 6 * H)              # tanh-gate lanes

    h_state = jnp.zeros((B, H2), jnp.float32)
    c_state = jnp.zeros((B, H2), jnp.float32)

    for layer in range(num_layers):
        w_ref = wb_refs[2 * layer]
        b_ref = wb_refs[2 * layer + 1]
        bias = jnp.broadcast_to(b_ref[...], (B, H8))            # hoisted per layer
        last = layer == num_layers - 1

        if layer == 0:
            def read_in(t):
                return (x_ref[t],)                              # [B, D]
        else:
            pf = scratch[2 * (layer - 1)]
            pb = scratch[2 * (layer - 1) + 1]

            def read_in(t, pf=pf, pb=pb):
                return (pf[t], pb[t])                           # ([B,H], [B,H])

        # fresh zero state for each layer
        h_state = jnp.zeros((B, H2), jnp.float32)
        c_state = jnp.zeros((B, H2), jnp.float32)

        # Time recurrence: fully unrolled (static T), static indices everywhere.
        for s in range(T):
            t_f, t_b = s, T - 1 - s

            # inp = [x_fwd | x_bwd | h_state(fwd,bwd)]  matching the packed-weight rows
            inp = jnp.concatenate(
                read_in(t_f) + read_in(t_b) + (h_state,), axis=-1)

            # one MXU pass: all four gates for both directions, N = 8H = 128 lanes
            gates = jnp.dot(inp, w_ref[...],
                            preferred_element_type=jnp.float32) + bias

            # full-width EUP activations + one lane select (no per-gate sliced transc.)
            act = jnp.where(is_g_gate, jnp.tanh(gates), jax.nn.sigmoid(gates))
            i_g = act[:, 0 * H2:1 * H2]
            f_g = act[:, 1 * H2:2 * H2]
            g_g = act[:, 2 * H2:3 * H2]
            o_g = act[:, 3 * H2:4 * H2]

            c_new = f_g * c_state + i_g * g_g
            h_new = o_g * jnp.tanh(c_new)

            # packed-sequence masking: fwd lanes test t_f, bwd lanes test t_b
            t_sel = jnp.where(is_fwd_lane, t_f, t_b)
            valid = t_sel < lens2
            h_out = jnp.where(valid, h_new, 0.0)                # padded outputs are zero

            if last:
                hh_ref[t_f, :, 0:H] = h_out[:, 0:H]
                hh_ref[t_b, :, H:H2] = h_out[:, H:H2]
            else:
                scratch[2 * layer][t_f] = h_out[:, 0:H]
                scratch[2 * layer + 1][t_b] = h_out[:, H:H2]

            h_state = jnp.where(valid, h_new, h_state)          # freeze past seq end
            c_state = jnp.where(valid, c_new, c_state)

    # final states of the LAST layer, (backward, forward) order:
    # torch.cat((packed_h_t[-1], packed_h_t[-2]), 1)
    ht_ref[:, 0:H] = h_state[:, H:H2]
    ht_ref[:, H:H2] = h_state[:, 0:H]
    ct_ref[:, 0:H] = c_state[:, H:H2]
    ct_ref[:, H:H2] = c_state[:, 0:H]


# --------------------------------------------------------------------------- wrapper


def encoder_rnn_forward(x_btd, xlen, packed):
    """Mirrors EncoderRNN.forward in eval mode (dropouts are identities).

    x_btd : [B, T, D] float32 (batch_first, as in the PyTorch module)
    xlen  : [B]       int
    packed: output of pack_params()
    returns (hh_inv [T, B, 2H], (h_t [1, B, 2H], c_t [1, B, 2H]))
    """
    B, T, D = x_btd.shape
    H = packed["H"]
    layers = packed["layers"]
    num_layers = len(layers)

    x_tbd = jnp.transpose(x_btd, (1, 0, 2)).astype(jnp.float32)   # time-major
    xlen2d = xlen.astype(jnp.int32).reshape(B, 1)

    in_specs = [
        pl.BlockSpec((B, 1), lambda i: (0, 0)),                   # lengths (loaded once)
        pl.BlockSpec((T, B, D), lambda i: (0, 0, 0)),             # full sequence resident
    ]
    inputs = [xlen2d, x_tbd]
    for (w_cat, b_cat) in layers:
        in_specs.append(pl.BlockSpec(w_cat.shape, lambda i: (0, 0)))
        in_specs.append(pl.BlockSpec(b_cat.shape, lambda i: (0, 0)))
        inputs.extend([w_cat, b_cat])

    out_shape = (
        jax.ShapeDtypeStruct((T, B, 2 * H), jnp.float32),         # hh (time-major)
        jax.ShapeDtypeStruct((B, 2 * H), jnp.float32),            # h_t (bwd|fwd)
        jax.ShapeDtypeStruct((B, 2 * H), jnp.float32),            # c_t (bwd|fwd)
    )
    out_specs = (
        pl.BlockSpec((T, B, 2 * H), lambda i: (0, 0, 0)),
        pl.BlockSpec((B, 2 * H), lambda i: (0, 0)),
        pl.BlockSpec((B, 2 * H), lambda i: (0, 0)),
    )

    scratch_shapes = []
    for _ in range(num_layers - 1):                               # hidden history per layer
        scratch_shapes.append(pltpu.VMEM((T, B, H), jnp.float32))
        scratch_shapes.append(pltpu.VMEM((T, B, H), jnp.float32))

    kernel = functools.partial(_encoder_lstm_kernel, T=T, H=H, num_layers=num_layers)

    hh, h_t, c_t = pl.pallas_call(
        kernel,
        out_shape=out_shape,
        grid=(1,),
        in_specs=in_specs,
        out_specs=out_specs,
        scratch_shapes=scratch_shapes,
        compiler_params=pltpu.CompilerParams(
            dimension_semantics=("arbitrary",),
        ),
    )(*inputs)

    # dropout(..., training=False) == identity; hh already time-major (== .transpose(0,1))
    return hh, (h_t[None], c_t[None])


# --------------------------------------------------------------------- weight packing


def init_params(key, input_size, hidden_size, num_layers):
    """Deterministic PyTorch-shaped LSTM parameters (bidirectional)."""
    H = hidden_size // 2                       # per-direction hidden
    scale = 1.0 / float(H) ** 0.5
    params = []
    for layer in range(num_layers):
        d_in = input_size if layer == 0 else 2 * H
        layer_p = {}
        for dname in ("fwd", "bwd"):
            key, k1, k2, k3, k4 = jax.random.split(key, 5)
            w_ih = jax.random.uniform(k1, (4 * H, d_in), jnp.float32, -scale, scale)
            w_hh = jax.random.uniform(k2, (4 * H, H), jnp.float32, -scale, scale)
            b_ih = jax.random.uniform(k3, (4 * H,), jnp.float32, -scale, scale)
            b_hh = jax.random.uniform(k4, (4 * H,), jnp.float32, -scale, scale)
            layer_p[dname] = (w_ih, w_hh, b_ih, b_hh)
        params.append(layer_p)
    return params


def pack_params(raw_params, hidden_size):
    """Pack per-direction PyTorch weights into one block-diagonal [K, 8H] matrix per layer.

    Row layout   : [x_fwd (Din) | x_bwd (Din) | h_fwd (H) | h_bwd (H)]
    Column layout: gate blocks of width 2H in (i, f, g, o) order, each block = [fwd | bwd].
    """
    H = hidden_size // 2
    layers = []
    for lp in raw_params:
        w_ih_f, w_hh_f, b_ih_f, b_hh_f = lp["fwd"]
        w_ih_b, w_hh_b, b_ih_b, b_hh_b = lp["bwd"]
        d_in = w_ih_f.shape[1]
        K = 2 * d_in + 2 * H
        w_cat = jnp.zeros((K, 8 * H), jnp.float32)
        b_cat = jnp.zeros((1, 8 * H), jnp.float32)
        wf, wb = w_ih_f.T, w_ih_b.T          # [d_in, 4H]
        uf, ub = w_hh_f.T, w_hh_b.T          # [H, 4H]
        bf, bb = b_ih_f + b_hh_f, b_ih_b + b_hh_b
        for gi in range(4):                  # PyTorch gate order i, f, g, o
            c0 = 2 * H * gi
            gsl = slice(gi * H, (gi + 1) * H)
            w_cat = w_cat.at[0:d_in, c0:c0 + H].set(wf[:, gsl])
            w_cat = w_cat.at[d_in:2 * d_in, c0 + H:c0 + 2 * H].set(wb[:, gsl])
            w_cat = w_cat.at[2 * d_in:2 * d_in + H, c0:c0 + H].set(uf[:, gsl])
            w_cat = w_cat.at[2 * d_in + H:K, c0 + H:c0 + 2 * H].set(ub[:, gsl])
            b_cat = b_cat.at[0, c0:c0 + H].set(bf[gsl])
            b_cat = b_cat.at[0, c0 + H:c0 + 2 * H].set(bb[gsl])
        layers.append((w_cat, b_cat))
    return {"H": H, "layers": layers}


# ----------------------------------------------------------------- pure-JAX reference


def _reference_forward(x_btd, xlen, raw_params, hidden_size):
    """Plain-JAX bidirectional LSTM with packed-sequence masking (for verification)."""
    H = hidden_size // 2
    B, T, D = x_btd.shape
    x = jnp.transpose(x_btd, (1, 0, 2)).astype(jnp.float32)
    lens = xlen.astype(jnp.int32)

    def run_dir(inp, w_ih, w_hh, b_ih, b_hh, reverse):
        h = jnp.zeros((B, H), jnp.float32)
        c = jnp.zeros((B, H), jnp.float32)
        outs = [None] * T
        order = range(T - 1, -1, -1) if reverse else range(T)
        for t in order:
            g = inp[t] @ w_ih.T + h @ w_hh.T + b_ih + b_hh
            i = jax.nn.sigmoid(g[:, 0:H]); f = jax.nn.sigmoid(g[:, H:2 * H])
            gg = jnp.tanh(g[:, 2 * H:3 * H]); o = jax.nn.sigmoid(g[:, 3 * H:4 * H])
            c_new = f * c + i * gg
            h_new = o * jnp.tanh(c_new)
            valid = (t < lens)[:, None]
            outs[t] = jnp.where(valid, h_new, 0.0)
            h = jnp.where(valid, h_new, h)
            c = jnp.where(valid, c_new, c)
        return jnp.stack(outs, axis=0), h, c

    layer_in = x
    hf = cf = hb = cb = None
    for lp in raw_params:
        of, hf, cf = run_dir(layer_in, *lp["fwd"], reverse=False)
        ob, hb, cb = run_dir(layer_in, *lp["bwd"], reverse=True)
        layer_in = jnp.concatenate([of, ob], axis=-1)
    h_t = jnp.concatenate([hb, hf], axis=1)[None]
    c_t = jnp.concatenate([cb, cf], axis=1)[None]
    return layer_in, (h_t, c_t)


# ----------------------------------------------------------------------------- main


if __name__ == "__main__":
    # Module config: input_size=8, hidden_size=32, bidirectional=True, num_layers=2
    B, T, D, HID, NL = 4, 8, 8, 32, 2

    key = jax.random.PRNGKey(0)
    kx, kp = jax.random.split(key)
    x = jax.random.normal(kx, (B, T, D), dtype=jnp.float32)
    xlen = jnp.array([8, 5, 3, 6], dtype=jnp.int32)

    raw = init_params(kp, D, HID, NL)
    packed = pack_params(raw, HID)

    hh_inv, (h_t, c_t) = encoder_rnn_forward(x, xlen, packed)
    jax.block_until_ready((hh_inv, h_t, c_t))

    assert hh_inv.shape == (T, B, HID)
    assert h_t.shape == (1, B, HID) and c_t.shape == (1, B, HID)
    # padded positions must be exactly zero (pack/pad semantics)
    assert float(jnp.abs(hh_inv[5:, 1]).max()) == 0.0
    assert float(jnp.abs(hh_inv[3:, 2]).max()) == 0.0

    # verify against the pure-JAX reference
    hh_ref, (h_ref, c_ref) = _reference_forward(x, xlen, raw, HID)
    assert float(jnp.max(jnp.abs(hh_inv - hh_ref))) < 1e-3
    assert float(jnp.max(jnp.abs(h_t - h_ref))) < 1e-3
    assert float(jnp.max(jnp.abs(c_t - c_ref))) < 1e-3

    print("KERNEL_OK")
</pallas_src>

<mosaic_0001>
module attributes {stable_mosaic.version = 11 : i64} {
  func.func @_encoder_lstm_kernel(%arg0: i32, %arg1: memref<4x1xi32, #tpu.memory_space<vmem>>, %arg2: memref<8x4x8xf32, #tpu.memory_space<vmem>>, %arg3: memref<48x128xf32, #tpu.memory_space<vmem>>, %arg4: memref<1x128xf32, #tpu.memory_space<vmem>>, %arg5: memref<96x128xf32, #tpu.memory_space<vmem>>, %arg6: memref<1x128xf32, #tpu.memory_space<vmem>>, %arg7: memref<8x4x32xf32, #tpu.memory_space<vmem>>, %arg8: memref<4x32xf32, #tpu.memory_space<vmem>>, %arg9: memref<4x32xf32, #tpu.memory_space<vmem>>, %arg10: memref<8x4x16xf32, #tpu.memory_space<vmem>>, %arg11: memref<8x4x16xf32, #tpu.memory_space<vmem>>) attributes {dimension_semantics = [#tpu.dimension_semantics<arbitrary>], iteration_bounds = array<i64: 1>, scalar_prefetch = 0 : i64, scratch_operands = 2 : i64, tpu.core_type = #tpu.core_type<tc>, window_params = [{pipeline_mode = #tpu.pipeline_mode<synchronous>, transform_indices = @transform_0, window_bounds = array<i64: 4, 1>}, {pipeline_mode = #tpu.pipeline_mode<synchronous>, transform_indices = @transform_1, window_bounds = array<i64: 8, 4, 8>}, {pipeline_mode = #tpu.pipeline_mode<synchronous>, transform_indices = @transform_2, window_bounds = array<i64: 48, 128>}, {pipeline_mode = #tpu.pipeline_mode<synchronous>, transform_indices = @transform_3, window_bounds = array<i64: 1, 128>}, {pipeline_mode = #tpu.pipeline_mode<synchronous>, transform_indices = @transform_4, window_bounds = array<i64: 96, 128>}, {pipeline_mode = #tpu.pipeline_mode<synchronous>, transform_indices = @transform_5, window_bounds = array<i64: 1, 128>}, {pipeline_mode = #tpu.pipeline_mode<synchronous>, transform_indices = @transform_6, window_bounds = array<i64: 8, 4, 32>}, {pipeline_mode = #tpu.pipeline_mode<synchronous>, transform_indices = @transform_7, window_bounds = array<i64: 4, 32>}, {pipeline_mode = #tpu.pipeline_mode<synchronous>, transform_indices = @transform_8, window_bounds = array<i64: 4, 32>}]} {
    %c0 = arith.constant 0 : index
    %c0_0 = arith.constant 0 : index
    %0 = vector.load %arg1[%c0, %c0_0] : memref<4x1xi32, #tpu.memory_space<vmem>>, vector<4x1xi32>
    %1 = vector.shape_cast %0 : vector<4x1xi32> to vector<4x1xi32>
    %2 = vector.broadcast %1 : vector<4x1xi32> to vector<4x32xi32>
    %3 = tpu.iota {dimensions = array<i32: 1>} : vector<4x32xi32>
    %c16_i32 = arith.constant 16 : i32
    %4 = vector.broadcast %c16_i32 : i32 to vector<4x32xi32>
    %5 = arith.cmpi slt, %3, %4 : vector<4x32xi32>
    %6 = tpu.iota {dimensions = array<i32: 1>} : vector<4x128xi32>
    %c64_i32 = arith.constant 64 : i32
    %7 = vector.broadcast %c64_i32 : i32 to vector<4x128xi32>
    %8 = arith.cmpi sge, %6, %7 : vector<4x128xi32>
    %c96_i32 = arith.constant 96 : i32
    %9 = vector.broadcast %c96_i32 : i32 to vector<4x128xi32>
    %10 = arith.cmpi slt, %6, %9 : vector<4x128xi32>
    %11 = arith.andi %8, %10 : vector<4x128xi1>
    %c0_1 = arith.constant 0 : index
    %c0_2 = arith.constant 0 : index
    %12 = vector.load %arg4[%c0_1, %c0_2] : memref<1x128xf32, #tpu.memory_space<vmem>>, vector<1x128xf32>
    %13 = vector.shape_cast %12 : vector<1x128xf32> to vector<1x128xf32>
    %14 = vector.broadcast %13 : vector<1x128xf32> to vector<4x128xf32>
    %cst = arith.constant 0.000000e+00 : f32
    %15 = vector.broadcast %cst : f32 to vector<4x32xf32>
    %cst_3 = arith.constant 0.000000e+00 : f32
    %16 = vector.broadcast %cst_3 : f32 to vector<4x32xf32>
    %c0_4 = arith.constant 0 : index
    %c0_5 = arith.constant 0 : index
    %c0_6 = arith.constant 0 : index
    %17 = vector.load %arg2[%c0_4, %c0_5, %c0_6] : memref<8x4x8xf32, #tpu.memory_space<vmem>>, vector<1x4x8xf32>
    %18 = vector.shape_cast %17 : vector<1x4x8xf32> to vector<4x8xf32>
    %c7 = arith.constant 7 : index
    %c0_7 = arith.constant 0 : index
    %c0_8 = arith.constant 0 : index
    %19 = vector.load %arg2[%c7, %c0_7, %c0_8] : memref<8x4x8xf32, #tpu.memory_space<vmem>>, vector<1x4x8xf32>
    %20 = vector.shape_cast %19 : vector<1x4x8xf32> to vector<4x8xf32>
    %21 = tpu.concatenate %18, %20, %15 in 1 : vector<4x8xf32>, vector<4x8xf32>, vector<4x32xf32> -> vector<4x48xf32>
    %c0_9 = arith.constant 0 : index
    %c0_10 = arith.constant 0 : index
    %22 = vector.load %arg3[%c0_9, %c0_10] : memref<48x128xf32, #tpu.memory_space<vmem>>, vector<48x128xf32>
    %cst_11 = arith.constant dense<0.000000e+00> : vector<4x128xf32>
    %23 = tpu.matmul %21, %22, %cst_11 {dimension_numbers = #tpu.dot_dimension_numbers<[1], [0], [0], [1], [0, 0, 1, 1], [], []>} : vector<4x48xf32>, vector<48x128xf32>, vector<4x128xf32> -> vector<4x128xf32>
    %24 = arith.addf %23, %14 : vector<4x128xf32>
    %25 = math.tanh %24 : vector<4x128xf32>
    %26 = arith.negf %24 : vector<4x128xf32>
    %27 = math.exp %26 : vector<4x128xf32>
    %cst_12 = arith.constant 1.000000e+00 : f32
    %28 = vector.broadcast %cst_12 : f32 to vector<4x128xf32>
    %29 = arith.addf %28, %27 : vector<4x128xf32>
    %30 = arith.divf %28, %29 : vector<4x128xf32>
    %31 = arith.select %11, %25, %30 : vector<4x128xi1>, vector<4x128xf32>
    %32 = vector.extract_strided_slice %31 {offsets = [0, 0], sizes = [4, 32], strides = [1, 1]} : vector<4x128xf32> to vector<4x32xf32>
    %33 = vector.extract_strided_slice %31 {offsets = [0, 32], sizes = [4, 32], strides = [1, 1]} : vector<4x128xf32> to vector<4x32xf32>
    %34 = vector.extract_strided_slice %31 {offsets = [0, 64], sizes = [4, 32], strides = [1, 1]} : vector<4x128xf32> to vector<4x32xf32>
    %35 = vector.extract_strided_slice %31 {offsets = [0, 96], sizes = [4, 32], strides = [1, 1]} : vector<4x128xf32> to vector<4x32xf32>
    %36 = arith.mulf %33, %16 : vector<4x32xf32>
    %37 = arith.mulf %32, %34 : vector<4x32xf32>
    %38 = arith.addf %36, %37 : vector<4x32xf32>
    %39 = math.tanh %38 : vector<4x32xf32>
    %40 = arith.mulf %35, %39 : vector<4x32xf32>
    %c0_i32 = arith.constant 0 : i32
    %c7_i32 = arith.constant 7 : i32
    %41 = vector.broadcast %c0_i32 : i32 to vector<4x32xi32>
    %42 = vector.broadcast %c7_i32 : i32 to vector<4x32xi32>
    %43 = arith.select %5, %41, %42 : vector<4x32xi1>, vector<4x32xi32>
    %44 = arith.cmpi slt, %43, %2 : vector<4x32xi32>
    %cst_13 = arith.constant 0.000000e+00 : f32
    %45 = vector.broadcast %cst_13 : f32 to vector<4x32xf32>
    %46 = arith.select %44, %40, %45 : vector<4x32xi1>, vector<4x32xf32>
    %47 = vector.extract_strided_slice %46 {offsets = [0, 0], sizes = [4, 16], strides = [1, 1]} : vector<4x32xf32> to vector<4x16xf32>
    %c0_14 = arith.constant 0 : index
    %c0_15 = arith.constant 0 : index
    %c0_16 = arith.constant 0 : index
    %48 = vector.load %arg10[%c0_14, %c0_15, %c0_16] : memref<8x4x16xf32, #tpu.memory_space<vmem>>, vector<1x4x16xf32>
    %49 = vector.shape_cast %48 : vector<1x4x16xf32> to vector<4x16xf32>
    %50 = vector.shape_cast %47 : vector<4x16xf32> to vector<1x4x16xf32>
    tpu.vector_store %arg10[%c0_14, %c0_15, %c0_16], %50 {strides = array<i32>} : memref<8x4x16xf32, #tpu.memory_space<vmem>>, vector<1x4x16xf32>,
    %51 = vector.extract_strided_slice %46 {offsets = [0, 16], sizes = [4, 16], strides = [1, 1]} : vector<4x32xf32> to vector<4x16xf32>
    %c7_17 = arith.constant 7 : index
    %c0_18 = arith.constant 0 : index
    %c0_19 = arith.constant 0 : index
    %52 = vector.load %arg11[%c7_17, %c0_18, %c0_19] : memref<8x4x16xf32, #tpu.memory_space<vmem>>, vector<1x4x16xf32>
    %53 = vector.shape_cast %52 : vector<1x4x16xf32> to vector<4x16xf32>
    %54 = vector.shape_cast %51 : vector<4x16xf32> to vector<1x4x16xf32>
    tpu.vector_store %arg11[%c7_17, %c0_18, %c0_19], %54 {strides = array<i32>} : memref<8x4x16xf32, #tpu.memory_space<vmem>>, vector<1x4x16xf32>,
    %55 = arith.select %44, %40, %15 : vector<4x32xi1>, vector<4x32xf32>
    %56 = arith.select %44, %38, %16 : vector<4x32xi1>, vector<4x32xf32>
    %c1 = arith.constant 1 : index
    %c0_20 = arith.constant 0 : index
    %c0_21 = arith.constant 0 : index
    %57 = vector.load %arg2[%c1, %c0_20, %c0_21] : memref<8x4x8xf32, #tpu.memory_space<vmem>>, vector<1x4x8xf32>
    %58 = vector.shape_cast %57 : vector<1x4x8xf32> to vector<4x8xf32>
    %c6 = arith.constant 6 : index
    %c0_22 = arith.constant 0 : index
    %c0_23 = arith.constant 0 : index
    %59 = vector.load %arg2[%c6, %c0_22, %c0_23] : memref<8x4x8xf32, #tpu.memory_space<vmem>>, vector<1x4x8xf32>
    %60 = vector.shape_cast %59 : vector<1x4x8xf32> to vector<4x8xf32>
    %61 = tpu.concatenate %58, %60, %55 in 1 : vector<4x8xf32>, vector<4x8xf32>, vector<4x32xf32> -> vector<4x48xf32>
    %c0_24 = arith.constant 0 : index
    %c0_25 = arith.constant 0 : index
    %62 = vector.load %arg3[%c0_24, %c0_25] : memref<48x128xf32, #tpu.memory_space<vmem>>, vector<48x128xf32>
    %cst_26 = arith.constant dense<0.000000e+00> : vector<4x128xf32>
    %63 = tpu.matmul %61, %62, %cst_26 {dimension_numbers = #tpu.dot_dimension_numbers<[1], [0], [0], [1], [0, 0, 1, 1], [], []>} : vector<4x48xf32>, vector<48x128xf32>, vector<4x128xf32> -> vector<4x128xf32>
    %64 = arith.addf %63, %14 : vector<4x128xf32>
    %65 = math.tanh %64 : vector<4x128xf32>
    %66 = arith.negf %64 : vector<4x128xf32>
    %67 = math.exp %66 : vector<4x128xf32>
    %cst_27 = arith.constant 1.000000e+00 : f32
    %68 = vector.broadcast %cst_27 : f32 to vector<4x128xf32>
    %69 = arith.addf %68, %67 : vector<4x128xf32>
    %70 = arith.divf %68, %69 : vector<4x128xf32>
    %71 = arith.select %11, %65, %70 : vector<4x128xi1>, vector<4x128xf32>
    %72 = vector.extract_strided_slice %71 {offsets = [0, 0], sizes = [4, 32], strides = [1, 1]} : vector<4x128xf32> to vector<4x32xf32>
    %73 = vector.extract_strided_slice %71 {offsets = [0, 32], sizes = [4, 32], strides = [1, 1]} : vector<4x128xf32> to vector<4x32xf32>
    %74 = vector.extract_strided_slice %71 {offsets = [0, 64], sizes = [4, 32], strides = [1, 1]} : vector<4x128xf32> to vector<4x32xf32>
    %75 = vector.extract_strided_slice %71 {offsets = [0, 96], sizes = [4, 32], strides = [1, 1]} : vector<4x128xf32> to vector<4x32xf32>
    %76 = arith.mulf %73, %56 : vector<4x32xf32>
    %77 = arith.mulf %72, %74 : vector<4x32xf32>
    %78 = arith.addf %76, %77 : vector<4x32xf32>
    %79 = math.tanh %78 : vector<4x32xf32>
    %80 = arith.mulf %75, %79 : vector<4x32xf32>
    %c1_i32 = arith.constant 1 : i32
    %c6_i32 = arith.constant 6 : i32
    %81 = vector.broadcast %c1_i32 : i32 to vector<4x32xi32>
    %82 = vector.broadcast %c6_i32 : i32 to vector<4x32xi32>
    %83 = arith.select %5, %81, %82 : vector<4x32xi1>, vector<4x32xi32>
    %84 = arith.cmpi slt, %83, %2 : vector<4x32xi32>
    %cst_28 = arith.constant 0.000000e+00 : f32
    %85 = vector.broadcast %cst_28 : f32 to vector<4x32xf32>
    %86 = arith.select %84, %80, %85 : vector<4x32xi1>, vector<4x32xf32>
    %87 = vector.extract_strided_slice %86 {offsets = [0, 0], sizes = [4, 16], strides = [1, 1]} : vector<4x32xf32> to vector<4x16xf32>
    %c1_29 = arith.constant 1 : index
    %c0_30 = arith.constant 0 : index
    %c0_31 = arith.constant 0 : index
    %88 = vector.load %arg10[%c1_29, %c0_30, %c0_31] : memref<8x4x16xf32, #tpu.memory_space<vmem>>, vector<1x4x16xf32>
    %89 = vector.shape_cast %88 : vector<1x4x16xf32> to vector<4x16xf32>
    %90 = vector.shape_cast %87 : vector<4x16xf32> to vector<1x4x16xf32>
    tpu.vector_store %arg10[%c1_29, %c0_30, %c0_31], %90 {strides = array<i32>} : memref<8x4x16xf32, #tpu.memory_space<vmem>>, vector<1x4x16xf32>,
    %91 = vector.extract_strided_slice %86 {offsets = [0, 16], sizes = [4, 16], strides = [1, 1]} : vector<4x32xf32> to vector<4x16xf32>
    %c6_32 = arith.constant 6 : index
    %c0_33 = arith.constant 0 : index
    %c0_34 = arith.constant 0 : index
    %92 = vector.load %arg11[%c6_32, %c0_33, %c0_34] : memref<8x4x16xf32, #tpu.memory_space<vmem>>, vector<1x4x16xf32>
    %93 = vector.shape_cast %92 : vector<1x4x16xf32> to vector<4x16xf32>
    %94 = vector.shape_cast %91 : vector<4x16xf32> to vector<1x4x16xf32>
    tpu.vector_store %arg11[%c6_32, %c0_33, %c0_34], %94 {strides = array<i32>} : memref<8x4x16xf32, #tpu.memory_space<vmem>>, vector<1x4x16xf32>,
    %95 = arith.select %84, %80, %55 : vector<4x32xi1>, vector<4x32xf32>
    %96 = arith.select %84, %78, %56 : vector<4x32xi1>, vector<4x32xf32>
    %c2 = arith.constant 2 : index
    %c0_35 = arith.constant 0 : index
    %c0_36 = arith.constant 0 : index
    %97 = vector.load %arg2[%c2, %c0_35, %c0_36] : memref<8x4x8xf32, #tpu.memory_space<vmem>>, vector<1x4x8xf32>
    %98 = vector.shape_cast %97 : vector<1x4x8xf32> to vector<4x8xf32>
    %c5 = arith.constant 5 : index
    %c0_37 = arith.constant 0 : index
    %c0_38 = arith.constant 0 : index
    %99 = vector.load %arg2[%c5, %c0_37, %c0_38] : memref<8x4x8xf32, #tpu.memory_space<vmem>>, vector<1x4x8xf32>
    %100 = vector.shape_cast %99 : vector<1x4x8xf32> to vector<4x8xf32>
    %101 = tpu.concatenate %98, %100, %95 in 1 : vector<4x8xf32>, vector<4x8xf32>, vector<4x32xf32> -> vector<4x48xf32>
    %c0_39 = arith.constant 0 : index
    %c0_40 = arith.constant 0 : index
    %102 = vector.load %arg3[%c0_39, %c0_40] : memref<48x128xf32, #tpu.memory_space<vmem>>, vector<48x128xf32>
    %cst_41 = arith.constant dense<0.000000e+00> : vector<4x128xf32>
    %103 = tpu.matmul %101, %102, %cst_41 {dimension_numbers = #tpu.dot_dimension_numbers<[1], [0], [0], [1], [0, 0, 1, 1], [], []>} : vector<4x48xf32>, vector<48x128xf32>, vector<4x128xf32> -> vector<4x128xf32>
    %104 = arith.addf %103, %14 : vector<4x128xf32>
    %105 = math.tanh %104 : vector<4x128xf32>
    %106 = arith.negf %104 : vector<4x128xf32>
    %107 = math.exp %106 : vector<4x128xf32>
    %cst_42 = arith.constant 1.000000e+00 : f32
    %108 = vector.broadcast %cst_42 : f32 to vector<4x128xf32>
    %109 = arith.addf %108, %107 : vector<4x128xf32>
    %110 = arith.divf %108, %109 : vector<4x128xf32>
    %111 = arith.select %11, %105, %110 : vector<4x128xi1>, vector<4x128xf32>
    %112 = vector.extract_strided_slice %111 {offsets = [0, 0], sizes = [4, 32], strides = [1, 1]} : vector<4x128xf32> to vector<4x32xf32>
    %113 = vector.extract_strided_slice %111 {offsets = [0, 32], sizes = [4, 32], strides = [1, 1]} : vector<4x128xf32> to vector<4x32xf32>
    %114 = vector.extract_strided_slice %111 {offsets = [0, 64], sizes = [4, 32], strides = [1, 1]} : vector<4x128xf32> to vector<4x32xf32>
    %115 = vector.extract_strided_slice %111 {offsets = [0, 96], sizes = [4, 32], strides = [1, 1]} : vector<4x128xf32> to vector<4x32xf32>
    %116 = arith.mulf %113, %96 : vector<4x32xf32>
    %117 = arith.mulf %112, %114 : vector<4x32xf32>
    %118 = arith.addf %116, %117 : vector<4x32xf32>
    %119 = math.tanh %118 : vector<4x32xf32>
    %120 = arith.mulf %115, %119 : vector<4x32xf32>
    %c2_i32 = arith.constant 2 : i32
    %c5_i32 = arith.constant 5 : i32
    %121 = vector.broadcast %c2_i32 : i32 to vector<4x32xi32>
    %122 = vector.broadcast %c5_i32 : i32 to vector<4x32xi32>
    %123 = arith.select %5, %121, %122 : vector<4x32xi1>, vector<4x32xi32>
    %124 = arith.cmpi slt, %123, %2 : vector<4x32xi32>
    %cst_43 = arith.constant 0.000000e+00 : f32
    %125 = vector.broadcast %cst_43 : f32 to vector<4x32xf32>
    %126 = arith.select %124, %120, %125 : vector<4x32xi1>, vector<4x32xf32>
    %127 = vector.extract_strided_slice %126 {offsets = [0, 0], sizes = [4, 16], strides = [1, 1]} : vector<4x32xf32> to vector<4x16xf32>
    %c2_44 = arith.constant 2 : index
    %c0_45 = arith.constant 0 : index
    %c0_46 = arith.constant 0 : index
    %128 = vector.load %arg10[%c2_44, %c0_45, %c0_46] : memref<8x4x16xf32, #tpu.memory_space<vmem>>, vector<1x4x16xf32>
    %129 = vector.shape_cast %128 : vector<1x4x16xf32> to vector<4x16xf32>
    %130 = vector.shape_cast %127 : vector<4x16xf32> to vector<1x4x16xf32>
    tpu.vector_store %arg10[%c2_44, %c0_45, %c0_46], %130 {strides = array<i32>} : memref<8x4x16xf32, #tpu.memory_space<vmem>>, vector<1x4x16xf32>,
    %131 = vector.extract_strided_slice %126 {offsets = [0, 16], sizes = [4, 16], strides = [1, 1]} : vector<4x32xf32> to vector<4x16xf32>
    %c5_47 = arith.constant 5 : index
    %c0_48 = arith.constant 0 : index
    %c0_49 = arith.constant 0 : index
    %132 = vector.load %arg11[%c5_47, %c0_48, %c0_49] : memref<8x4x16xf32, #tpu.memory_space<vmem>>, vector<1x4x16xf32>
    %133 = vector.shape_cast %132 : vector<1x4x16xf32> to vector<4x16xf32>
    %134 = vector.shape_cast %131 : vector<4x16xf32> to vector<1x4x16xf32>
    tpu.vector_store %arg11[%c5_47, %c0_48, %c0_49], %134 {strides = array<i32>} : memref<8x4x16xf32, #tpu.memory_space<vmem>>, vector<1x4x16xf32>,
    %135 = arith.select %124, %120, %95 : vector<4x32xi1>, vector<4x32xf32>
    %136 = arith.select %124, %118, %96 : vector<4x32xi1>, vector<4x32xf32>
    %c3 = arith.constant 3 : index
    %c0_50 = arith.constant 0 : index
    %c0_51 = arith.constant 0 : index
    %137 = vector.load %arg2[%c3, %c0_50, %c0_51] : memref<8x4x8xf32, #tpu.memory_space<vmem>>, vector<1x4x8xf32>
    %138 = vector.shape_cast %137 : vector<1x4x8xf32> to vector<4x8xf32>
    %c4 = arith.constant 4 : index
    %c0_52 = arith.constant 0 : index
    %c0_53 = arith.constant 0 : index
    %139 = vector.load %arg2[%c4, %c0_52, %c0_53] : memref<8x4x8xf32, #tpu.memory_space<vmem>>, vector<1x4x8xf32>
    %140 = vector.shape_cast %139 : vector<1x4x8xf32> to vector<4x8xf32>
    %141 = tpu.concatenate %138, %140, %135 in 1 : vector<4x8xf32>, vector<4x8xf32>, vector<4x32xf32> -> vector<4x48xf32>
    %c0_54 = arith.constant 0 : index
    %c0_55 = arith.constant 0 : index
    %142 = vector.load %arg3[%c0_54, %c0_55] : memref<48x128xf32, #tpu.memory_space<vmem>>, vector<48x128xf32>
    %cst_56 = arith.constant dense<0.000000e+00> : vector<4x128xf32>
    %143 = tpu.matmul %141, %142, %cst_56 {dimension_numbers = #tpu.dot_dimension_numbers<[1], [0], [0], [1], [0, 0, 1, 1], [], []>} : vector<4x48xf32>, vector<48x128xf32>, vector<4x128xf32> -> vector<4x128xf32>
    %144 = arith.addf %143, %14 : vector<4x128xf32>
    %145 = math.tanh %144 : vector<4x128xf32>
    %146 = arith.negf %144 : vector<4x128xf32>
    %147 = math.exp %146 : vector<4x128xf32>
    %cst_57 = arith.constant 1.000000e+00 : f32
    %148 = vector.broadcast %cst_57 : f32 to vector<4x128xf32>
    %149 = arith.addf %148, %147 : vector<4x128xf32>
    %150 = arith.divf %148, %149 : vector<4x128xf32>
    %151 = arith.select %11, %145, %150 : vector<4x128xi1>, vector<4x128xf32>
    %152 = vector.extract_strided_slice %151 {offsets = [0, 0], sizes = [4, 32], strides = [1, 1]} : vector<4x128xf32> to vector<4x32xf32>
    %153 = vector.extract_strided_slice %151 {offsets = [0, 32], sizes = [4, 32], strides = [1, 1]} : vector<4x128xf32> to vector<4x32xf32>
    %154 = vector.extract_strided_slice %151 {offsets = [0, 64], sizes = [4, 32], strides = [1, 1]} : vector<4x128xf32> to vector<4x32xf32>
    %155 = vector.extract_strided_slice %151 {offsets = [0, 96], sizes = [4, 32], strides = [1, 1]} : vector<4x128xf32> to vector<4x32xf32>
    %156 = arith.mulf %153, %136 : vector<4x32xf32>
    %157 = arith.mulf %152, %154 : vector<4x32xf32>
    %158 = arith.addf %156, %157 : vector<4x32xf32>
    %159 = math.tanh %158 : vector<4x32xf32>
    %160 = arith.mulf %155, %159 : vector<4x32xf32>
    %c3_i32 = arith.constant 3 : i32
    %c4_i32 = arith.constant 4 : i32
    %161 = vector.broadcast %c3_i32 : i32 to vector<4x32xi32>
    %162 = vector.broadcast %c4_i32 : i32 to vector<4x32xi32>
    %163 = arith.select %5, %161, %162 : vector<4x32xi1>, vector<4x32xi32>
    %164 = arith.cmpi slt, %163, %2 : vector<4x32xi32>
    %cst_58 = arith.constant 0.000000e+00 : f32
    %165 = vector.broadcast %cst_58 : f32 to vector<4x32xf32>
    %166 = arith.select %164, %160, %165 : vector<4x32xi1>, vector<4x32xf32>
    %167 = vector.extract_strided_slice %166 {offsets = [0, 0], sizes = [4, 16], strides = [1, 1]} : vector<4x32xf32> to vector<4x16xf32>
    %c3_59 = arith.constant 3 : index
    %c0_60 = arith.constant 0 : index
    %c0_61 = arith.constant 0 : index
    %168 = vector.load %arg10[%c3_59, %c0_60, %c0_61] : memref<8x4x16xf32, #tpu.memory_space<vmem>>, vector<1x4x16xf32>
    %169 = vector.shape_cast %168 : vector<1x4x16xf32> to vector<4x16xf32>
    %170 = vector.shape_cast %167 : vector<4x16xf32> to vector<1x4x16xf32>
    tpu.vector_store %arg10[%c3_59, %c0_60, %c0_61], %170 {strides = array<i32>} : memref<8x4x16xf32, #tpu.memory_space<vmem>>, vector<1x4x16xf32>,
    %171 = vector.extract_strided_slice %166 {offsets = [0, 16], sizes = [4, 16], strides = [1, 1]} : vector<4x32xf32> to vector<4x16xf32>
    %c4_62 = arith.constant 4 : index
    %c0_63 = arith.constant 0 : index
    %c0_64 = arith.constant 0 : index
    %172 = vector.load %arg11[%c4_62, %c0_63, %c0_64] : memref<8x4x16xf32, #tpu.memory_space<vmem>>, vector<1x4x16xf32>
    %173 = vector.shape_cast %172 : vector<1x4x16xf32> to vector<4x16xf32>
    %174 = vector.shape_cast %171 : vector<4x16xf32> to vector<1x4x16xf32>
    tpu.vector_store %arg11[%c4_62, %c0_63, %c0_64], %174 {strides = array<i32>} : memref<8x4x16xf32, #tpu.memory_space<vmem>>, vector<1x4x16xf32>,
    %175 = arith.select %164, %160, %135 : vector<4x32xi1>, vector<4x32xf32>
    %176 = arith.select %164, %158, %136 : vector<4x32xi1>, vector<4x32xf32>
    %c4_65 = arith.constant 4 : index
    %c0_66 = arith.constant 0 : index
    %c0_67 = arith.constant 0 : index
    %177 = vector.load %arg2[%c4_65, %c0_66, %c0_67] : memref<8x4x8xf32, #tpu.memory_space<vmem>>, vector<1x4x8xf32>
    %178 = vector.shape_cast %177 : vector<1x4x8xf32> to vector<4x8xf32>
    %c3_68 = arith.constant 3 : index
    %c0_69 = arith.constant 0 : index
    %c0_70 = arith.constant 0 : index
    %179 = vector.load %arg2[%c3_68, %c0_69, %c0_70] : memref<8x4x8xf32, #tpu.memory_space<vmem>>, vector<1x4x8xf32>
    %180 = vector.shape_cast %179 : vector<1x4x8xf32> to vector<4x8xf32>
    %181 = tpu.concatenate %178, %180, %175 in 1 : vector<4x8xf32>, vector<4x8xf32>, vector<4x32xf32> -> vector<4x48xf32>
    %c0_71 = arith.constant 0 : index
    %c0_72 = arith.constant 0 : index
    %182 = vector.load %arg3[%c0_71, %c0_72] : memref<48x128xf32, #tpu.memory_space<vmem>>, vector<48x128xf32>
    %cst_73 = arith.constant dense<0.000000e+00> : vector<4x128xf32>
    %183 = tpu.matmul %181, %182, %cst_73 {dimension_numbers = #tpu.dot_dimension_numbers<[1], [0], [0], [1], [0, 0, 1, 1], [], []>} : vector<4x48xf32>, vector<48x128xf32>, vector<4x128xf32> -> vector<4x128xf32>
    %184 = arith.addf %183, %14 : vector<4x128xf32>
    %185 = math.tanh %184 : vector<4x128xf32>
    %186 = arith.negf %184 : vector<4x128xf32>
    %187 = math.exp %186 : vector<4x128xf32>
    %cst_74 = arith.constant 1.000000e+00 : f32
    %188 = vector.broadcast %cst_74 : f32 to vector<4x128xf32>
    %189 = arith.addf %188, %187 : vector<4x128xf32>
    %190 = arith.divf %188, %189 : vector<4x128xf32>
    %191 = arith.select %11, %185, %190 : vector<4x128xi1>, vector<4x128xf32>
    %192 = vector.extract_strided_slice %191 {offsets = [0, 0], sizes = [4, 32], strides = [1, 1]} : vector<4x128xf32> to vector<4x32xf32>
    %193 = vector.extract_strided_slice %191 {offsets = [0, 32], sizes = [4, 32], strides = [1, 1]} : vector<4x128xf32> to vector<4x32xf32>
    %194 = vector.extract_strided_slice %191 {offsets = [0, 64], sizes = [4, 32], strides = [1, 1]} : vector<4x128xf32> to vector<4x32xf32>
    %195 = vector.extract_strided_slice %191 {offsets = [0, 96], sizes = [4, 32], strides = [1, 1]} : vector<4x128xf32> to vector<4x32xf32>
    %196 = arith.mulf %193, %176 : vector<4x32xf32>
    %197 = arith.mulf %192, %194 : vector<4x32xf32>
    %198 = arith.addf %196, %197 : vector<4x32xf32>
    %199 = math.tanh %198 : vector<4x32xf32>
    %200 = arith.mulf %195, %199 : vector<4x32xf32>
    %c4_i32_75 = arith.constant 4 : i32
    %c3_i32_76 = arith.constant 3 : i32
    %201 = vector.broadcast %c4_i32_75 : i32 to vector<4x32xi32>
    %202 = vector.broadcast %c3_i32_76 : i32 to vector<4x32xi32>
    %203 = arith.select %5, %201, %202 : vector<4x32xi1>, vector<4x32xi32>
    %204 = arith.cmpi slt, %203, %2 : vector<4x32xi32>
    %cst_77 = arith.constant 0.000000e+00 : f32
    %205 = vector.broadcast %cst_77 : f32 to vector<4x32xf32>
    %206 = arith.select %204, %200, %205 : vector<4x32xi1>, vector<4x32xf32>
    %207 = vector.extract_strided_slice %206 {offsets = [0, 0], sizes = [4, 16], strides = [1, 1]} : vector<4x32xf32> to vector<4x16xf32>
    %c4_78 = arith.constant 4 : index
    %c0_79 = arith.constant 0 : index
    %c0_80 = arith.constant 0 : index
    %208 = vector.load %arg10[%c4_78, %c0_79, %c0_80] : memref<8x4x16xf32, #tpu.memory_space<vmem>>, vector<1x4x16xf32>
    %209 = vector.shape_cast %208 : vector<1x4x16xf32> to vector<4x16xf32>
    %210 = vector.shape_cast %207 : vector<4x16xf32> to vector<1x4x16xf32>
    tpu.vector_store %arg10[%c4_78, %c0_79, %c0_80], %210 {strides = array<i32>} : memref<8x4x16xf32, #tpu.memory_space<vmem>>, vector<1x4x16xf32>,
    %211 = vector.extract_strided_slice %206 {offsets = [0, 16], sizes = [4, 16], strides = [1, 1]} : vector<4x32xf32> to vector<4x16xf32>
    %c3_81 = arith.constant 3 : index
    %c0_82 = arith.constant 0 : index
    %c0_83 = arith.constant 0 : index
    %212 = vector.load %arg11[%c3_81, %c0_82, %c0_83] : memref<8x4x16xf32, #tpu.memory_space<vmem>>, vector<1x4x16xf32>
    %213 = vector.shape_cast %212 : vector<1x4x16xf32> to vector<4x16xf32>
    %214 = vector.shape_cast %211 : vector<4x16xf32> to vector<1x4x16xf32>
    tpu.vector_store %arg11[%c3_81, %c0_82, %c0_83], %214 {strides = array<i32>} : memref<8x4x16xf32, #tpu.memory_space<vmem>>, vector<1x4x16xf32>,
    %215 = arith.select %204, %200, %175 : vector<4x32xi1>, vector<4x32xf32>
    %216 = arith.select %204, %198, %176 : vector<4x32xi1>, vector<4x32xf32>
    %c5_84 = arith.constant 5 : index
    %c0_85 = arith.constant 0 : index
    %c0_86 = arith.constant 0 : index
    %217 = vector.load %arg2[%c5_84, %c0_85, %c0_86] : memref<8x4x8xf32, #tpu.memory_space<vmem>>, vector<1x4x8xf32>
    %218 = vector.shape_cast %217 : vector<1x4x8xf32> to vector<4x8xf32>
    %c2_87 = arith.constant 2 : index
    %c0_88 = arith.constant 0 : index
    %c0_89 = arith.constant 0 : index
    %219 = vector.load %arg2[%c2_87, %c0_88, %c0_89] : memref<8x4x8xf32, #tpu.memory_space<vmem>>, vector<1x4x8xf32>
    %220 = vector.shape_cast %219 : vector<1x4x8xf32> to vector<4x8xf32>
    %221 = tpu.concatenate %218, %220, %215 in 1 : vector<4x8xf32>, vector<4x8xf32>, vector<4x32xf32> -> vector<4x48xf32>
    %c0_90 = arith.constant 0 : index
    %c0_91 = arith.constant 0 : index
    %222 = vector.load %arg3[%c0_90, %c0_91] : memref<48x128xf32, #tpu.memory_space<vmem>>, vector<48x128xf32>
    %cst_92 = arith.constant dense<0.000000e+00> : vector<4x128xf32>
    %223 = tpu.matmul %221, %222, %cst_92 {dimension_numbers = #tpu.dot_dimension_numbers<[1], [0], [0], [1], [0, 0, 1, 1], [], []>} : vector<4x48xf32>, vector<48x128xf32>, vector<4x128xf32> -> vector<4x128xf32>
    %224 = arith.addf %223, %14 : vector<4x128xf32>
    %225 = math.tanh %224 : vector<4x128xf32>
    %226 = arith.negf %224 : vector<4x128xf32>
    %227 = math.exp %226 : vector<4x128xf32>
    %cst_93 = arith.constant 1.000000e+00 : f32
    %228 = vector.broadcast %cst_93 : f32 to vector<4x128xf32>
    %229 = arith.addf %228, %227 : vector<4x128xf32>
    %230 = arith.divf %228, %229 : vector<4x128xf32>
    %231 = arith.select %11, %225, %230 : vector<4x128xi1>, vector<4x128xf32>
    %232 = vector.extract_strided_slice %231 {offsets = [0, 0], sizes = [4, 32], strides = [1, 1]} : vector<4x128xf32> to vector<4x32xf32>
    %233 = vector.extract_strided_slice %231 {offsets = [0, 32], sizes = [4, 32], strides = [1, 1]} : vector<4x128xf32> to vector<4x32xf32>
    %234 = vector.extract_strided_slice %231 {offsets = [0, 64], sizes = [4, 32], strides = [1, 1]} : vector<4x128xf32> to vector<4x32xf32>
    %235 = vector.extract_strided_slice %231 {offsets = [0, 96], sizes = [4, 32], strides = [1, 1]} : vector<4x128xf32> to vector<4x32xf32>
    %236 = arith.mulf %233, %216 : vector<4x32xf32>
    %237 = arith.mulf %232, %234 : vector<4x32xf32>
    %238 = arith.addf %236, %237 : vector<4x32xf32>
    %239 = math.tanh %238 : vector<4x32xf32>
    %240 = arith.mulf %235, %239 : vector<4x32xf32>
    %c5_i32_94 = arith.constant 5 : i32
    %c2_i32_95 = arith.constant 2 : i32
    %241 = vector.broadcast %c5_i32_94 : i32 to vector<4x32xi32>
    %242 = vector.broadcast %c2_i32_95 : i32 to vector<4x32xi32>
    %243 = arith.select %5, %241, %242 : vector<4x32xi1>, vector<4x32xi32>
    %244 = arith.cmpi slt, %243, %2 : vector<4x32xi32>
    %cst_96 = arith.constant 0.000000e+00 : f32
    %245 = vector.broadcast %cst_96 : f32 to vector<4x32xf32>
    %246 = arith.select %244, %240, %245 : vector<4x32xi1>, vector<4x32xf32>
    %247 = vector.extract_strided_slice %246 {offsets = [0, 0], sizes = [4, 16], strides = [1, 1]} : vector<4x32xf32> to vector<4x16xf32>
    %c5_97 = arith.constant 5 : index
    %c0_98 = arith.constant 0 : index
    %c0_99 = arith.constant 0 : index
    %248 = vector.load %arg10[%c5_97, %c0_98, %c0_99] : memref<8x4x16xf32, #tpu.memory_space<vmem>>, vector<1x4x16xf32>
    %249 = vector.shape_cast %248 : vector<1x4x16xf32> to vector<4x16xf32>
    %250 = vector.shape_cast %247 : vector<4x16xf32> to vector<1x4x16xf32>
    tpu.vector_store %arg10[%c5_97, %c0_98, %c0_99], %250 {strides = array<i32>} : memref<8x4x16xf32, #tpu.memory_space<vmem>>, vector<1x4x16xf32>,
    %251 = vector.extract_strided_slice %246 {offsets = [0, 16], sizes = [4, 16], strides = [1, 1]} : vector<4x32xf32> to vector<4x16xf32>
    %c2_100 = arith.constant 2 : index
    %c0_101 = arith.constant 0 : index
    %c0_102 = arith.constant 0 : index
    %252 = vector.load %arg11[%c2_100, %c0_101, %c0_102] : memref<8x4x16xf32, #tpu.memory_space<vmem>>, vector<1x4x16xf32>
    %253 = vector.shape_cast %252 : vector<1x4x16xf32> to vector<4x16xf32>
    %254 = vector.shape_cast %251 : vector<4x16xf32> to vector<1x4x16xf32>
    tpu.vector_store %arg11[%c2_100, %c0_101, %c0_102], %254 {strides = array<i32>} : memref<8x4x16xf32, #tpu.memory_space<vmem>>, vector<1x4x16xf32>,
    %255 = arith.select %244, %240, %215 : vector<4x32xi1>, vector<4x32xf32>
    %256 = arith.select %244, %238, %216 : vector<4x32xi1>, vector<4x32xf32>
    %c6_103 = arith.constant 6 : index
    %c0_104 = arith.constant 0 : index
    %c0_105 = arith.constant 0 : index
    %257 = vector.load %arg2[%c6_103, %c0_104, %c0_105] : memref<8x4x8xf32, #tpu.memory_space<vmem>>, vector<1x4x8xf32>
    %258 = vector.shape_cast %257 : vector<1x4x8xf32> to vector<4x8xf32>
    %c1_106 = arith.constant 1 : index
    %c0_107 = arith.constant 0 : index
    %c0_108 = arith.constant 0 : index
    %259 = vector.load %arg2[%c1_106, %c0_107, %c0_108] : memref<8x4x8xf32, #tpu.memory_space<vmem>>, vector<1x4x8xf32>
    %260 = vector.shape_cast %259 : vector<1x4x8xf32> to vector<4x8xf32>
    %261 = tpu.concatenate %258, %260, %255 in 1 : vector<4x8xf32>, vector<4x8xf32>, vector<4x32xf32> -> vector<4x48xf32>
    %c0_109 = arith.constant 0 : index
    %c0_110 = arith.constant 0 : index
    %262 = vector.load %arg3[%c0_109, %c0_110] : memref<48x128xf32, #tpu.memory_space<vmem>>, vector<48x128xf32>
    %cst_111 = arith.constant dense<0.000000e+00> : vector<4x128xf32>
    %263 = tpu.matmul %261, %262, %cst_111 {dimension_numbers = #tpu.dot_dimension_numbers<[1], [0], [0], [1], [0, 0, 1, 1], [], []>} : vector<4x48xf32>, vector<48x128xf32>, vector<4x128xf32> -> vector<4x128xf32>
    %264 = arith.addf %263, %14 : vector<4x128xf32>
    %265 = math.tanh %264 : vector<4x128xf32>
    %266 = arith.negf %264 : vector<4x128xf32>
    %267 = math.exp %266 : vector<4x128xf32>
    %cst_112 = arith.constant 1.000000e+00 : f32
    %268 = vector.broadcast %cst_112 : f32 to vector<4x128xf32>
    %269 = arith.addf %268, %267 : vector<4x128xf32>
    %270 = arith.divf %268, %269 : vector<4x128xf32>
    %271 = arith.select %11, %265, %270 : vector<4x128xi1>, vector<4x128xf32>
    %272 = vector.extract_strided_slice %271 {offsets = [0, 0], sizes = [4, 32], strides = [1, 1]} : vector<4x128xf32> to vector<4x32xf32>
    %273 = vector.extract_strided_slice %271 {offsets = [0, 32], sizes = [4, 32], strides = [1, 1]} : vector<4x128xf32> to vector<4x32xf32>
    %274 = vector.extract_strided_slice %271 {offsets = [0, 64], sizes = [4, 32], strides = [1, 1]} : vector<4x128xf32> to vector<4x32xf32>
    %275 = vector.extract_strided_slice %271 {offsets = [0, 96], sizes = [4, 32], strides = [1, 1]} : vector<4x128xf32> to vector<4x32xf32>
    %276 = arith.mulf %273, %256 : vector<4x32xf32>
    %277 = arith.mulf %272, %274 : vector<4x32xf32>
    %278 = arith.addf %276, %277 : vector<4x32xf32>
    %279 = math.tanh %278 : vector<4x32xf32>
    %280 = arith.mulf %275, %279 : vector<4x32xf32>
    %c6_i32_113 = arith.constant 6 : i32
    %c1_i32_114 = arith.constant 1 : i32
    %281 = vector.broadcast %c6_i32_113 : i32 to vector<4x32xi32>
    %282 = vector.broadcast %c1_i32_114 : i32 to vector<4x32xi32>
    %283 = arith.select %5, %281, %282 : vector<4x32xi1>, vector<4x32xi32>
    %284 = arith.cmpi slt, %283, %2 : vector<4x32xi32>
    %cst_115 = arith.constant 0.000000e+00 : f32
    %285 = vector.broadcast %cst_115 : f32 to vector<4x32xf32>
    %286 = arith.select %284, %280, %285 : vector<4x32xi1>, vector<4x32xf32>
    %287 = vector.extract_strided_slice %286 {offsets = [0, 0], sizes = [4, 16], strides = [1, 1]} : vector<4x32xf32> to vector<4x16xf32>
    %c6_116 = arith.constant 6 : index
    %c0_117 = arith.constant 0 : index
    %c0_118 = arith.constant 0 : index
    %288 = vector.load %arg10[%c6_116, %c0_117, %c0_118] : memref<8x4x16xf32, #tpu.memory_space<vmem>>, vector<1x4x16xf32>
    %289 = vector.shape_cast %288 : vector<1x4x16xf32> to vector<4x16xf32>
    %290 = vector.shape_cast %287 : vector<4x16xf32> to vector<1x4x16xf32>
    tpu.vector_store %arg10[%c6_116, %c0_117, %c0_118], %290 {strides = array<i32>} : memref<8x4x16xf32, #tpu.memory_space<vmem>>, vector<1x4x16xf32>,
    %291 = vector.extract_strided_slice %286 {offsets = [0, 16], sizes = [4, 16], strides = [1, 1]} : vector<4x32xf32> to vector<4x16xf32>
    %c1_119 = arith.constant 1 : index
    %c0_120 = arith.constant 0 : index
    %c0_121 = arith.constant 0 : index
    %292 = vector.load %arg11[%c1_119, %c0_120, %c0_121] : memref<8x4x16xf32, #tpu.memory_space<vmem>>, vector<1x4x16xf32>
    %293 = vector.shape_cast %292 : vector<1x4x16xf32> to vector<4x16xf32>
    %294 = vector.shape_cast %291 : vector<4x16xf32> to vector<1x4x16xf32>
    tpu.vector_store %arg11[%c1_119, %c0_120, %c0_121], %294 {strides = array<i32>} : memref<8x4x16xf32, #tpu.memory_space<vmem>>, vector<1x4x16xf32>,
    %295 = arith.select %284, %280, %255 : vector<4x32xi1>, vector<4x32xf32>
    %296 = arith.select %284, %278, %256 : vector<4x32xi1>, vector<4x32xf32>
    %c7_122 = arith.constant 7 : index
    %c0_123 = arith.constant 0 : index
    %c0_124 = arith.constant 0 : index
    %297 = vector.load %arg2[%c7_122, %c0_123, %c0_124] : memref<8x4x8xf32, #tpu.memory_space<vmem>>, vector<1x4x8xf32>
    %298 = vector.shape_cast %297 : vector<1x4x8xf32> to vector<4x8xf32>
    %c0_125 = arith.constant 0 : index
    %c0_126 = arith.constant 0 : index
    %c0_127 = arith.constant 0 : index
    %299 = vector.load %arg2[%c0_125, %c0_126, %c0_127] : memref<8x4x8xf32, #tpu.memory_space<vmem>>, vector<1x4x8xf32>
    %300 = vector.shape_cast %299 : vector<1x4x8xf32> to vector<4x8xf32>
    %301 = tpu.concatenate %298, %300, %295 in 1 : vector<4x8xf32>, vector<4x8xf32>, vector<4x32xf32> -> vector<4x48xf32>
    %c0_128 = arith.constant 0 : index
    %c0_129 = arith.constant 0 : index
    %302 = vector.load %arg3[%c0_128, %c0_129] : memref<48x128xf32, #tpu.memory_space<vmem>>, vector<48x128xf32>
    %cst_130 = arith.constant dense<0.000000e+00> : vector<4x128xf32>
    %303 = tpu.matmul %301, %302, %cst_130 {dimension_numbers = #tpu.dot_dimension_numbers<[1], [0], [0], [1], [0, 0, 1, 1], [], []>} : vector<4x48xf32>, vector<48x128xf32>, vector<4x128xf32> -> vector<4x128xf32>
    %304 = arith.addf %303, %14 : vector<4x128xf32>
    %305 = math.tanh %304 : vector<4x128xf32>
    %306 = arith.negf %304 : vector<4x128xf32>
    %307 = math.exp %306 : vector<4x128xf32>
    %cst_131 = arith.constant 1.000000e+00 : f32
    %308 = vector.broadcast %cst_131 : f32 to vector<4x128xf32>
    %309 = arith.addf %308, %307 : vector<4x128xf32>
    %310 = arith.divf %308, %309 : vector<4x128xf32>
    %311 = arith.select %11, %305, %310 : vector<4x128xi1>, vector<4x128xf32>
    %312 = vector.extract_strided_slice %311 {offsets = [0, 0], sizes = [4, 32], strides = [1, 1]} : vector<4x128xf32> to vector<4x32xf32>
    %313 = vector.extract_strided_slice %311 {offsets = [0, 32], sizes = [4, 32], strides = [1, 1]} : vector<4x128xf32> to vector<4x32xf32>
    %314 = vector.extract_strided_slice %311 {offsets = [0, 64], sizes = [4, 32], strides = [1, 1]} : vector<4x128xf32> to vector<4x32xf32>
    %315 = vector.extract_strided_slice %311 {offsets = [0, 96], sizes = [4, 32], strides = [1, 1]} : vector<4x128xf32> to vector<4x32xf32>
    %316 = arith.mulf %313, %296 : vector<4x32xf32>
    %317 = arith.mulf %312, %314 : vector<4x32xf32>
    %318 = arith.addf %316, %317 : vector<4x32xf32>
    %319 = math.tanh %318 : vector<4x32xf32>
    %320 = arith.mulf %315, %319 : vector<4x32xf32>
    %c7_i32_132 = arith.constant 7 : i32
    %c0_i32_133 = arith.constant 0 : i32
    %321 = vector.broadcast %c7_i32_132 : i32 to vector<4x32xi32>
    %322 = vector.broadcast %c0_i32_133 : i32 to vector<4x32xi32>
    %323 = arith.select %5, %321, %322 : vector<4x32xi1>, vector<4x32xi32>
    %324 = arith.cmpi slt, %323, %2 : vector<4x32xi32>
    %cst_134 = arith.constant 0.000000e+00 : f32
    %325 = vector.broadcast %cst_134 : f32 to vector<4x32xf32>
    %326 = arith.select %324, %320, %325 : vector<4x32xi1>, vector<4x32xf32>
    %327 = vector.extract_strided_slice %326 {offsets = [0, 0], sizes = [4, 16], strides = [1, 1]} : vector<4x32xf32> to vector<4x16xf32>
    %c7_135 = arith.constant 7 : index
    %c0_136 = arith.constant 0 : index
    %c0_137 = arith.constant 0 : index
    %328 = vector.load %arg10[%c7_135, %c0_136, %c0_137] : memref<8x4x16xf32, #tpu.memory_space<vmem>>, vector<1x4x16xf32>
    %329 = vector.shape_cast %328 : vector<1x4x16xf32> to vector<4x16xf32>
    %330 = vector.shape_cast %327 : vector<4x16xf32> to vector<1x4x16xf32>
    tpu.vector_store %arg10[%c7_135, %c0_136, %c0_137], %330 {strides = array<i32>} : memref<8x4x16xf32, #tpu.memory_space<vmem>>, vector<1x4x16xf32>,
    %331 = vector.extract_strided_slice %326 {offsets = [0, 16], sizes = [4, 16], strides = [1, 1]} : vector<4x32xf32> to vector<4x16xf32>
    %c0_138 = arith.constant 0 : index
    %c0_139 = arith.constant 0 : index
    %c0_140 = arith.constant 0 : index
    %332 = vector.load %arg11[%c0_138, %c0_139, %c0_140] : memref<8x4x16xf32, #tpu.memory_space<vmem>>, vector<1x4x16xf32>
    %333 = vector.shape_cast %332 : vector<1x4x16xf32> to vector<4x16xf32>
    %334 = vector.shape_cast %331 : vector<4x16xf32> to vector<1x4x16xf32>
    tpu.vector_store %arg11[%c0_138, %c0_139, %c0_140], %334 {strides = array<i32>} : memref<8x4x16xf32, #tpu.memory_space<vmem>>, vector<1x4x16xf32>,
    %c0_141 = arith.constant 0 : index
    %c0_142 = arith.constant 0 : index
    %335 = vector.load %arg6[%c0_141, %c0_142] : memref<1x128xf32, #tpu.memory_space<vmem>>, vector<1x128xf32>
    %336 = vector.shape_cast %335 : vector<1x128xf32> to vector<1x128xf32>
    %337 = vector.broadcast %336 : vector<1x128xf32> to vector<4x128xf32>
    %cst_143 = arith.constant 0.000000e+00 : f32
    %338 = vector.broadcast %cst_143 : f32 to vector<4x32xf32>
    %cst_144 = arith.constant 0.000000e+00 : f32
    %339 = vector.broadcast %cst_144 : f32 to vector<4x32xf32>
    %c0_145 = arith.constant 0 : index
    %c0_146 = arith.constant 0 : index
    %c0_147 = arith.constant 0 : index
    %340 = vector.load %arg10[%c0_145, %c0_146, %c0_147] : memref<8x4x16xf32, #tpu.memory_space<vmem>>, vector<1x4x16xf32>
    %341 = vector.shape_cast %340 : vector<1x4x16xf32> to vector<4x16xf32>
    %c0_148 = arith.constant 0 : index
    %c0_149 = arith.constant 0 : index
    %c0_150 = arith.constant 0 : index
    %342 = vector.load %arg11[%c0_148, %c0_149, %c0_150] : memref<8x4x16xf32, #tpu.memory_space<vmem>>, vector<1x4x16xf32>
    %343 = vector.shape_cast %342 : vector<1x4x16xf32> to vector<4x16xf32>
    %c7_151 = arith.constant 7 : index
    %c0_152 = arith.constant 0 : index
    %c0_153 = arith.constant 0 : index
    %344 = vector.load %arg10[%c7_151, %c0_152, %c0_153] : memref<8x4x16xf32, #tpu.memory_space<vmem>>, vector<1x4x16xf32>
    %345 = vector.shape_cast %344 : vector<1x4x16xf32> to vector<4x16xf32>
    %c7_154 = arith.constant 7 : index
    %c0_155 = arith.constant 0 : index
    %c0_156 = arith.constant 0 : index
    %346 = vector.load %arg11[%c7_154, %c0_155, %c0_156] : memref<8x4x16xf32, #tpu.memory_space<vmem>>, vector<1x4x16xf32>
    %347 = vector.shape_cast %346 : vector<1x4x16xf32> to vector<4x16xf32>
    %348 = tpu.concatenate %341, %343, %345, %347, %338 in 1 : vector<4x16xf32>, vector<4x16xf32>, vector<4x16xf32>, vector<4x16xf32>, vector<4x32xf32> -> vector<4x96xf32>
    %c0_157 = arith.constant 0 : index
    %c0_158 = arith.constant 0 : index
    %349 = vector.load %arg5[%c0_157, %c0_158] : memref<96x128xf32, #tpu.memory_space<vmem>>, vector<96x128xf32>
    %cst_159 = arith.constant dense<0.000000e+00> : vector<4x128xf32>
    %350 = tpu.matmul %348, %349, %cst_159 {dimension_numbers = #tpu.dot_dimension_numbers<[1], [0], [0], [1], [0, 0, 1, 1], [], []>} : vector<4x96xf32>, vector<96x128xf32>, vector<4x128xf32> -> vector<4x128xf32>
    %351 = arith.addf %350, %337 : vector<4x128xf32>
    %352 = math.tanh %351 : vector<4x128xf32>
    %353 = arith.negf %351 : vector<4x128xf32>
    %354 = math.exp %353 : vector<4x128xf32>
    %cst_160 = arith.constant 1.000000e+00 : f32
    %355 = vector.broadcast %cst_160 : f32 to vector<4x128xf32>
    %356 = arith.addf %355, %354 : vector<4x128xf32>
    %357 = arith.divf %355, %356 : vector<4x128xf32>
    %358 = arith.select %11, %352, %357 : vector<4x128xi1>, vector<4x128xf32>
    %359 = vector.extract_strided_slice %358 {offsets = [0, 0], sizes = [4, 32], strides = [1, 1]} : vector<4x128xf32> to vector<4x32xf32>
    %360 = vector.extract_strided_slice %358 {offsets = [0, 32], sizes = [4, 32], strides = [1, 1]} : vector<4x128xf32> to vector<4x32xf32>
    %361 = vector.extract_strided_slice %358 {offsets = [0, 64], sizes = [4, 32], strides = [1, 1]} : vector<4x128xf32> to vector<4x32xf32>
    %362 = vector.extract_strided_slice %358 {offsets = [0, 96], sizes = [4, 32], strides = [1, 1]} : vector<4x128xf32> to vector<4x32xf32>
    %363 = arith.mulf %360, %339 : vector<4x32xf32>
    %364 = arith.mulf %359, %361 : vector<4x32xf32>
    %365 = arith.addf %363, %364 : vector<4x32xf32>
    %366 = math.tanh %365 : vector<4x32xf32>
    %367 = arith.mulf %362, %366 : vector<4x32xf32>
    %c0_i32_161 = arith.constant 0 : i32
    %c7_i32_162 = arith.constant 7 : i32
    %368 = vector.broadcast %c0_i32_161 : i32 to vector<4x32xi32>
    %369 = vector.broadcast %c7_i32_162 : i32 to vector<4x32xi32>
    %370 = arith.select %5, %368, %369 : vector<4x32xi1>, vector<4x32xi32>
    %371 = arith.cmpi slt, %370, %2 : vector<4x32xi32>
    %cst_163 = arith.constant 0.000000e+00 : f32
    %372 = vector.broadcast %cst_163 : f32 to vector<4x32xf32>
    %373 = arith.select %371, %367, %372 : vector<4x32xi1>, vector<4x32xf32>
    %374 = vector.extract_strided_slice %373 {offsets = [0, 0], sizes = [4, 16], strides = [1, 1]} : vector<4x32xf32> to vector<4x16xf32>
    %c0_164 = arith.constant 0 : index
    %c0_165 = arith.constant 0 : index
    %c0_166 = arith.constant 0 : index
    %375 = vector.load %arg7[%c0_164, %c0_165, %c0_166] : memref<8x4x32xf32, #tpu.memory_space<vmem>>, vector<1x4x16xf32>
    %376 = vector.shape_cast %375 : vector<1x4x16xf32> to vector<4x16xf32>
    %377 = vector.shape_cast %374 : vector<4x16xf32> to vector<1x4x16xf32>
    tpu.vector_store %arg7[%c0_164, %c0_165, %c0_166], %377 {strides = array<i32>} : memref<8x4x32xf32, #tpu.memory_space<vmem>>, vector<1x4x16xf32>,
    %378 = vector.extract_strided_slice %373 {offsets = [0, 16], sizes = [4, 16], strides = [1, 1]} : vector<4x32xf32> to vector<4x16xf32>
    %c7_167 = arith.constant 7 : index
    %c0_168 = arith.constant 0 : index
    %c16 = arith.constant 16 : index
    %379 = vector.load %arg7[%c7_167, %c0_168, %c16] : memref<8x4x32xf32, #tpu.memory_space<vmem>>, vector<1x4x16xf32>
    %380 = vector.shape_cast %379 : vector<1x4x16xf32> to vector<4x16xf32>
    %381 = vector.shape_cast %378 : vector<4x16xf32> to vector<1x4x16xf32>
    tpu.vector_store %arg7[%c7_167, %c0_168, %c16], %381 {strides = array<i32>} : memref<8x4x32xf32, #tpu.memory_space<vmem>>, vector<1x4x16xf32>,
    %382 = arith.select %371, %367, %338 : vector<4x32xi1>, vector<4x32xf32>
    %383 = arith.select %371, %365, %339 : vector<4x32xi1>, vector<4x32xf32>
    %c1_169 = arith.constant 1 : index
    %c0_170 = arith.constant 0 : index
    %c0_171 = arith.constant 0 : index
    %384 = vector.load %arg10[%c1_169, %c0_170, %c0_171] : memref<8x4x16xf32, #tpu.memory_space<vmem>>, vector<1x4x16xf32>
    %385 = vector.shape_cast %384 : vector<1x4x16xf32> to vector<4x16xf32>
    %c1_172 = arith.constant 1 : index
    %c0_173 = arith.constant 0 : index
    %c0_174 = arith.constant 0 : index
    %386 = vector.load %arg11[%c1_172, %c0_173, %c0_174] : memref<8x4x16xf32, #tpu.memory_space<vmem>>, vector<1x4x16xf32>
    %387 = vector.shape_cast %386 : vector<1x4x16xf32> to vector<4x16xf32>
    %c6_175 = arith.constant 6 : index
    %c0_176 = arith.constant 0 : index
    %c0_177 = arith.constant 0 : index
    %388 = vector.load %arg10[%c6_175, %c0_176, %c0_177] : memref<8x4x16xf32, #tpu.memory_space<vmem>>, vector<1x4x16xf32>
    %389 = vector.shape_cast %388 : vector<1x4x16xf32> to vector<4x16xf32>
    %c6_178 = arith.constant 6 : index
    %c0_179 = arith.constant 0 : index
    %c0_180 = arith.constant 0 : index
    %390 = vector.load %arg11[%c6_178, %c0_179, %c0_180] : memref<8x4x16xf32, #tpu.memory_space<vmem>>, vector<1x4x16xf32>
    %391 = vector.shape_cast %390 : vector<1x4x16xf32> to vector<4x16xf32>
    %392 = tpu.concatenate %385, %387, %389, %391, %382 in 1 : vector<4x16xf32>, vector<4x16xf32>, vector<4x16xf32>, vector<4x16xf32>, vector<4x32xf32> -> vector<4x96xf32>
    %c0_181 = arith.constant 0 : index
    %c0_182 = arith.constant 0 : index
    %393 = vector.load %arg5[%c0_181, %c0_182] : memref<96x128xf32, #tpu.memory_space<vmem>>, vector<96x128xf32>
    %cst_183 = arith.constant dense<0.000000e+00> : vector<4x128xf32>
    %394 = tpu.matmul %392, %393, %cst_183 {dimension_numbers = #tpu.dot_dimension_numbers<[1], [0], [0], [1], [0, 0, 1, 1], [], []>} : vector<4x96xf32>, vector<96x128xf32>, vector<4x128xf32> -> vector<4x128xf32>
    %395 = arith.addf %394, %337 : vector<4x128xf32>
    %396 = math.tanh %395 : vector<4x128xf32>
    %397 = arith.negf %395 : vector<4x128xf32>
    %398 = math.exp %397 : vector<4x128xf32>
    %cst_184 = arith.constant 1.000000e+00 : f32
    %399 = vector.broadcast %cst_184 : f32 to vector<4x128xf32>
    %400 = arith.addf %399, %398 : vector<4x128xf32>
    %401 = arith.divf %399, %400 : vector<4x128xf32>
    %402 = arith.select %11, %396, %401 : vector<4x128xi1>, vector<4x128xf32>
    %403 = vector.extract_strided_slice %402 {offsets = [0, 0], sizes = [4, 32], strides = [1, 1]} : vector<4x128xf32> to vector<4x32xf32>
    %404 = vector.extract_strided_slice %402 {offsets = [0, 32], sizes = [4, 32], strides = [1, 1]} : vector<4x128xf32> to vector<4x32xf32>
    %405 = vector.extract_strided_slice %402 {offsets = [0, 64], sizes = [4, 32], strides = [1, 1]} : vector<4x128xf32> to vector<4x32xf32>
    %406 = vector.extract_strided_slice %402 {offsets = [0, 96], sizes = [4, 32], strides = [1, 1]} : vector<4x128xf32> to vector<4x32xf32>
    %407 = arith.mulf %404, %383 : vector<4x32xf32>
    %408 = arith.mulf %403, %405 : vector<4x32xf32>
    %409 = arith.addf %407, %408 : vector<4x32xf32>
    %410 = math.tanh %409 : vector<4x32xf32>
    %411 = arith.mulf %406, %410 : vector<4x32xf32>
    %c1_i32_185 = arith.constant 1 : i32
    %c6_i32_186 = arith.constant 6 : i32
    %412 = vector.broadcast %c1_i32_185 : i32 to vector<4x32xi32>
    %413 = vector.broadcast %c6_i32_186 : i32 to vector<4x32xi32>
    %414 = arith.select %5, %412, %413 : vector<4x32xi1>, vector<4x32xi32>
    %415 = arith.cmpi slt, %414, %2 : vector<4x32xi32>
    %cst_187 = arith.constant 0.000000e+00 : f32
    %416 = vector.broadcast %cst_187 : f32 to vector<4x32xf32>
    %417 = arith.select %415, %411, %416 : vector<4x32xi1>, vector<4x32xf32>
    %418 = vector.extract_strided_slice %417 {offsets = [0, 0], sizes = [4, 16], strides = [1, 1]} : vector<4x32xf32> to vector<4x16xf32>
    %c1_188 = arith.constant 1 : index
    %c0_189 = arith.constant 0 : index
    %c0_190 = arith.constant 0 : index
    %419 = vector.load %arg7[%c1_188, %c0_189, %c0_190] : memref<8x4x32xf32, #tpu.memory_space<vmem>>, vector<1x4x16xf32>
    %420 = vector.shape_cast %419 : vector<1x4x16xf32> to vector<4x16xf32>
    %421 = vector.shape_cast %418 : vector<4x16xf32> to vector<1x4x16xf32>
    tpu.vector_store %arg7[%c1_188, %c0_189, %c0_190], %421 {strides = array<i32>} : memref<8x4x32xf32, #tpu.memory_space<vmem>>, vector<1x4x16xf32>,
    %422 = vector.extract_strided_slice %417 {offsets = [0, 16], sizes = [4, 16], strides = [1, 1]} : vector<4x32xf32> to vector<4x16xf32>
    %c6_191 = arith.constant 6 : index
    %c0_192 = arith.constant 0 : index
    %c16_193 = arith.constant 16 : index
    %423 = vector.load %arg7[%c6_191, %c0_192, %c16_193] : memref<8x4x32xf32, #tpu.memory_space<vmem>>, vector<1x4x16xf32>
    %424 = vector.shape_cast %423 : vector<1x4x16xf32> to vector<4x16xf32>
    %425 = vector.shape_cast %422 : vector<4x16xf32> to vector<1x4x16xf32>
    tpu.vector_store %arg7[%c6_191, %c0_192, %c16_193], %425 {strides = array<i32>} : memref<8x4x32xf32, #tpu.memory_space<vmem>>, vector<1x4x16xf32>,
    %426 = arith.select %415, %411, %382 : vector<4x32xi1>, vector<4x32xf32>
    %427 = arith.select %415, %409, %383 : vector<4x32xi1>, vector<4x32xf32>
    %c2_194 = arith.constant 2 : index
    %c0_195 = arith.constant 0 : index
    %c0_196 = arith.constant 0 : index
    %428 = vector.load %arg10[%c2_194, %c0_195, %c0_196] : memref<8x4x16xf32, #tpu.memory_space<vmem>>, vector<1x4x16xf32>
    %429 = vector.shape_cast %428 : vector<1x4x16xf32> to vector<4x16xf32>
    %c2_197 = arith.constant 2 : index
    %c0_198 = arith.constant 0 : index
    %c0_199 = arith.constant 0 : index
    %430 = vector.load %arg11[%c2_197, %c0_198, %c0_199] : memref<8x4x16xf32, #tpu.memory_space<vmem>>, vector<1x4x16xf32>
    %431 = vector.shape_cast %430 : vector<1x4x16xf32> to vector<4x16xf32>
    %c5_200 = arith.constant 5 : index
    %c0_201 = arith.constant 0 : index
    %c0_202 = arith.constant 0 : index
    %432 = vector.load %arg10[%c5_200, %c0_201, %c0_202] : memref<8x4x16xf32, #tpu.memory_space<vmem>>, vector<1x4x16xf32>
    %433 = vector.shape_cast %432 : vector<1x4x16xf32> to vector<4x16xf32>
    %c5_203 = arith.constant 5 : index
    %c0_204 = arith.constant 0 : index
    %c0_205 = arith.constant 0 : index
    %434 = vector.load %arg11[%c5_203, %c0_204, %c0_205] : memref<8x4x16xf32, #tpu.memory_space<vmem>>, vector<1x4x16xf32>
    %435 = vector.shape_cast %434 : vector<1x4x16xf32> to vector<4x16xf32>
    %436 = tpu.concatenate %429, %431, %433, %435, %426 in 1 : vector<4x16xf32>, vector<4x16xf32>, vector<4x16xf32>, vector<4x16xf32>, vector<4x32xf32> -> vector<4x96xf32>
    %c0_206 = arith.constant 0 : index
    %c0_207 = arith.constant 0 : index
    %437 = vector.load %arg5[%c0_206, %c0_207] : memref<96x128xf32, #tpu.memory_space<vmem>>, vector<96x128xf32>
    %cst_208 = arith.constant dense<0.000000e+00> : vector<4x128xf32>
    %438 = tpu.matmul %436, %437, %cst_208 {dimension_numbers = #tpu.dot_dimension_numbers<[1], [0], [0], [1], [0, 0, 1, 1], [], []>} : vector<4x96xf32>, vector<96x128xf32>, vector<4x128xf32> -> vector<4x128xf32>
    %439 = arith.addf %438, %337 : vector<4x128xf32>
    %440 = math.tanh %439 : vector<4x128xf32>
    %441 = arith.negf %439 : vector<4x128xf32>
    %442 = math.exp %441 : vector<4x128xf32>
    %cst_209 = arith.constant 1.000000e+00 : f32
    %443 = vector.broadcast %cst_209 : f32 to vector<4x128xf32>
    %444 = arith.addf %443, %442 : vector<4x128xf32>
    %445 = arith.divf %443, %444 : vector<4x128xf32>
    %446 = arith.select %11, %440, %445 : vector<4x128xi1>, vector<4x128xf32>
    %447 = vector.extract_strided_slice %446 {offsets = [0, 0], sizes = [4, 32], strides = [1, 1]} : vector<4x128xf32> to vector<4x32xf32>
    %448 = vector.extract_strided_slice %446 {offsets = [0, 32], sizes = [4, 32], strides = [1, 1]} : vector<4x128xf32> to vector<4x32xf32>
    %449 = vector.extract_strided_slice %446 {offsets = [0, 64], sizes = [4, 32], strides = [1, 1]} : vector<4x128xf32> to vector<4x32xf32>
    %450 = vector.extract_strided_slice %446 {offsets = [0, 96], sizes = [4, 32], strides = [1, 1]} : vector<4x128xf32> to vector<4x32xf32>
    %451 = arith.mulf %448, %427 : vector<4x32xf32>
    %452 = arith.mulf %447, %449 : vector<4x32xf32>
    %453 = arith.addf %451, %452 : vector<4x32xf32>
    %454 = math.tanh %453 : vector<4x32xf32>
    %455 = arith.mulf %450, %454 : vector<4x32xf32>
    %c2_i32_210 = arith.constant 2 : i32
    %c5_i32_211 = arith.constant 5 : i32
    %456 = vector.broadcast %c2_i32_210 : i32 to vector<4x32xi32>
    %457 = vector.broadcast %c5_i32_211 : i32 to vector<4x32xi32>
    %458 = arith.select %5, %456, %457 : vector<4x32xi1>, vector<4x32xi32>
    %459 = arith.cmpi slt, %458, %2 : vector<4x32xi32>
    %cst_212 = arith.constant 0.000000e+00 : f32
    %460 = vector.broadcast %cst_212 : f32 to vector<4x32xf32>
    %461 = arith.select %459, %455, %460 : vector<4x32xi1>, vector<4x32xf32>
    %462 = vector.extract_strided_slice %461 {offsets = [0, 0], sizes = [4, 16], strides = [1, 1]} : vector<4x32xf32> to vector<4x16xf32>
    %c2_213 = arith.constant 2 : index
    %c0_214 = arith.constant 0 : index
    %c0_215 = arith.constant 0 : index
    %463 = vector.load %arg7[%c2_213, %c0_214, %c0_215] : memref<8x4x32xf32, #tpu.memory_space<vmem>>, vector<1x4x16xf32>
    %464 = vector.shape_cast %463 : vector<1x4x16xf32> to vector<4x16xf32>
    %465 = vector.shape_cast %462 : vector<4x16xf32> to vector<1x4x16xf32>
    tpu.vector_store %arg7[%c2_213, %c0_214, %c0_215], %465 {strides = array<i32>} : memref<8x4x32xf32, #tpu.memory_space<vmem>>, vector<1x4x16xf32>,
    %466 = vector.extract_strided_slice %461 {offsets = [0, 16], sizes = [4, 16], strides = [1, 1]} : vector<4x32xf32> to vector<4x16xf32>
    %c5_216 = arith.constant 5 : index
    %c0_217 = arith.constant 0 : index
    %c16_218 = arith.constant 16 : index
    %467 = vector.load %arg7[%c5_216, %c0_217, %c16_218] : memref<8x4x32xf32, #tpu.memory_space<vmem>>, vector<1x4x16xf32>
    %468 = vector.shape_cast %467 : vector<1x4x16xf32> to vector<4x16xf32>
    %469 = vector.shape_cast %466 : vector<4x16xf32> to vector<1x4x16xf32>
    tpu.vector_store %arg7[%c5_216, %c0_217, %c16_218], %469 {strides = array<i32>} : memref<8x4x32xf32, #tpu.memory_space<vmem>>, vector<1x4x16xf32>,
    %470 = arith.select %459, %455, %426 : vector<4x32xi1>, vector<4x32xf32>
    %471 = arith.select %459, %453, %427 : vector<4x32xi1>, vector<4x32xf32>
    %c3_219 = arith.constant 3 : index
    %c0_220 = arith.constant 0 : index
    %c0_221 = arith.constant 0 : index
    %472 = vector.load %arg10[%c3_219, %c0_220, %c0_221] : memref<8x4x16xf32, #tpu.memory_space<vmem>>, vector<1x4x16xf32>
    %473 = vector.shape_cast %472 : vector<1x4x16xf32> to vector<4x16xf32>
    %c3_222 = arith.constant 3 : index
    %c0_223 = arith.constant 0 : index
    %c0_224 = arith.constant 0 : index
    %474 = vector.load %arg11[%c3_222, %c0_223, %c0_224] : memref<8x4x16xf32, #tpu.memory_space<vmem>>, vector<1x4x16xf32>
    %475 = vector.shape_cast %474 : vector<1x4x16xf32> to vector<4x16xf32>
    %c4_225 = arith.constant 4 : index
    %c0_226 = arith.constant 0 : index
    %c0_227 = arith.constant 0 : index
    %476 = vector.load %arg10[%c4_225, %c0_226, %c0_227] : memref<8x4x16xf32, #tpu.memory_space<vmem>>, vector<1x4x16xf32>
    %477 = vector.shape_cast %476 : vector<1x4x16xf32> to vector<4x16xf32>
    %c4_228 = arith.constant 4 : index
    %c0_229 = arith.constant 0 : index
    %c0_230 = arith.constant 0 : index
    %478 = vector.load %arg11[%c4_228, %c0_229, %c0_230] : memref<8x4x16xf32, #tpu.memory_space<vmem>>, vector<1x4x16xf32>
    %479 = vector.shape_cast %478 : vector<1x4x16xf32> to vector<4x16xf32>
    %480 = tpu.concatenate %473, %475, %477, %479, %470 in 1 : vector<4x16xf32>, vector<4x16xf32>, vector<4x16xf32>, vector<4x16xf32>, vector<4x32xf32> -> vector<4x96xf32>
    %c0_231 = arith.constant 0 : index
    %c0_232 = arith.constant 0 : index
    %481 = vector.load %arg5[%c0_231, %c0_232] : memref<96x128xf32, #tpu.memory_space<vmem>>, vector<96x128xf32>
    %cst_233 = arith.constant dense<0.000000e+00> : vector<4x128xf32>
    %482 = tpu.matmul %480, %481, %cst_233 {dimension_numbers = #tpu.dot_dimension_numbers<[1], [0], [0], [1], [0, 0, 1, 1], [], []>} : vector<4x96xf32>, vector<96x128xf32>, vector<4x128xf32> -> vector<4x128xf32>
    %483 = arith.addf %482, %337 : vector<4x128xf32>
    %484 = math.tanh %483 : vector<4x128xf32>
    %485 = arith.negf %483 : vector<4x128xf32>
    %486 = math.exp %485 : vector<4x128xf32>
    %cst_234 = arith.constant 1.000000e+00 : f32
    %487 = vector.broadcast %cst_234 : f32 to vector<4x128xf32>
    %488 = arith.addf %487, %486 : vector<4x128xf32>
    %489 = arith.divf %487, %488 : vector<4x128xf32>
    %490 = arith.select %11, %484, %489 : vector<4x128xi1>, vector<4x128xf32>
    %491 = vector.extract_strided_slice %490 {offsets = [0, 0], sizes = [4, 32], strides = [1, 1]} : vector<4x128xf32> to vector<4x32xf32>
    %492 = vector.extract_strided_slice %490 {offsets = [0, 32], sizes = [4, 32], strides = [1, 1]} : vector<4x128xf32> to vector<4x32xf32>
    %493 = vector.extract_strided_slice %490 {offsets = [0, 64], sizes = [4, 32], strides = [1, 1]} : vector<4x128xf32> to vector<4x32xf32>
    %494 = vector.extract_strided_slice %490 {offsets = [0, 96], sizes = [4, 32], strides = [1, 1]} : vector<4x128xf32> to vector<4x32xf32>
    %495 = arith.mulf %492, %471 : vector<4x32xf32>
    %496 = arith.mulf %491, %493 : vector<4x32xf32>
    %497 = arith.addf %495, %496 : vector<4x32xf32>
    %498 = math.tanh %497 : vector<4x32xf32>
    %499 = arith.mulf %494, %498 : vector<4x32xf32>
    %c3_i32_235 = arith.constant 3 : i32
    %c4_i32_236 = arith.constant 4 : i32
    %500 = vector.broadcast %c3_i32_235 : i32 to vector<4x32xi32>
    %501 = vector.broadcast %c4_i32_236 : i32 to vector<4x32xi32>
    %502 = arith.select %5, %500, %501 : vector<4x32xi1>, vector<4x32xi32>
    %503 = arith.cmpi slt, %502, %2 : vector<4x32xi32>
    %cst_237 = arith.constant 0.000000e+00 : f32
    %504 = vector.broadcast %cst_237 : f32 to vector<4x32xf32>
    %505 = arith.select %503, %499, %504 : vector<4x32xi1>, vector<4x32xf32>
    %506 = vector.extract_strided_slice %505 {offsets = [0, 0], sizes = [4, 16], strides = [1, 1]} : vector<4x32xf32> to vector<4x16xf32>
    %c3_238 = arith.constant 3 : index
    %c0_239 = arith.constant 0 : index
    %c0_240 = arith.constant 0 : index
    %507 = vector.load %arg7[%c3_238, %c0_239, %c0_240] : memref<8x4x32xf32, #tpu.memory_space<vmem>>, vector<1x4x16xf32>
    %508 = vector.shape_cast %507 : vector<1x4x16xf32> to vector<4x16xf32>
    %509 = vector.shape_cast %506 : vector<4x16xf32> to vector<1x4x16xf32>
    tpu.vector_store %arg7[%c3_238, %c0_239, %c0_240], %509 {strides = array<i32>} : memref<8x4x32xf32, #tpu.memory_space<vmem>>, vector<1x4x16xf32>,
    %510 = vector.extract_strided_slice %505 {offsets = [0, 16], sizes = [4, 16], strides = [1, 1]} : vector<4x32xf32> to vector<4x16xf32>
    %c4_241 = arith.constant 4 : index
    %c0_242 = arith.constant 0 : index
    %c16_243 = arith.constant 16 : index
    %511 = vector.load %arg7[%c4_241, %c0_242, %c16_243] : memref<8x4x32xf32, #tpu.memory_space<vmem>>, vector<1x4x16xf32>
    %512 = vector.shape_cast %511 : vector<1x4x16xf32> to vector<4x16xf32>
    %513 = vector.shape_cast %510 : vector<4x16xf32> to vector<1x4x16xf32>
    tpu.vector_store %arg7[%c4_241, %c0_242, %c16_243], %513 {strides = array<i32>} : memref<8x4x32xf32, #tpu.memory_space<vmem>>, vector<1x4x16xf32>,
    %514 = arith.select %503, %499, %470 : vector<4x32xi1>, vector<4x32xf32>
    %515 = arith.select %503, %497, %471 : vector<4x32xi1>, vector<4x32xf32>
    %c4_244 = arith.constant 4 : index
    %c0_245 = arith.constant 0 : index
    %c0_246 = arith.constant 0 : index
    %516 = vector.load %arg10[%c4_244, %c0_245, %c0_246] : memref<8x4x16xf32, #tpu.memory_space<vmem>>, vector<1x4x16xf32>
    %517 = vector.shape_cast %516 : vector<1x4x16xf32> to vector<4x16xf32>
    %c4_247 = arith.constant 4 : index
    %c0_248 = arith.constant 0 : index
    %c0_249 = arith.constant 0 : index
    %518 = vector.load %arg11[%c4_247, %c0_248, %c0_249] : memref<8x4x16xf32, #tpu.memory_space<vmem>>, vector<1x4x16xf32>
    %519 = vector.shape_cast %518 : vector<1x4x16xf32> to vector<4x16xf32>
    %c3_250 = arith.constant 3 : index
    %c0_251 = arith.constant 0 : index
    %c0_252 = arith.constant 0 : index
    %520 = vector.load %arg10[%c3_250, %c0_251, %c0_252] : memref<8x4x16xf32, #tpu.memory_space<vmem>>, vector<1x4x16xf32>
    %521 = vector.shape_cast %520 : vector<1x4x16xf32> to vector<4x16xf32>
    %c3_253 = arith.constant 3 : index
    %c0_254 = arith.constant 0 : index
    %c0_255 = arith.constant 0 : index
    %522 = vector.load %arg11[%c3_253, %c0_254, %c0_255] : memref<8x4x16xf32, #tpu.memory_space<vmem>>, vector<1x4x16xf32>
    %523 = vector.shape_cast %522 : vector<1x4x16xf32> to vector<4x16xf32>
    %524 = tpu.concatenate %517, %519, %521, %523, %514 in 1 : vector<4x16xf32>, vector<4x16xf32>, vector<4x16xf32>, vector<4x16xf32>, vector<4x32xf32> -> vector<4x96xf32>
    %c0_256 = arith.constant 0 : index
    %c0_257 = arith.constant 0 : index
    %525 = vector.load %arg5[%c0_256, %c0_257] : memref<96x128xf32, #tpu.memory_space<vmem>>, vector<96x128xf32>
    %cst_258 = arith.constant dense<0.000000e+00> : vector<4x128xf32>
    %526 = tpu.matmul %524, %525, %cst_258 {dimension_numbers = #tpu.dot_dimension_numbers<[1], [0], [0], [1], [0, 0, 1, 1], [], []>} : vector<4x96xf32>, vector<96x128xf32>, vector<4x128xf32> -> vector<4x128xf32>
    %527 = arith.addf %526, %337 : vector<4x128xf32>
    %528 = math.tanh %527 : vector<4x128xf32>
    %529 = arith.negf %527 : vector<4x128xf32>
    %530 = math.exp %529 : vector<4x128xf32>
    %cst_259 = arith.constant 1.000000e+00 : f32
    %531 = vector.broadcast %cst_259 : f32 to vector<4x128xf32>
    %532 = arith.addf %531, %530 : vector<4x128xf32>
    %533 = arith.divf %531, %532 : vector<4x128xf32>
    %534 = arith.select %11, %528, %533 : vector<4x128xi1>, vector<4x128xf32>
    %535 = vector.extract_strided_slice %534 {offsets = [0, 0], sizes = [4, 32], strides = [1, 1]} : vector<4x128xf32> to vector<4x32xf32>
    %536 = vector.extract_strided_slice %534 {offsets = [0, 32], sizes = [4, 32], strides = [1, 1]} : vector<4x128xf32> to vector<4x32xf32>
    %537 = vector.extract_strided_slice %534 {offsets = [0, 64], sizes = [4, 32], strides = [1, 1]} : vector<4x128xf32> to vector<4x32xf32>
    %538 = vector.extract_strided_slice %534 {offsets = [0, 96], sizes = [4, 32], strides = [1, 1]} : vector<4x128xf32> to vector<4x32xf32>
    %539 = arith.mulf %536, %515 : vector<4x32xf32>
    %540 = arith.mulf %535, %537 : vector<4x32xf32>
    %541 = arith.addf %539, %540 : vector<4x32xf32>
    %542 = math.tanh %541 : vector<4x32xf32>
    %543 = arith.mulf %538, %542 : vector<4x32xf32>
    %c4_i32_260 = arith.constant 4 : i32
    %c3_i32_261 = arith.constant 3 : i32
    %544 = vector.broadcast %c4_i32_260 : i32 to vector<4x32xi32>
    %545 = vector.broadcast %c3_i32_261 : i32 to vector<4x32xi32>
    %546 = arith.select %5, %544, %545 : vector<4x32xi1>, vector<4x32xi32>
    %547 = arith.cmpi slt, %546, %2 : vector<4x32xi32>
    %cst_262 = arith.constant 0.000000e+00 : f32
    %548 = vector.broadcast %cst_262 : f32 to vector<4x32xf32>
    %549 = arith.select %547, %543, %548 : vector<4x32xi1>, vector<4x32xf32>
    %550 = vector.extract_strided_slice %549 {offsets = [0, 0], sizes = [4, 16], strides = [1, 1]} : vector<4x32xf32> to vector<4x16xf32>
    %c4_263 = arith.constant 4 : index
    %c0_264 = arith.constant 0 : index
    %c0_265 = arith.constant 0 : index
    %551 = vector.load %arg7[%c4_263, %c0_264, %c0_265] : memref<8x4x32xf32, #tpu.memory_space<vmem>>, vector<1x4x16xf32>
    %552 = vector.shape_cast %551 : vector<1x4x16xf32> to vector<4x16xf32>
    %553 = vector.shape_cast %550 : vector<4x16xf32> to vector<1x4x16xf32>
    tpu.vector_store %arg7[%c4_263, %c0_264, %c0_265], %553 {strides = array<i32>} : memref<8x4x32xf32, #tpu.memory_space<vmem>>, vector<1x4x16xf32>,
    %554 = vector.extract_strided_slice %549 {offsets = [0, 16], sizes = [4, 16], strides = [1, 1]} : vector<4x32xf32> to vector<4x16xf32>
    %c3_266 = arith.constant 3 : index
    %c0_267 = arith.constant 0 : index
    %c16_268 = arith.constant 16 : index
    %555 = vector.load %arg7[%c3_266, %c0_267, %c16_268] : memref<8x4x32xf32, #tpu.memory_space<vmem>>, vector<1x4x16xf32>
    %556 = vector.shape_cast %555 : vector<1x4x16xf32> to vector<4x16xf32>
    %557 = vector.shape_cast %554 : vector<4x16xf32> to vector<1x4x16xf32>
    tpu.vector_store %arg7[%c3_266, %c0_267, %c16_268], %557 {strides = array<i32>} : memref<8x4x32xf32, #tpu.memory_space<vmem>>, vector<1x4x16xf32>,
    %558 = arith.select %547, %543, %514 : vector<4x32xi1>, vector<4x32xf32>
    %559 = arith.select %547, %541, %515 : vector<4x32xi1>, vector<4x32xf32>
    %c5_269 = arith.constant 5 : index
    %c0_270 = arith.constant 0 : index
    %c0_271 = arith.constant 0 : index
    %560 = vector.load %arg10[%c5_269, %c0_270, %c0_271] : memref<8x4x16xf32, #tpu.memory_space<vmem>>, vector<1x4x16xf32>
    %561 = vector.shape_cast %560 : vector<1x4x16xf32> to vector<4x16xf32>
    %c5_272 = arith.constant 5 : index
    %c0_273 = arith.constant 0 : index
    %c0_274 = arith.constant 0 : index
    %562 = vector.load %arg11[%c5_272, %c0_273, %c0_274] : memref<8x4x16xf32, #tpu.memory_space<vmem>>, vector<1x4x16xf32>
    %563 = vector.shape_cast %562 : vector<1x4x16xf32> to vector<4x16xf32>
    %c2_275 = arith.constant 2 : index
    %c0_276 = arith.constant 0 : index
    %c0_277 = arith.constant 0 : index
    %564 = vector.load %arg10[%c2_275, %c0_276, %c0_277] : memref<8x4x16xf32, #tpu.memory_space<vmem>>, vector<1x4x16xf32>
    %565 = vector.shape_cast %564 : vector<1x4x16xf32> to vector<4x16xf32>
    %c2_278 = arith.constant 2 : index
    %c0_279 = arith.constant 0 : index
    %c0_280 = arith.constant 0 : index
    %566 = vector.load %arg11[%c2_278, %c0_279, %c0_280] : memref<8x4x16xf32, #tpu.memory_space<vmem>>, vector<1x4x16xf32>
    %567 = vector.shape_cast %566 : vector<1x4x16xf32> to vector<4x16xf32>
    %568 = tpu.concatenate %561, %563, %565, %567, %558 in 1 : vector<4x16xf32>, vector<4x16xf32>, vector<4x16xf32>, vector<4x16xf32>, vector<4x32xf32> -> vector<4x96xf32>
    %c0_281 = arith.constant 0 : index
    %c0_282 = arith.constant 0 : index
    %569 = vector.load %arg5[%c0_281, %c0_282] : memref<96x128xf32, #tpu.memory_space<vmem>>, vector<96x128xf32>
    %cst_283 = arith.constant dense<0.000000e+00> : vector<4x128xf32>
    %570 = tpu.matmul %568, %569, %cst_283 {dimension_numbers = #tpu.dot_dimension_numbers<[1], [0], [0], [1], [0, 0, 1, 1], [], []>} : vector<4x96xf32>, vector<96x128xf32>, vector<4x128xf32> -> vector<4x128xf32>
    %571 = arith.addf %570, %337 : vector<4x128xf32>
    %572 = math.tanh %571 : vector<4x128xf32>
    %573 = arith.negf %571 : vector<4x128xf32>
    %574 = math.exp %573 : vector<4x128xf32>
    %cst_284 = arith.constant 1.000000e+00 : f32
    %575 = vector.broadcast %cst_284 : f32 to vector<4x128xf32>
    %576 = arith.addf %575, %574 : vector<4x128xf32>
    %577 = arith.divf %575, %576 : vector<4x128xf32>
    %578 = arith.select %11, %572, %577 : vector<4x128xi1>, vector<4x128xf32>
    %579 = vector.extract_strided_slice %578 {offsets = [0, 0], sizes = [4, 32], strides = [1, 1]} : vector<4x128xf32> to vector<4x32xf32>
    %580 = vector.extract_strided_slice %578 {offsets = [0, 32], sizes = [4, 32], strides = [1, 1]} : vector<4x128xf32> to vector<4x32xf32>
    %581 = vector.extract_strided_slice %578 {offsets = [0, 64], sizes = [4, 32], strides = [1, 1]} : vector<4x128xf32> to vector<4x32xf32>
    %582 = vector.extract_strided_slice %578 {offsets = [0, 96], sizes = [4, 32], strides = [1, 1]} : vector<4x128xf32> to vector<4x32xf32>
    %583 = arith.mulf %580, %559 : vector<4x32xf32>
    %584 = arith.mulf %579, %581 : vector<4x32xf32>
    %585 = arith.addf %583, %584 : vector<4x32xf32>
    %586 = math.tanh %585 : vector<4x32xf32>
    %587 = arith.mulf %582, %586 : vector<4x32xf32>
    %c5_i32_285 = arith.constant 5 : i32
    %c2_i32_286 = arith.constant 2 : i32
    %588 = vector.broadcast %c5_i32_285 : i32 to vector<4x32xi32>
    %589 = vector.broadcast %c2_i32_286 : i32 to vector<4x32xi32>
    %590 = arith.select %5, %588, %589 : vector<4x32xi1>, vector<4x32xi32>
    %591 = arith.cmpi slt, %590, %2 : vector<4x32xi32>
    %cst_287 = arith.constant 0.000000e+00 : f32
    %592 = vector.broadcast %cst_287 : f32 to vector<4x32xf32>
    %593 = arith.select %591, %587, %592 : vector<4x32xi1>, vector<4x32xf32>
    %594 = vector.extract_strided_slice %593 {offsets = [0, 0], sizes = [4, 16], strides = [1, 1]} : vector<4x32xf32> to vector<4x16xf32>
    %c5_288 = arith.constant 5 : index
    %c0_289 = arith.constant 0 : index
    %c0_290 = arith.constant 0 : index
    %595 = vector.load %arg7[%c5_288, %c0_289, %c0_290] : memref<8x4x32xf32, #tpu.memory_space<vmem>>, vector<1x4x16xf32>
    %596 = vector.shape_cast %595 : vector<1x4x16xf32> to vector<4x16xf32>
    %597 = vector.shape_cast %594 : vector<4x16xf32> to vector<1x4x16xf32>
    tpu.vector_store %arg7[%c5_288, %c0_289, %c0_290], %597 {strides = array<i32>} : memref<8x4x32xf32, #tpu.memory_space<vmem>>, vector<1x4x16xf32>,
    %598 = vector.extract_strided_slice %593 {offsets = [0, 16], sizes = [4, 16], strides = [1, 1]} : vector<4x32xf32> to vector<4x16xf32>
    %c2_291 = arith.constant 2 : index
    %c0_292 = arith.constant 0 : index
    %c16_293 = arith.constant 16 : index
    %599 = vector.load %arg7[%c2_291, %c0_292, %c16_293] : memref<8x4x32xf32, #tpu.memory_space<vmem>>, vector<1x4x16xf32>
    %600 = vector.shape_cast %599 : vector<1x4x16xf32> to vector<4x16xf32>
    %601 = vector.shape_cast %598 : vector<4x16xf32> to vector<1x4x16xf32>
    tpu.vector_store %arg7[%c2_291, %c0_292, %c16_293], %601 {strides = array<i32>} : memref<8x4x32xf32, #tpu.memory_space<vmem>>, vector<1x4x16xf32>,
    %602 = arith.select %591, %587, %558 : vector<4x32xi1>, vector<4x32xf32>
    %603 = arith.select %591, %585, %559 : vector<4x32xi1>, vector<4x32xf32>
    %c6_294 = arith.constant 6 : index
    %c0_295 = arith.constant 0 : index
    %c0_296 = arith.constant 0 : index
    %604 = vector.load %arg10[%c6_294, %c0_295, %c0_296] : memref<8x4x16xf32, #tpu.memory_space<vmem>>, vector<1x4x16xf32>
    %605 = vector.shape_cast %604 : vector<1x4x16xf32> to vector<4x16xf32>
    %c6_297 = arith.constant 6 : index
    %c0_298 = arith.constant 0 : index
    %c0_299 = arith.constant 0 : index
    %606 = vector.load %arg11[%c6_297, %c0_298, %c0_299] : memref<8x4x16xf32, #tpu.memory_space<vmem>>, vector<1x4x16xf32>
    %607 = vector.shape_cast %606 : vector<1x4x16xf32> to vector<4x16xf32>
    %c1_300 = arith.constant 1 : index
    %c0_301 = arith.constant 0 : index
    %c0_302 = arith.constant 0 : index
    %608 = vector.load %arg10[%c1_300, %c0_301, %c0_302] : memref<8x4x16xf32, #tpu.memory_space<vmem>>, vector<1x4x16xf32>
    %609 = vector.shape_cast %608 : vector<1x4x16xf32> to vector<4x16xf32>
    %c1_303 = arith.constant 1 : index
    %c0_304 = arith.constant 0 : index
    %c0_305 = arith.constant 0 : index
    %610 = vector.load %arg11[%c1_303, %c0_304, %c0_305] : memref<8x4x16xf32, #tpu.memory_space<vmem>>, vector<1x4x16xf32>
    %611 = vector.shape_cast %610 : vector<1x4x16xf32> to vector<4x16xf32>
    %612 = tpu.concatenate %605, %607, %609, %611, %602 in 1 : vector<4x16xf32>, vector<4x16xf32>, vector<4x16xf32>, vector<4x16xf32>, vector<4x32xf32> -> vector<4x96xf32>
    %c0_306 = arith.constant 0 : index
    %c0_307 = arith.constant 0 : index
    %613 = vector.load %arg5[%c0_306, %c0_307] : memref<96x128xf32, #tpu.memory_space<vmem>>, vector<96x128xf32>
    %cst_308 = arith.constant dense<0.000000e+00> : vector<4x128xf32>
    %614 = tpu.matmul %612, %613, %cst_308 {dimension_numbers = #tpu.dot_dimension_numbers<[1], [0], [0], [1], [0, 0, 1, 1], [], []>} : vector<4x96xf32>, vector<96x128xf32>, vector<4x128xf32> -> vector<4x128xf32>
    %615 = arith.addf %614, %337 : vector<4x128xf32>
    %616 = math.tanh %615 : vector<4x128xf32>
    %617 = arith.negf %615 : vector<4x128xf32>
    %618 = math.exp %617 : vector<4x128xf32>
    %cst_309 = arith.constant 1.000000e+00 : f32
    %619 = vector.broadcast %cst_309 : f32 to vector<4x128xf32>
    %620 = arith.addf %619, %618 : vector<4x128xf32>
    %621 = arith.divf %619, %620 : vector<4x128xf32>
    %622 = arith.select %11, %616, %621 : vector<4x128xi1>, vector<4x128xf32>
    %623 = vector.extract_strided_slice %622 {offsets = [0, 0], sizes = [4, 32], strides = [1, 1]} : vector<4x128xf32> to vector<4x32xf32>
    %624 = vector.extract_strided_slice %622 {offsets = [0, 32], sizes = [4, 32], strides = [1, 1]} : vector<4x128xf32> to vector<4x32xf32>
    %625 = vector.extract_strided_slice %622 {offsets = [0, 64], sizes = [4, 32], strides = [1, 1]} : vector<4x128xf32> to vector<4x32xf32>
    %626 = vector.extract_strided_slice %622 {offsets = [0, 96], sizes = [4, 32], strides = [1, 1]} : vector<4x128xf32> to vector<4x32xf32>
    %627 = arith.mulf %624, %603 : vector<4x32xf32>
    %628 = arith.mulf %623, %625 : vector<4x32xf32>
    %629 = arith.addf %627, %628 : vector<4x32xf32>
    %630 = math.tanh %629 : vector<4x32xf32>
    %631 = arith.mulf %626, %630 : vector<4x32xf32>
    %c6_i32_310 = arith.constant 6 : i32
    %c1_i32_311 = arith.constant 1 : i32
    %632 = vector.broadcast %c6_i32_310 : i32 to vector<4x32xi32>
    %633 = vector.broadcast %c1_i32_311 : i32 to vector<4x32xi32>
    %634 = arith.select %5, %632, %633 : vector<4x32xi1>, vector<4x32xi32>
    %635 = arith.cmpi slt, %634, %2 : vector<4x32xi32>
    %cst_312 = arith.constant 0.000000e+00 : f32
    %636 = vector.broadcast %cst_312 : f32 to vector<4x32xf32>
    %637 = arith.select %635, %631, %636 : vector<4x32xi1>, vector<4x32xf32>
    %638 = vector.extract_strided_slice %637 {offsets = [0, 0], sizes = [4, 16], strides = [1, 1]} : vector<4x32xf32> to vector<4x16xf32>
    %c6_313 = arith.constant 6 : index
    %c0_314 = arith.constant 0 : index
    %c0_315 = arith.constant 0 : index
    %639 = vector.load %arg7[%c6_313, %c0_314, %c0_315] : memref<8x4x32xf32, #tpu.memory_space<vmem>>, vector<1x4x16xf32>
    %640 = vector.shape_cast %639 : vector<1x4x16xf32> to vector<4x16xf32>
    %641 = vector.shape_cast %638 : vector<4x16xf32> to vector<1x4x16xf32>
    tpu.vector_store %arg7[%c6_313, %c0_314, %c0_315], %641 {strides = array<i32>} : memref<8x4x32xf32, #tpu.memory_space<vmem>>, vector<1x4x16xf32>,
    %642 = vector.extract_strided_slice %637 {offsets = [0, 16], sizes = [4, 16], strides = [1, 1]} : vector<4x32xf32> to vector<4x16xf32>
    %c1_316 = arith.constant 1 : index
    %c0_317 = arith.constant 0 : index
    %c16_318 = arith.constant 16 : index
    %643 = vector.load %arg7[%c1_316, %c0_317, %c16_318] : memref<8x4x32xf32, #tpu.memory_space<vmem>>, vector<1x4x16xf32>
    %644 = vector.shape_cast %643 : vector<1x4x16xf32> to vector<4x16xf32>
    %645 = vector.shape_cast %642 : vector<4x16xf32> to vector<1x4x16xf32>
    tpu.vector_store %arg7[%c1_316, %c0_317, %c16_318], %645 {strides = array<i32>} : memref<8x4x32xf32, #tpu.memory_space<vmem>>, vector<1x4x16xf32>,
    %646 = arith.select %635, %631, %602 : vector<4x32xi1>, vector<4x32xf32>
    %647 = arith.select %635, %629, %603 : vector<4x32xi1>, vector<4x32xf32>
    %c7_319 = arith.constant 7 : index
    %c0_320 = arith.constant 0 : index
    %c0_321 = arith.constant 0 : index
    %648 = vector.load %arg10[%c7_319, %c0_320, %c0_321] : memref<8x4x16xf32, #tpu.memory_space<vmem>>, vector<1x4x16xf32>
    %649 = vector.shape_cast %648 : vector<1x4x16xf32> to vector<4x16xf32>
    %c7_322 = arith.constant 7 : index
    %c0_323 = arith.constant 0 : index
    %c0_324 = arith.constant 0 : index
    %650 = vector.load %arg11[%c7_322, %c0_323, %c0_324] : memref<8x4x16xf32, #tpu.memory_space<vmem>>, vector<1x4x16xf32>
    %651 = vector.shape_cast %650 : vector<1x4x16xf32> to vector<4x16xf32>
    %c0_325 = arith.constant 0 : index
    %c0_326 = arith.constant 0 : index
    %c0_327 = arith.constant 0 : index
    %652 = vector.load %arg10[%c0_325, %c0_326, %c0_327] : memref<8x4x16xf32, #tpu.memory_space<vmem>>, vector<1x4x16xf32>
    %653 = vector.shape_cast %652 : vector<1x4x16xf32> to vector<4x16xf32>
    %c0_328 = arith.constant 0 : index
    %c0_329 = arith.constant 0 : index
    %c0_330 = arith.constant 0 : index
    %654 = vector.load %arg11[%c0_328, %c0_329, %c0_330] : memref<8x4x16xf32, #tpu.memory_space<vmem>>, vector<1x4x16xf32>
    %655 = vector.shape_cast %654 : vector<1x4x16xf32> to vector<4x16xf32>
    %656 = tpu.concatenate %649, %651, %653, %655, %646 in 1 : vector<4x16xf32>, vector<4x16xf32>, vector<4x16xf32>, vector<4x16xf32>, vector<4x32xf32> -> vector<4x96xf32>
    %c0_331 = arith.constant 0 : index
    %c0_332 = arith.constant 0 : index
    %657 = vector.load %arg5[%c0_331, %c0_332] : memref<96x128xf32, #tpu.memory_space<vmem>>, vector<96x128xf32>
    %cst_333 = arith.constant dense<0.000000e+00> : vector<4x128xf32>
    %658 = tpu.matmul %656, %657, %cst_333 {dimension_numbers = #tpu.dot_dimension_numbers<[1], [0], [0], [1], [0, 0, 1, 1], [], []>} : vector<4x96xf32>, vector<96x128xf32>, vector<4x128xf32> -> vector<4x128xf32>
    %659 = arith.addf %658, %337 : vector<4x128xf32>
    %660 = math.tanh %659 : vector<4x128xf32>
    %661 = arith.negf %659 : vector<4x128xf32>
    %662 = math.exp %661 : vector<4x128xf32>
    %cst_334 = arith.constant 1.000000e+00 : f32
    %663 = vector.broadcast %cst_334 : f32 to vector<4x128xf32>
    %664 = arith.addf %663, %662 : vector<4x128xf32>
    %665 = arith.divf %663, %664 : vector<4x128xf32>
    %666 = arith.select %11, %660, %665 : vector<4x128xi1>, vector<4x128xf32>
    %667 = vector.extract_strided_slice %666 {offsets = [0, 0], sizes = [4, 32], strides = [1, 1]} : vector<4x128xf32> to vector<4x32xf32>
    %668 = vector.extract_strided_slice %666 {offsets = [0, 32], sizes = [4, 32], strides = [1, 1]} : vector<4x128xf32> to vector<4x32xf32>
    %669 = vector.extract_strided_slice %666 {offsets = [0, 64], sizes = [4, 32], strides = [1, 1]} : vector<4x128xf32> to vector<4x32xf32>
    %670 = vector.extract_strided_slice %666 {offsets = [0, 96], sizes = [4, 32], strides = [1, 1]} : vector<4x128xf32> to vector<4x32xf32>
    %671 = arith.mulf %668, %647 : vector<4x32xf32>
    %672 = arith.mulf %667, %669 : vector<4x32xf32>
    %673 = arith.addf %671, %672 : vector<4x32xf32>
    %674 = math.tanh %673 : vector<4x32xf32>
    %675 = arith.mulf %670, %674 : vector<4x32xf32>
    %c7_i32_335 = arith.constant 7 : i32
    %c0_i32_336 = arith.constant 0 : i32
    %676 = vector.broadcast %c7_i32_335 : i32 to vector<4x32xi32>
    %677 = vector.broadcast %c0_i32_336 : i32 to vector<4x32xi32>
    %678 = arith.select %5, %676, %677 : vector<4x32xi1>, vector<4x32xi32>
    %679 = arith.cmpi slt, %678, %2 : vector<4x32xi32>
    %cst_337 = arith.constant 0.000000e+00 : f32
    %680 = vector.broadcast %cst_337 : f32 to vector<4x32xf32>
    %681 = arith.select %679, %675, %680 : vector<4x32xi1>, vector<4x32xf32>
    %682 = vector.extract_strided_slice %681 {offsets = [0, 0], sizes = [4, 16], strides = [1, 1]} : vector<4x32xf32> to vector<4x16xf32>
    %c7_338 = arith.constant 7 : index
    %c0_339 = arith.constant 0 : index
    %c0_340 = arith.constant 0 : index
    %683 = vector.load %arg7[%c7_338, %c0_339, %c0_340] : memref<8x4x32xf32, #tpu.memory_space<vmem>>, vector<1x4x16xf32>
    %684 = vector.shape_cast %683 : vector<1x4x16xf32> to vector<4x16xf32>
    %685 = vector.shape_cast %682 : vector<4x16xf32> to vector<1x4x16xf32>
    tpu.vector_store %arg7[%c7_338, %c0_339, %c0_340], %685 {strides = array<i32>} : memref<8x4x32xf32, #tpu.memory_space<vmem>>, vector<1x4x16xf32>,
    %686 = vector.extract_strided_slice %681 {offsets = [0, 16], sizes = [4, 16], strides = [1, 1]} : vector<4x32xf32> to vector<4x16xf32>
    %c0_341 = arith.constant 0 : index
    %c0_342 = arith.constant 0 : index
    %c16_343 = arith.constant 16 : index
    %687 = vector.load %arg7[%c0_341, %c0_342, %c16_343] : memref<8x4x32xf32, #tpu.memory_space<vmem>>, vector<1x4x16xf32>
    %688 = vector.shape_cast %687 : vector<1x4x16xf32> to vector<4x16xf32>
    %689 = vector.shape_cast %686 : vector<4x16xf32> to vector<1x4x16xf32>
    tpu.vector_store %arg7[%c0_341, %c0_342, %c16_343], %689 {strides = array<i32>} : memref<8x4x32xf32, #tpu.memory_space<vmem>>, vector<1x4x16xf32>,
    %690 = arith.select %679, %675, %646 : vector<4x32xi1>, vector<4x32xf32>
    %691 = arith.select %679, %673, %647 : vector<4x32xi1>, vector<4x32xf32>
    %692 = vector.extract_strided_slice %690 {offsets = [0, 16], sizes = [4, 16], strides = [1, 1]} : vector<4x32xf32> to vector<4x16xf32>
    %c0_344 = arith.constant 0 : index
    %c0_345 = arith.constant 0 : index
    %693 = vector.load %arg8[%c0_344, %c0_345] : memref<4x32xf32, #tpu.memory_space<vmem>>, vector<4x16xf32>
    tpu.vector_store %arg8[%c0_344, %c0_345], %692 {strides = array<i32>} : memref<4x32xf32, #tpu.memory_space<vmem>>, vector<4x16xf32>,
    %694 = vector.extract_strided_slice %690 {offsets = [0, 0], sizes = [4, 16], strides = [1, 1]} : vector<4x32xf32> to vector<4x16xf32>
    %c0_346 = arith.constant 0 : index
    %c16_347 = arith.constant 16 : index
    %695 = vector.load %arg8[%c0_346, %c16_347] : memref<4x32xf32, #tpu.memory_space<vmem>>, vector<4x16xf32>
    tpu.vector_store %arg8[%c0_346, %c16_347], %694 {strides = array<i32>} : memref<4x32xf32, #tpu.memory_space<vmem>>, vector<4x16xf32>,
    %696 = vector.extract_strided_slice %691 {offsets = [0, 16], sizes = [4, 16], strides = [1, 1]} : vector<4x32xf32> to vector<4x16xf32>
    %c0_348 = arith.constant 0 : index
    %c0_349 = arith.constant 0 : index
    %697 = vector.load %arg9[%c0_348, %c0_349] : memref<4x32xf32, #tpu.memory_space<vmem>>, vector<4x16xf32>
    tpu.vector_store %arg9[%c0_348, %c0_349], %696 {strides = array<i32>} : memref<4x32xf32, #tpu.memory_space<vmem>>, vector<4x16xf32>,
    %698 = vector.extract_strided_slice %691 {offsets = [0, 0], sizes = [4, 16], strides = [1, 1]} : vector<4x32xf32> to vector<4x16xf32>
    %c0_350 = arith.constant 0 : index
    %c16_351 = arith.constant 16 : index
    %699 = vector.load %arg9[%c0_350, %c16_351] : memref<4x32xf32, #tpu.memory_space<vmem>>, vector<4x16xf32>
    tpu.vector_store %arg9[%c0_350, %c16_351], %698 {strides = array<i32>} : memref<4x32xf32, #tpu.memory_space<vmem>>, vector<4x16xf32>,
    return
  }
  func.func @transform_0(%arg0: i32) -> (i32, i32) {
    %c0_i32 = arith.constant 0 : i32
    %c0_i32_0 = arith.constant 0 : i32
    %c0_i32_1 = arith.constant 0 : i32
    return %c0_i32, %c0_i32_0 : i32, i32
  }
  func.func @transform_1(%arg0: i32) -> (i32, i32, i32) {
    %c0_i32 = arith.constant 0 : i32
    %c0_i32_0 = arith.constant 0 : i32
    %c0_i32_1 = arith.constant 0 : i32
    %c0_i32_2 = arith.constant 0 : i32
    return %c0_i32, %c0_i32_0, %c0_i32_1 : i32, i32, i32
  }
  func.func @transform_2(%arg0: i32) -> (i32, i32) {
    %c0_i32 = arith.constant 0 : i32
    %c0_i32_0 = arith.constant 0 : i32
    %c0_i32_1 = arith.constant 0 : i32
    return %c0_i32, %c0_i32_0 : i32, i32
  }
  func.func @transform_3(%arg0: i32) -> (i32, i32) {
    %c0_i32 = arith.constant 0 : i32
    %c0_i32_0 = arith.constant 0 : i32
    %c0_i32_1 = arith.constant 0 : i32
    return %c0_i32, %c0_i32_0 : i32, i32
  }
  func.func @transform_4(%arg0: i32) -> (i32, i32) {
    %c0_i32 = arith.constant 0 : i32
    %c0_i32_0 = arith.constant 0 : i32
    %c0_i32_1 = arith.constant 0 : i32
    return %c0_i32, %c0_i32_0 : i32, i32
  }
  func.func @transform_5(%arg0: i32) -> (i32, i32) {
    %c0_i32 = arith.constant 0 : i32
    %c0_i32_0 = arith.constant 0 : i32
    %c0_i32_1 = arith.constant 0 : i32
    return %c0_i32, %c0_i32_0 : i32, i32
  }
  func.func @transform_6(%arg0: i32) -> (i32, i32, i32) {
    %c0_i32 = arith.constant 0 : i32
    %c0_i32_0 = arith.constant 0 : i32
    %c0_i32_1 = arith.constant 0 : i32
    %c0_i32_2 = arith.constant 0 : i32
    return %c0_i32, %c0_i32_0, %c0_i32_1 : i32, i32, i32
  }
  func.func @transform_7(%arg0: i32) -> (i32, i32) {
    %c0_i32 = arith.constant 0 : i32
    %c0_i32_0 = arith.constant 0 : i32
    %c0_i32_1 = arith.constant 0 : i32
    return %c0_i32, %c0_i32_0 : i32, i32
  }
  func.func @transform_8(%arg0: i32) -> (i32, i32) {
    %c0_i32 = arith.constant 0 : i32
    %c0_i32_0 = arith.constant 0 : i32
    %c0_i32_1 = arith.constant 0 : i32
    return %c0_i32, %c0_i32_0 : i32, i32
  }
}

</mosaic_0001>

<llo_original>
// kernel: tpu_custom_call.1
$region0: #{tpu_custom_call.1}
  #allocation0 [shape = 'u32[]', space=smem, size = 0x4, offset = 0x4, fixed_abs, tag = 'smem constant byte address 0x4 - core index']
  #allocation1 [shape = 'u32[144,128]{1,0:T(1,128)}', space=vmem, size = 0x12000, scoped, tag = 'internal scratch']
  #allocation2 [shape = 'f32[8,4,16]{2,1,0:T(4,128)}', space=vmem, size = 0x4000, scoped, tag = 'scratch operand']
  #allocation3 [shape = 'f32[8,4,16]{2,1,0:T(4,128)}', space=vmem, size = 0x4000, scoped, tag = 'scratch operand']
  %s0 = inlined_call_operand.vmem [shape: s32[4,1], index: 0, kind: input, shape index: {}]
  %s1 = inlined_call_operand.hbm [shape: f32[8,4,8], index: 1, kind: input, shape index: {}]
  %s2 = inlined_call_operand.hbm [shape: f32[48,128], index: 2, kind: input, shape index: {}]
  %s3 = inlined_call_operand.vmem [shape: f32[1,128], index: 3, kind: input, shape index: {}]
  %s4 = inlined_call_operand.hbm [shape: f32[96,128], index: 4, kind: input, shape index: {}]
  %s5 = inlined_call_operand.vmem [shape: f32[1,128], index: 5, kind: input, shape index: {}]
  %s6 = inlined_call_operand.hbm [shape: f32[8,4,32], index: 6, kind: output, shape index: {0}]
  %s7 = inlined_call_operand.hbm [shape: f32[4,32], index: 7, kind: output, shape index: {1}]
  %s8 = inlined_call_operand.hbm [shape: f32[4,32], index: 8, kind: output, shape index: {2}]
  %9 = xla_tuple %s6, %s7, %s8
  %s10 = sld [smem:[#allocation0]]
  $region62: #{tpu_custom_call.1} parent=0
    _
  %s12 = ssub.s32 1, %s10
  %s13 = scalar_select 0, %s12, %s10
  $region1: #{tpu_custom_call.1} parent=0
    #allocation4 [shape = 'u8[16384]{0}', space=vmem, size = 0x4000, scoped, tag = 'input window, operand 1, single buffered']
    #allocation5 [shape = 's32[1]{0}', space=sflag, size = 0x4, scoped, tag = 'scoped memory for tpu_custom_call.1']
    #allocation6 [shape = 's32[1]{0}', space=sflag, size = 0x4, scoped, tag = 'scoped memory for tpu_custom_call.1']
    #allocation7 [shape = 'u8[24576]{0}', space=vmem, size = 0x6000, scoped, tag = 'input window, operand 2, single buffered']
    #allocation8 [shape = 's32[1]{0}', space=sflag, size = 0x4, scoped, tag = 'scoped memory for tpu_custom_call.1']
    #allocation9 [shape = 'u8[49152]{0}', space=vmem, size = 0xc000, scoped, tag = 'input window, operand 4, single buffered']
    #allocation10 [shape = 'u8[16384]{0}', space=vmem, size = 0x4000, scoped, tag = 'output window, operand 0, single buffered']
    #allocation11 [shape = 'u8[2048]{0}', space=vmem, size = 0x800, scoped, tag = 'output window, operand 1, single buffered']
    #allocation12 [shape = 's32[1]{0}', space=sflag, size = 0x4, scoped, tag = 'scoped memory for tpu_custom_call.1']
    #allocation13 [shape = 'u8[2048]{0}', space=vmem, size = 0x800, scoped, tag = 'output window, operand 2, single buffered']
    %14 = vsyncpa [#allocation5], 0
    %15 = vsyncpa [#allocation8], 0
    %16 = vsyncpa [#allocation6], 0
    %17 = vsyncpa [#allocation12], 0
    // Predicated region
    $region2: #{tpu_custom_call.1} parent=1 // pred_check
      _
    $region3: #{tpu_custom_call.1} parent=1 // pred_check_branch
      %19 = sbr.rel (0) target = $region5
    $region4: #{tpu_custom_call.1} parent=1 // pred_region
      _
    $region5: #{tpu_custom_call.1} parent=1 // pred_fallthru
      _
    // Predicated region
    $region6: #{tpu_custom_call.1} parent=1 // pred_check
      _
    $region7: #{tpu_custom_call.1} parent=1 // pred_check_branch
      %21 = sbr.rel (0) target = $region9
    $region8: #{tpu_custom_call.1} parent=1 // pred_region
      %s23 = ssub.s32 512, 512
      %24 = vsyncadd [#allocation5], %s23
      %s25 = sshll.u32 [#allocation4], 4
      %s26 = int_to_ptr.vmem [resolvable:$true] %s25
      %31 = dma.hbm_to_vmem [thread:$0]  %s1, 512, %s26, [#allocation5], 64, 64, 4
    $region9: #{tpu_custom_call.1} parent=1 // pred_fallthru
      _
    // Predicated region
    $region10: #{tpu_custom_call.1} parent=1 // pred_check
      _
    $region11: #{tpu_custom_call.1} parent=1 // pred_check_branch
      %33 = sbr.rel (0) target = $region13
    $region12: #{tpu_custom_call.1} parent=1 // pred_region
      %s35 = ssub.s32 768, 768
      %36 = vsyncadd [#allocation8], %s35
      %s37 = sshll.u32 [#allocation7], 4
      %s38 = int_to_ptr.vmem [resolvable:$true] %s37
      %43 = dma.hbm_to_vmem [thread:$0]  %s2, 768, %s38, [#allocation8], 128, 128, 8
    $region13: #{tpu_custom_call.1} parent=1 // pred_fallthru
      _
    // Predicated region
    $region14: #{tpu_custom_call.1} parent=1 // pred_check
      _
    $region15: #{tpu_custom_call.1} parent=1 // pred_check_branch
      %45 = sbr.rel (0) target = $region17
    $region16: #{tpu_custom_call.1} parent=1 // pred_region
      _
    $region17: #{tpu_custom_call.1} parent=1 // pred_fallthru
      _
    // Predicated region
    $region18: #{tpu_custom_call.1} parent=1 // pred_check
      _
    $region19: #{tpu_custom_call.1} parent=1 // pred_check_branch
      %47 = sbr.rel (0) target = $region21
    $region20: #{tpu_custom_call.1} parent=1 // pred_region
      %s49 = ssub.s32 1536, 1536
      %50 = vsyncadd [#allocation8], %s49
      %s51 = sshll.u32 [#allocation9], 4
      %s52 = int_to_ptr.vmem [resolvable:$true] %s51
      %57 = dma.hbm_to_vmem [thread:$0]  %s4, 1536, %s52, [#allocation8], 128, 128, 8
    $region21: #{tpu_custom_call.1} parent=1 // pred_fallthru
      _
    // Predicated region
    $region22: #{tpu_custom_call.1} parent=1 // pred_check
      _
    $region23: #{tpu_custom_call.1} parent=1 // pred_check_branch
      %59 = sbr.rel (0) target = $region25
    $region24: #{tpu_custom_call.1} parent=1 // pred_region
      _
    $region25: #{tpu_custom_call.1} parent=1 // pred_fallthru
      _
    // Predicated region
    $region26: #{tpu_custom_call.1} parent=1 // pred_check
      _
    $region27: #{tpu_custom_call.1} parent=1 // pred_check_branch
      %61 = sbr.rel (0) target = $region29
    $region28: #{tpu_custom_call.1} parent=1 // pred_region
      %62 = dma.done [#allocation5], 512
    $region29: #{tpu_custom_call.1} parent=1 // pred_fallthru
      _
    // Predicated region
    $region30: #{tpu_custom_call.1} parent=1 // pred_check
      _
    $region31: #{tpu_custom_call.1} parent=1 // pred_check_branch
      %64 = sbr.rel (0) target = $region33
    $region32: #{tpu_custom_call.1} parent=1 // pred_region
      %65 = dma.done [#allocation8], 768
    $region33: #{tpu_custom_call.1} parent=1 // pred_fallthru
      _
    // Predicated region
    $region34: #{tpu_custom_call.1} parent=1 // pred_check
      _
    $region35: #{tpu_custom_call.1} parent=1 // pred_check_branch
      %67 = sbr.rel (0) target = $region37
    $region36: #{tpu_custom_call.1} parent=1 // pred_region
      %68 = dma.done [#allocation8], 1536
    $region37: #{tpu_custom_call.1} parent=1 // pred_fallthru
      _
    %v69 = vld [vmem:[%s0] sm:$0xf]
    %70 = vset.pattern.permute.xlu0 0
    %71 = vperm.xlu0 %70, %v69
    %v72 = vpop.permute.xlu0 %71
    %v73 = vlaneseq
    %v74 = vand.u32 %v73, 127
    %vm75 = vcmp.lt.s32.totalorder %v74, 16
    %vm76 = vcmp.ge.s32.totalorder %v74, 64
    %vm77 = vcmp.lt.s32.totalorder %v74, 96
    %vm78 = vmand %vm76, %vm77
    %v79 = vld [vmem:[%s3] sm:$0x1]
    %v81 = vlaneseq
    %v82 = vshrl.u32 %v81, 7
    %v83 = vsub.s32 0, %v82
    %v84 = vrot.slane %v79, %v83
    %v86 = vld [vmem:[#allocation4] sm:$0xf]
    %s87 = scalar_lea.vmem [#allocation4], 28
    %v88 = vld [vmem:[%s87] sm:$0xf]
    %90 = vrot.lane.b32.xlu0 %v88, 8
    %v91 = vpop.permute.xlu0 %90
    %vm93 = vcmask 64512
    %v94 = vsel %vm93, %v86, %v91
    %vm95 = vcmask 130048
    %v96 = vsel %vm95, %v94, 0.0
    %v97 = vld [vmem:[#allocation7] sm:$0xff]
    %v98 = vld [vmem:[#allocation7 + $0x8] sm:$0xff]
    %v99 = vld [vmem:[#allocation7 + $0x10] sm:$0xff]
    %v100 = vld [vmem:[#allocation7 + $0x18] sm:$0xff]
    %v101 = vld [vmem:[#allocation7 + $0x20] sm:$0xff]
    %v102 = vld [vmem:[#allocation7 + $0x28] sm:$0xff]
    %vm103 = vcmask 392192
    %v105 = vsel %vm103, %v96, 0
    %107 = vmatprep.subr.mxu0 0.0
    %108 = vmatpush1.msra.mxu0 %v97
    %109 = vmatprep.subr.mxu0 0.0
    %110 = vmatpush1.msra.mxu0 %v98
    %111 = vmatprep.subr.mxu0 0.0
    %112 = vmatpush1.msra.mxu0 %v99
    %113 = vmatprep.subr.mxu0 0.0
    %114 = vmatpush1.msra.mxu0 %v100
    %115 = vmatprep.subr.mxu0 0.0
    %116 = vmatpush1.msra.mxu0 %v101
    %117 = vmatprep.subr.mxu0 0.0
    %118 = vmatpush1.msra.mxu0 %v102
    %119 = vmatprep.subr.mxu0 0.0
    %120 = vmatpush1.msra.mxu0 0.0
    %121 = vmatprep.subr.mxu0 0.0
    %122 = vmatpush1.msra.mxu0 0.0
    %123 = vmatprep.subr.mxu0 0.0
    %124 = vmatpush1.msra.mxu0 0.0
    %125 = vmatprep.subr.mxu0 0.0
    %126 = vmatpush1.msra.mxu0 0.0
    %127 = vmatprep.subr.mxu0 0.0
    %128 = vmatpush1.msra.mxu0 0.0
    %129 = vmatprep.subr.mxu0 0.0
    %130 = vmatpush1.msra.mxu0 0.0
    %131 = vmatprep.subr.mxu0 0.0
    %132 = vmatpush1.msra.mxu0 0.0
    %133 = vmatprep.subr.mxu0 0.0
    %134 = vmatpush1.msra.mxu0 0.0
    %135 = vmatprep.subr.mxu0 0.0
    %136 = vmatpush1.msra.mxu0 0.0
    %137 = vmatprep.subr.mxu0 0.0
    %138 = vmatpush1.msra.mxu0 0.0
    %139 = vmatprep.subr.mxu0 0.0
    %140 = vmatpush1.msra.mxu0 0.0
    %141 = vmatprep.subr.mxu0 0.0
    %142 = vmatpush1.msra.mxu0 0.0
    %143 = vmatprep.subr.mxu0 0.0
    %144 = vmatpush1.msra.mxu0 0.0
    %145 = vmatprep.subr.mxu0 0.0
    %146 = vmatpush1.msra.mxu0 0.0
    %147 = vmatprep.subr.mxu0 0.0
    %148 = vmatpush1.msra.mxu0 0.0
    %149 = vmatprep.subr.mxu0 0.0
    %150 = vmatpush1.msra.mxu0 0.0
    %151 = vmatprep.subr.mxu0 0.0
    %152 = vmatpush1.msra.mxu0 0.0
    %153 = vmatprep.subr.mxu0 0.0
    %154 = vmatpush1.msra.mxu0 0.0
    %155 = vmatprep.subr.mxu0 0.0
    %156 = vmatpush1.msra.mxu0 0.0
    %157 = vmatprep.subr.mxu0 0.0
    %158 = vmatpush1.msra.mxu0 0.0
    %159 = vmatprep.subr.mxu0 0.0
    %160 = vmatpush1.msra.mxu0 0.0
    %161 = vmatprep.subr.mxu0 0.0
    %162 = vmatpush1.msra.mxu0 0.0
    %163 = vmatprep.subr.mxu0 0.0
    %164 = vmatpush1.msra.mxu0 0.0
    %165 = vmatprep.subr.mxu0 0.0
    %166 = vmatpush1.msra.mxu0 0.0
    %167 = vmatprep.subr.mxu0 0.0
    %168 = vmatpush1.msra.mxu0 0.0
    %169 = vmatprep.subr.mxu0 0.0
    %170 = vmatpush1.msra.mxu0 0.0
    %171 = vmatprep.mubr.f32.mxu0 0.0
    %172 = vmatmul.mubr.f32.gmra.mrb[0].mxu0 %v105
    %v173 = vpop.f32.mrb[0].mxu0
    %v174 = vadd.f32 %v84, %v173
    %v175 = vpop.f32.mrb[0].mxu0
    %176 = vdwg.mxu0
    %v177 = vtanh.pop %v174
    %v178 = vxor.u32 %v174, 2147483648
    %v179 = vmul.f32 %v178, 1.442695
    %v180 = vpow.pop %v179
    %v181 = vadd.f32 %v180, 1.0
    %v182 = vrcp.pop %v181
    %v183 = vmul.f32 1.0, %v182
    %v184 = vsel %vm78, %v177, %v183
    %v185 = vmul.f32 %v184, 0.0
    %187 = vrot.lane.b32.xlu0 %v184, 64
    %v188 = vpop.permute.xlu0 %187
    %v190 = vmul.f32 %v184, %v188
    %192 = vrot.lane.b32.xlu0 %v190, 32
    %v193 = vpop.permute.xlu0 %192
    %v195 = vadd.f32 %v185, %v193
    %v196 = vtanh.pop %v195
    %198 = vrot.lane.b32.xlu0 %v196, 64
    %v199 = vpop.permute.xlu0 %198
    %v201 = vmul.f32 %v184, %v199
    %v202 = vsel %vm75, 0, 7
    %vm203 = vcmp.lt.s32.totalorder %v202, %v72
    %205 = vrot.lane.b32.xlu0 %v201, 32
    %v206 = vpop.permute.xlu0 %205
    %v208 = vsel %vm203, %v206, 0.0
    %vm209 = vcmask 125952
    %210 = vst.msk [vmem:[#allocation2] sm:$0xf] %vm209, %v208
    %212 = vrot.lane.b32.xlu0 %v208, 112
    %v213 = vpop.permute.xlu0 %212
    %s215 = scalar_lea.vmem [#allocation3], 28
    %216 = vst.msk [vmem:[%s215] sm:$0xf] %vm209, %v213
    %218 = vrot.lane.b32.xlu0 %v195, 96
    %v219 = vpop.permute.xlu0 %218
    %v221 = vsel %vm203, %v219, 0.0
    %s222 = scalar_lea.vmem [#allocation4], 4
    %v223 = vld [vmem:[%s222] sm:$0xf]
    %s224 = scalar_lea.vmem [#allocation4], 24
    %v225 = vld [vmem:[%s224] sm:$0xf]
    %227 = vrot.lane.b32.xlu0 %v225, 8
    %v228 = vpop.permute.xlu0 %227
    %230 = vrot.lane.b32.xlu0 %v208, 16
    %v231 = vpop.permute.xlu0 %230
    %v233 = vsel %vm93, %v223, %v228
    %v234 = vsel %vm95, %v233, %v231
    %v235 = vld [vmem:[#allocation7] sm:$0xff]
    %v236 = vld [vmem:[#allocation7 + $0x8] sm:$0xff]
    %v237 = vld [vmem:[#allocation7 + $0x10] sm:$0xff]
    %v238 = vld [vmem:[#allocation7 + $0x18] sm:$0xff]
    %v239 = vld [vmem:[#allocation7 + $0x20] sm:$0xff]
    %v240 = vld [vmem:[#allocation7 + $0x28] sm:$0xff]
    %v242 = vsel %vm103, %v234, 0
    %244 = vmatprep.subr.mxu0 0.0
    %245 = vmatpush1.msra.mxu0 %v235
    %246 = vmatprep.subr.mxu0 0.0
    %247 = vmatpush1.msra.mxu0 %v236
    %248 = vmatprep.subr.mxu0 0.0
    %249 = vmatpush1.msra.mxu0 %v237
    %250 = vmatprep.subr.mxu0 0.0
    %251 = vmatpush1.msra.mxu0 %v238
    %252 = vmatprep.subr.mxu0 0.0
    %253 = vmatpush1.msra.mxu0 %v239
    %254 = vmatprep.subr.mxu0 0.0
    %255 = vmatpush1.msra.mxu0 %v240
    %256 = vmatprep.subr.mxu0 0.0
    %257 = vmatpush1.msra.mxu0 0.0
    %258 = vmatprep.subr.mxu0 0.0
    %259 = vmatpush1.msra.mxu0 0.0
    %260 = vmatprep.subr.mxu0 0.0
    %261 = vmatpush1.msra.mxu0 0.0
    %262 = vmatprep.subr.mxu0 0.0
    %263 = vmatpush1.msra.mxu0 0.0
    %264 = vmatprep.subr.mxu0 0.0
    %265 = vmatpush1.msra.mxu0 0.0
    %266 = vmatprep.subr.mxu0 0.0
    %267 = vmatpush1.msra.mxu0 0.0
    %268 = vmatprep.subr.mxu0 0.0
    %269 = vmatpush1.msra.mxu0 0.0
    %270 = vmatprep.subr.mxu0 0.0
    %271 = vmatpush1.msra.mxu0 0.0
    %272 = vmatprep.subr.mxu0 0.0
    %273 = vmatpush1.msra.mxu0 0.0
    %274 = vmatprep.subr.mxu0 0.0
    %275 = vmatpush1.msra.mxu0 0.0
    %276 = vmatprep.subr.mxu0 0.0
    %277 = vmatpush1.msra.mxu0 0.0
    %278 = vmatprep.subr.mxu0 0.0
    %279 = vmatpush1.msra.mxu0 0.0
    %280 = vmatprep.subr.mxu0 0.0
    %281 = vmatpush1.msra.mxu0 0.0
    %282 = vmatprep.subr.mxu0 0.0
    %283 = vmatpush1.msra.mxu0 0.0
    %284 = vmatprep.subr.mxu0 0.0
    %285 = vmatpush1.msra.mxu0 0.0
    %286 = vmatprep.subr.mxu0 0.0
    %287 = vmatpush1.msra.mxu0 0.0
    %288 = vmatprep.subr.mxu0 0.0
    %289 = vmatpush1.msra.mxu0 0.0
    %290 = vmatprep.subr.mxu0 0.0
    %291 = vmatpush1.msra.mxu0 0.0
    %292 = vmatprep.subr.mxu0 0.0
    %293 = vmatpush1.msra.mxu0 0.0
    %294 = vmatprep.subr.mxu0 0.0
    %295 = vmatpush1.msra.mxu0 0.0
    %296 = vmatprep.subr.mxu0 0.0
    %297 = vmatpush1.msra.mxu0 0.0
    %298 = vmatprep.subr.mxu0 0.0
    %299 = vmatpush1.msra.mxu0 0.0
    %300 = vmatprep.subr.mxu0 0.0
    %301 = vmatpush1.msra.mxu0 0.0
    %302 = vmatprep.subr.mxu0 0.0
    %303 = vmatpush1.msra.mxu0 0.0
    %304 = vmatprep.subr.mxu0 0.0
    %305 = vmatpush1.msra.mxu0 0.0
    %306 = vmatprep.subr.mxu0 0.0
    %307 = vmatpush1.msra.mxu0 0.0
    %308 = vmatprep.mubr.f32.mxu0 0.0
    %309 = vmatmul.mubr.f32.gmra.mrb[0].mxu0 %v242
    %v310 = vpop.f32.mrb[0].mxu0
    %v311 = vadd.f32 %v84, %v310
    %v312 = vpop.f32.mrb[0].mxu0
    %313 = vdwg.mxu0
    %v314 = vtanh.pop %v311
    %v315 = vxor.u32 %v311, 2147483648
    %v316 = vmul.f32 %v315, 1.442695
    %v317 = vpow.pop %v316
    %v318 = vadd.f32 %v317, 1.0
    %v319 = vrcp.pop %v318
    %v320 = vmul.f32 1.0, %v319
    %v321 = vsel %vm78, %v314, %v320
    %323 = vrot.lane.b32.xlu0 %v221, 32
    %v324 = vpop.permute.xlu0 %323
    %v326 = vmul.f32 %v321, %v324
    %328 = vrot.lane.b32.xlu0 %v321, 64
    %v329 = vpop.permute.xlu0 %328
    %v331 = vmul.f32 %v321, %v329
    %333 = vrot.lane.b32.xlu0 %v331, 32
    %v334 = vpop.permute.xlu0 %333
    %v336 = vadd.f32 %v326, %v334
    %v337 = vtanh.pop %v336
    %339 = vrot.lane.b32.xlu0 %v337, 64
    %v340 = vpop.permute.xlu0 %339
    %v342 = vmul.f32 %v321, %v340
    %v343 = vsel %vm75, 1, 6
    %vm344 = vcmp.lt.s32.totalorder %v343, %v72
    %346 = vrot.lane.b32.xlu0 %v342, 32
    %v347 = vpop.permute.xlu0 %346
    %v349 = vsel %vm344, %v347, 0.0
    %s350 = scalar_lea.vmem [#allocation2], 4
    %351 = vst.msk [vmem:[%s350] sm:$0xf] %vm209, %v349
    %353 = vrot.lane.b32.xlu0 %v349, 112
    %v354 = vpop.permute.xlu0 %353
    %s356 = scalar_lea.vmem [#allocation3], 24
    %357 = vst.msk [vmem:[%s356] sm:$0xf] %vm209, %v354
    %v358 = vsel %vm344, %v347, %v208
    %360 = vrot.lane.b32.xlu0 %v336, 96
    %v361 = vpop.permute.xlu0 %360
    %v363 = vsel %vm344, %v361, %v221
    %s364 = scalar_lea.vmem [#allocation4], 8
    %v365 = vld [vmem:[%s364] sm:$0xf]
    %s366 = scalar_lea.vmem [#allocation4], 20
    %v367 = vld [vmem:[%s366] sm:$0xf]
    %369 = vrot.lane.b32.xlu0 %v367, 8
    %v370 = vpop.permute.xlu0 %369
    %373 = vrot.lane.b32.xlu0 %v358, 16
    %v374 = vpop.permute.xlu0 %373
    %v376 = vsel %vm93, %v365, %v370
    %v377 = vsel %vm95, %v376, %v374
    %v378 = vld [vmem:[#allocation7] sm:$0xff]
    %v379 = vld [vmem:[#allocation7 + $0x8] sm:$0xff]
    %v380 = vld [vmem:[#allocation7 + $0x10] sm:$0xff]
    %v381 = vld [vmem:[#allocation7 + $0x18] sm:$0xff]
    %v382 = vld [vmem:[#allocation7 + $0x20] sm:$0xff]
    %v383 = vld [vmem:[#allocation7 + $0x28] sm:$0xff]
    %v385 = vsel %vm103, %v377, 0
    %387 = vmatprep.subr.mxu0 0.0
    %388 = vmatpush1.msra.mxu0 %v378
    %389 = vmatprep.subr.mxu0 0.0
    %390 = vmatpush1.msra.mxu0 %v379
    %391 = vmatprep.subr.mxu0 0.0
    %392 = vmatpush1.msra.mxu0 %v380
    %393 = vmatprep.subr.mxu0 0.0
    %394 = vmatpush1.msra.mxu0 %v381
    %395 = vmatprep.subr.mxu0 0.0
    %396 = vmatpush1.msra.mxu0 %v382
    %397 = vmatprep.subr.mxu0 0.0
    %398 = vmatpush1.msra.mxu0 %v383
    %399 = vmatprep.subr.mxu0 0.0
    %400 = vmatpush1.msra.mxu0 0.0
    %401 = vmatprep.subr.mxu0 0.0
    %402 = vmatpush1.msra.mxu0 0.0
    %403 = vmatprep.subr.mxu0 0.0
    %404 = vmatpush1.msra.mxu0 0.0
    %405 = vmatprep.subr.mxu0 0.0
    %406 = vmatpush1.msra.mxu0 0.0
    %407 = vmatprep.subr.mxu0 0.0
    %408 = vmatpush1.msra.mxu0 0.0
    %409 = vmatprep.subr.mxu0 0.0
    %410 = vmatpush1.msra.mxu0 0.0
    %411 = vmatprep.subr.mxu0 0.0
    %412 = vmatpush1.msra.mxu0 0.0
    %413 = vmatprep.subr.mxu0 0.0
    %414 = vmatpush1.msra.mxu0 0.0
    %415 = vmatprep.subr.mxu0 0.0
    %416 = vmatpush1.msra.mxu0 0.0
    %417 = vmatprep.subr.mxu0 0.0
    %418 = vmatpush1.msra.mxu0 0.0
    %419 = vmatprep.subr.mxu0 0.0
    %420 = vmatpush1.msra.mxu0 0.0
    %421 = vmatprep.subr.mxu0 0.0
    %422 = vmatpush1.msra.mxu0 0.0
    %423 = vmatprep.subr.mxu0 0.0
    %424 = vmatpush1.msra.mxu0 0.0
    %425 = vmatprep.subr.mxu0 0.0
    %426 = vmatpush1.msra.mxu0 0.0
    %427 = vmatprep.subr.mxu0 0.0
    %428 = vmatpush1.msra.mxu0 0.0
    %429 = vmatprep.subr.mxu0 0.0
    %430 = vmatpush1.msra.mxu0 0.0
    %431 = vmatprep.subr.mxu0 0.0
    %432 = vmatpush1.msra.mxu0 0.0
    %433 = vmatprep.subr.mxu0 0.0
    %434 = vmatpush1.msra.mxu0 0.0
    %435 = vmatprep.subr.mxu0 0.0
    %436 = vmatpush1.msra.mxu0 0.0
    %437 = vmatprep.subr.mxu0 0.0
    %438 = vmatpush1.msra.mxu0 0.0
    %439 = vmatprep.subr.mxu0 0.0
    %440 = vmatpush1.msra.mxu0 0.0
    %441 = vmatprep.subr.mxu0 0.0
    %442 = vmatpush1.msra.mxu0 0.0
    %443 = vmatprep.subr.mxu0 0.0
    %444 = vmatpush1.msra.mxu0 0.0
    %445 = vmatprep.subr.mxu0 0.0
    %446 = vmatpush1.msra.mxu0 0.0
    %447 = vmatprep.subr.mxu0 0.0
    %448 = vmatpush1.msra.mxu0 0.0
    %449 = vmatprep.subr.mxu0 0.0
    %450 = vmatpush1.msra.mxu0 0.0
    %451 = vmatprep.mubr.f32.mxu0 0.0
    %452 = vmatmul.mubr.f32.gmra.mrb[0].mxu0 %v385
    %v453 = vpop.f32.mrb[0].mxu0
    %v454 = vadd.f32 %v84, %v453
    %v455 = vpop.f32.mrb[0].mxu0
    %456 = vdwg.mxu0
    %v457 = vtanh.pop %v454
    %v458 = vxor.u32 %v454, 2147483648
    %v459 = vmul.f32 %v458, 1.442695
    %v460 = vpow.pop %v459
    %v461 = vadd.f32 %v460, 1.0
    %v462 = vrcp.pop %v461
    %v463 = vmul.f32 1.0, %v462
    %v464 = vsel %vm78, %v457, %v463
    %466 = vrot.lane.b32.xlu0 %v363, 32
    %v467 = vpop.permute.xlu0 %466
    %v469 = vmul.f32 %v464, %v467
    %471 = vrot.lane.b32.xlu0 %v464, 64
    %v472 = vpop.permute.xlu0 %471
    %v474 = vmul.f32 %v464, %v472
    %476 = vrot.lane.b32.xlu0 %v474, 32
    %v477 = vpop.permute.xlu0 %476
    %v479 = vadd.f32 %v469, %v477
    %v480 = vtanh.pop %v479
    %482 = vrot.lane.b32.xlu0 %v480, 64
    %v483 = vpop.permute.xlu0 %482
    %v485 = vmul.f32 %v464, %v483
    %v486 = vsel %vm75, 2, 5
    %vm487 = vcmp.lt.s32.totalorder %v486, %v72
    %489 = vrot.lane.b32.xlu0 %v485, 32
    %v490 = vpop.permute.xlu0 %489
    %v492 = vsel %vm487, %v490, 0.0
    %s493 = scalar_lea.vmem [#allocation2], 8
    %494 = vst.msk [vmem:[%s493] sm:$0xf] %vm209, %v492
    %496 = vrot.lane.b32.xlu0 %v492, 112
    %v497 = vpop.permute.xlu0 %496
    %s499 = scalar_lea.vmem [#allocation3], 20
    %500 = vst.msk [vmem:[%s499] sm:$0xf] %vm209, %v497
    %v501 = vsel %vm487, %v490, %v358
    %503 = vrot.lane.b32.xlu0 %v479, 96
    %v504 = vpop.permute.xlu0 %503
    %v506 = vsel %vm487, %v504, %v363
    %s507 = scalar_lea.vmem [#allocation4], 12
    %v508 = vld [vmem:[%s507] sm:$0xf]
    %s509 = scalar_lea.vmem [#allocation4], 16
    %v510 = vld [vmem:[%s509] sm:$0xf]
    %512 = vrot.lane.b32.xlu0 %v510, 8
    %v513 = vpop.permute.xlu0 %512
    %516 = vrot.lane.b32.xlu0 %v501, 16
    %v517 = vpop.permute.xlu0 %516
    %v519 = vsel %vm93, %v508, %v513
    %v520 = vsel %vm95, %v519, %v517
    %v521 = vld [vmem:[#allocation7] sm:$0xff]
    %v522 = vld [vmem:[#allocation7 + $0x8] sm:$0xff]
    %v523 = vld [vmem:[#allocation7 + $0x10] sm:$0xff]
    %v524 = vld [vmem:[#allocation7 + $0x18] sm:$0xff]
    %v525 = vld [vmem:[#allocation7 + $0x20] sm:$0xff]
    %v526 = vld [vmem:[#allocation7 + $0x28] sm:$0xff]
    %v528 = vsel %vm103, %v520, 0
    %530 = vmatprep.subr.mxu0 0.0
    %531 = vmatpush1.msra.mxu0 %v521
    %532 = vmatprep.subr.mxu0 0.0
    %533 = vmatpush1.msra.mxu0 %v522
    %534 = vmatprep.subr.mxu0 0.0
    %535 = vmatpush1.msra.mxu0 %v523
    %536 = vmatprep.subr.mxu0 0.0
    %537 = vmatpush1.msra.mxu0 %v524
    %538 = vmatprep.subr.mxu0 0.0
    %539 = vmatpush1.msra.mxu0 %v525
    %540 = vmatprep.subr.mxu0 0.0
    %541 = vmatpush1.msra.mxu0 %v526
    %542 = vmatprep.subr.mxu0 0.0
    %543 = vmatpush1.msra.mxu0 0.0
    %544 = vmatprep.subr.mxu0 0.0
    %545 = vmatpush1.msra.mxu0 0.0
    %546 = vmatprep.subr.mxu0 0.0
    %547 = vmatpush1.msra.mxu0 0.0
    %548 = vmatprep.subr.mxu0 0.0
    %549 = vmatpush1.msra.mxu0 0.0
    %550 = vmatprep.subr.mxu0 0.0
    %551 = vmatpush1.msra.mxu0 0.0
    %552 = vmatprep.subr.mxu0 0.0
    %553 = vmatpush1.msra.mxu0 0.0
    %554 = vmatprep.subr.mxu0 0.0
    %555 = vmatpush1.msra.mxu0 0.0
    %556 = vmatprep.subr.mxu0 0.0
    %557 = vmatpush1.msra.mxu0 0.0
    %558 = vmatprep.subr.mxu0 0.0
    %559 = vmatpush1.msra.mxu0 0.0
    %560 = vmatprep.subr.mxu0 0.0
    %561 = vmatpush1.msra.mxu0 0.0
    %562 = vmatprep.subr.mxu0 0.0
    %563 = vmatpush1.msra.mxu0 0.0
    %564 = vmatprep.subr.mxu0 0.0
    %565 = vmatpush1.msra.mxu0 0.0
    %566 = vmatprep.subr.mxu0 0.0
    %567 = vmatpush1.msra.mxu0 0.0
    %568 = vmatprep.subr.mxu0 0.0
    %569 = vmatpush1.msra.mxu0 0.0
    %570 = vmatprep.subr.mxu0 0.0
    %571 = vmatpush1.msra.mxu0 0.0
    %572 = vmatprep.subr.mxu0 0.0
    %573 = vmatpush1.msra.mxu0 0.0
    %574 = vmatprep.subr.mxu0 0.0
    %575 = vmatpush1.msra.mxu0 0.0
    %576 = vmatprep.subr.mxu0 0.0
    %577 = vmatpush1.msra.mxu0 0.0
    %578 = vmatprep.subr.mxu0 0.0
    %579 = vmatpush1.msra.mxu0 0.0
    %580 = vmatprep.subr.mxu0 0.0
    %581 = vmatpush1.msra.mxu0 0.0
    %582 = vmatprep.subr.mxu0 0.0
    %583 = vmatpush1.msra.mxu0 0.0
    %584 = vmatprep.subr.mxu0 0.0
    %585 = vmatpush1.msra.mxu0 0.0
    %586 = vmatprep.subr.mxu0 0.0
    %587 = vmatpush1.msra.mxu0 0.0
    %588 = vmatprep.subr.mxu0 0.0
    %589 = vmatpush1.msra.mxu0 0.0
    %590 = vmatprep.subr.mxu0 0.0
    %591 = vmatpush1.msra.mxu0 0.0
    %592 = vmatprep.subr.mxu0 0.0
    %593 = vmatpush1.msra.mxu0 0.0
    %594 = vmatprep.mubr.f32.mxu0 0.0
    %595 = vmatmul.mubr.f32.gmra.mrb[0].mxu0 %v528
    %v596 = vpop.f32.mrb[0].mxu0
    %v597 = vadd.f32 %v84, %v596
    %v598 = vpop.f32.mrb[0].mxu0
    %599 = vdwg.mxu0
    %v600 = vtanh.pop %v597
    %v601 = vxor.u32 %v597, 2147483648
    %v602 = vmul.f32 %v601, 1.442695
    %v603 = vpow.pop %v602
    %v604 = vadd.f32 %v603, 1.0
    %v605 = vrcp.pop %v604
    %v606 = vmul.f32 1.0, %v605
    %v607 = vsel %vm78, %v600, %v606
    %609 = vrot.lane.b32.xlu0 %v506, 32
    %v610 = vpop.permute.xlu0 %609
    %v612 = vmul.f32 %v607, %v610
    %614 = vrot.lane.b32.xlu0 %v607, 64
    %v615 = vpop.permute.xlu0 %614
    %v617 = vmul.f32 %v607, %v615
    %619 = vrot.lane.b32.xlu0 %v617, 32
    %v620 = vpop.permute.xlu0 %619
    %v622 = vadd.f32 %v612, %v620
    %v623 = vtanh.pop %v622
    %625 = vrot.lane.b32.xlu0 %v623, 64
    %v626 = vpop.permute.xlu0 %625
    %v628 = vmul.f32 %v607, %v626
    %v629 = vsel %vm75, 3, 4
    %vm630 = vcmp.lt.s32.totalorder %v629, %v72
    %632 = vrot.lane.b32.xlu0 %v628, 32
    %v633 = vpop.permute.xlu0 %632
    %v635 = vsel %vm630, %v633, 0.0
    %s636 = scalar_lea.vmem [#allocation2], 12
    %637 = vst.msk [vmem:[%s636] sm:$0xf] %vm209, %v635
    %639 = vrot.lane.b32.xlu0 %v635, 112
    %v640 = vpop.permute.xlu0 %639
    %s642 = scalar_lea.vmem [#allocation3], 16
    %643 = vst.msk [vmem:[%s642] sm:$0xf] %vm209, %v640
    %v644 = vsel %vm630, %v633, %v501
    %646 = vrot.lane.b32.xlu0 %v622, 96
    %v647 = vpop.permute.xlu0 %646
    %v649 = vsel %vm630, %v647, %v506
    %v650 = vld [vmem:[%s509] sm:$0xf]
    %v651 = vld [vmem:[%s507] sm:$0xf]
    %653 = vrot.lane.b32.xlu0 %v651, 8
    %v654 = vpop.permute.xlu0 %653
    %657 = vrot.lane.b32.xlu0 %v644, 16
    %v658 = vpop.permute.xlu0 %657
    %v660 = vsel %vm93, %v650, %v654
    %v661 = vsel %vm95, %v660, %v658
    %v662 = vld [vmem:[#allocation7] sm:$0xff]
    %v663 = vld [vmem:[#allocation7 + $0x8] sm:$0xff]
    %v664 = vld [vmem:[#allocation7 + $0x10] sm:$0xff]
    %v665 = vld [vmem:[#allocation7 + $0x18] sm:$0xff]
    %v666 = vld [vmem:[#allocation7 + $0x20] sm:$0xff]
    %v667 = vld [vmem:[#allocation7 + $0x28] sm:$0xff]
    %v669 = vsel %vm103, %v661, 0
    %671 = vmatprep.subr.mxu0 0.0
    %672 = vmatpush1.msra.mxu0 %v662
    %673 = vmatprep.subr.mxu0 0.0
    %674 = vmatpush1.msra.mxu0 %v663
    %675 = vmatprep.subr.mxu0 0.0
    %676 = vmatpush1.msra.mxu0 %v664
    %677 = vmatprep.subr.mxu0 0.0
    %678 = vmatpush1.msra.mxu0 %v665
    %679 = vmatprep.subr.mxu0 0.0
    %680 = vmatpush1.msra.mxu0 %v666
    %681 = vmatprep.subr.mxu0 0.0
    %682 = vmatpush1.msra.mxu0 %v667
    %683 = vmatprep.subr.mxu0 0.0
    %684 = vmatpush1.msra.mxu0 0.0
    %685 = vmatprep.subr.mxu0 0.0
    %686 = vmatpush1.msra.mxu0 0.0
    %687 = vmatprep.subr.mxu0 0.0
    %688 = vmatpush1.msra.mxu0 0.0
    %689 = vmatprep.subr.mxu0 0.0
    %690 = vmatpush1.msra.mxu0 0.0
    %691 = vmatprep.subr.mxu0 0.0
    %692 = vmatpush1.msra.mxu0 0.0
    %693 = vmatprep.subr.mxu0 0.0
    %694 = vmatpush1.msra.mxu0 0.0
    %695 = vmatprep.subr.mxu0 0.0
    %696 = vmatpush1.msra.mxu0 0.0
    %697 = vmatprep.subr.mxu0 0.0
    %698 = vmatpush1.msra.mxu0 0.0
    %699 = vmatprep.subr.mxu0 0.0
    %700 = vmatpush1.msra.mxu0 0.0
    %701 = vmatprep.subr.mxu0 0.0
    %702 = vmatpush1.msra.mxu0 0.0
    %703 = vmatprep.subr.mxu0 0.0
    %704 = vmatpush1.msra.mxu0 0.0
    %705 = vmatprep.subr.mxu0 0.0
    %706 = vmatpush1.msra.mxu0 0.0
    %707 = vmatprep.subr.mxu0 0.0
    %708 = vmatpush1.msra.mxu0 0.0
    %709 = vmatprep.subr.mxu0 0.0
    %710 = vmatpush1.msra.mxu0 0.0
    %711 = vmatprep.subr.mxu0 0.0
    %712 = vmatpush1.msra.mxu0 0.0
    %713 = vmatprep.subr.mxu0 0.0
    %714 = vmatpush1.msra.mxu0 0.0
    %715 = vmatprep.subr.mxu0 0.0
    %716 = vmatpush1.msra.mxu0 0.0
    %717 = vmatprep.subr.mxu0 0.0
    %718 = vmatpush1.msra.mxu0 0.0
    %719 = vmatprep.subr.mxu0 0.0
    %720 = vmatpush1.msra.mxu0 0.0
    %721 = vmatprep.subr.mxu0 0.0
    %722 = vmatpush1.msra.mxu0 0.0
    %723 = vmatprep.subr.mxu0 0.0
    %724 = vmatpush1.msra.mxu0 0.0
    %725 = vmatprep.subr.mxu0 0.0
    %726 = vmatpush1.msra.mxu0 0.0
    %727 = vmatprep.subr.mxu0 0.0
    %728 = vmatpush1.msra.mxu0 0.0
    %729 = vmatprep.subr.mxu0 0.0
    %730 = vmatpush1.msra.mxu0 0.0
    %731 = vmatprep.subr.mxu0 0.0
    %732 = vmatpush1.msra.mxu0 0.0
    %733 = vmatprep.subr.mxu0 0.0
    %734 = vmatpush1.msra.mxu0 0.0
    %735 = vmatprep.mubr.f32.mxu0 0.0
    %736 = vmatmul.mubr.f32.gmra.mrb[0].mxu0 %v669
    %v737 = vpop.f32.mrb[0].mxu0
    %v738 = vadd.f32 %v84, %v737
    %v739 = vpop.f32.mrb[0].mxu0
    %740 = vdwg.mxu0
    %v741 = vtanh.pop %v738
    %v742 = vxor.u32 %v738, 2147483648
    %v743 = vmul.f32 %v742, 1.442695
    %v744 = vpow.pop %v743
    %v745 = vadd.f32 %v744, 1.0
    %v746 = vrcp.pop %v745
    %v747 = vmul.f32 1.0, %v746
    %v748 = vsel %vm78, %v741, %v747
    %750 = vrot.lane.b32.xlu0 %v649, 32
    %v751 = vpop.permute.xlu0 %750
    %v753 = vmul.f32 %v748, %v751
    %755 = vrot.lane.b32.xlu0 %v748, 64
    %v756 = vpop.permute.xlu0 %755
    %v758 = vmul.f32 %v748, %v756
    %760 = vrot.lane.b32.xlu0 %v758, 32
    %v761 = vpop.permute.xlu0 %760
    %v763 = vadd.f32 %v753, %v761
    %v764 = vtanh.pop %v763
    %766 = vrot.lane.b32.xlu0 %v764, 64
    %v767 = vpop.permute.xlu0 %766
    %v769 = vmul.f32 %v748, %v767
    %v770 = vsel %vm75, 4, 3
    %vm771 = vcmp.lt.s32.totalorder %v770, %v72
    %773 = vrot.lane.b32.xlu0 %v769, 32
    %v774 = vpop.permute.xlu0 %773
    %v776 = vsel %vm771, %v774, 0.0
    %s777 = scalar_lea.vmem [#allocation2], 16
    %778 = vst.msk [vmem:[%s777] sm:$0xf] %vm209, %v776
    %780 = vrot.lane.b32.xlu0 %v776, 112
    %v781 = vpop.permute.xlu0 %780
    %s783 = scalar_lea.vmem [#allocation3], 12
    %784 = vst.msk [vmem:[%s783] sm:$0xf] %vm209, %v781
    %v785 = vsel %vm771, %v774, %v644
    %787 = vrot.lane.b32.xlu0 %v763, 96
    %v788 = vpop.permute.xlu0 %787
    %v790 = vsel %vm771, %v788, %v649
    %v791 = vld [vmem:[%s366] sm:$0xf]
    %v792 = vld [vmem:[%s364] sm:$0xf]
    %794 = vrot.lane.b32.xlu0 %v792, 8
    %v795 = vpop.permute.xlu0 %794
    %798 = vrot.lane.b32.xlu0 %v785, 16
    %v799 = vpop.permute.xlu0 %798
    %v801 = vsel %vm93, %v791, %v795
    %v802 = vsel %vm95, %v801, %v799
    %v803 = vld [vmem:[#allocation7] sm:$0xff]
    %v804 = vld [vmem:[#allocation7 + $0x8] sm:$0xff]
    %v805 = vld [vmem:[#allocation7 + $0x10] sm:$0xff]
    %v806 = vld [vmem:[#allocation7 + $0x18] sm:$0xff]
    %v807 = vld [vmem:[#allocation7 + $0x20] sm:$0xff]
    %v808 = vld [vmem:[#allocation7 + $0x28] sm:$0xff]
    %v810 = vsel %vm103, %v802, 0
    %812 = vmatprep.subr.mxu0 0.0
    %813 = vmatpush1.msra.mxu0 %v803
    %814 = vmatprep.subr.mxu0 0.0
    %815 = vmatpush1.msra.mxu0 %v804
    %816 = vmatprep.subr.mxu0 0.0
    %817 = vmatpush1.msra.mxu0 %v805
    %818 = vmatprep.subr.mxu0 0.0
    %819 = vmatpush1.msra.mxu0 %v806
    %820 = vmatprep.subr.mxu0 0.0
    %821 = vmatpush1.msra.mxu0 %v807
    %822 = vmatprep.subr.mxu0 0.0
    %823 = vmatpush1.msra.mxu0 %v808
    %824 = vmatprep.subr.mxu0 0.0
    %825 = vmatpush1.msra.mxu0 0.0
    %826 = vmatprep.subr.mxu0 0.0
    %827 = vmatpush1.msra.mxu0 0.0
    %828 = vmatprep.subr.mxu0 0.0
    %829 = vmatpush1.msra.mxu0 0.0
    %830 = vmatprep.subr.mxu0 0.0
    %831 = vmatpush1.msra.mxu0 0.0
    %832 = vmatprep.subr.mxu0 0.0
    %833 = vmatpush1.msra.mxu0 0.0
    %834 = vmatprep.subr.mxu0 0.0
    %835 = vmatpush1.msra.mxu0 0.0
    %836 = vmatprep.subr.mxu0 0.0
    %837 = vmatpush1.msra.mxu0 0.0
    %838 = vmatprep.subr.mxu0 0.0
    %839 = vmatpush1.msra.mxu0 0.0
    %840 = vmatprep.subr.mxu0 0.0
    %841 = vmatpush1.msra.mxu0 0.0
    %842 = vmatprep.subr.mxu0 0.0
    %843 = vmatpush1.msra.mxu0 0.0
    %844 = vmatprep.subr.mxu0 0.0
    %845 = vmatpush1.msra.mxu0 0.0
    %846 = vmatprep.subr.mxu0 0.0
    %847 = vmatpush1.msra.mxu0 0.0
    %848 = vmatprep.subr.mxu0 0.0
    %849 = vmatpush1.msra.mxu0 0.0
    %850 = vmatprep.subr.mxu0 0.0
    %851 = vmatpush1.msra.mxu0 0.0
    %852 = vmatprep.subr.mxu0 0.0
    %853 = vmatpush1.msra.mxu0 0.0
    %854 = vmatprep.subr.mxu0 0.0
    %855 = vmatpush1.msra.mxu0 0.0
    %856 = vmatprep.subr.mxu0 0.0
    %857 = vmatpush1.msra.mxu0 0.0
    %858 = vmatprep.subr.mxu0 0.0
    %859 = vmatpush1.msra.mxu0 0.0
    %860 = vmatprep.subr.mxu0 0.0
    %861 = vmatpush1.msra.mxu0 0.0
    %862 = vmatprep.subr.mxu0 0.0
    %863 = vmatpush1.msra.mxu0 0.0
    %864 = vmatprep.subr.mxu0 0.0
    %865 = vmatpush1.msra.mxu0 0.0
    %866 = vmatprep.subr.mxu0 0.0
    %867 = vmatpush1.msra.mxu0 0.0
    %868 = vmatprep.subr.mxu0 0.0
    %869 = vmatpush1.msra.mxu0 0.0
    %870 = vmatprep.subr.mxu0 0.0
    %871 = vmatpush1.msra.mxu0 0.0
    %872 = vmatprep.subr.mxu0 0.0
    %873 = vmatpush1.msra.mxu0 0.0
    %874 = vmatprep.subr.mxu0 0.0
    %875 = vmatpush1.msra.mxu0 0.0
    %876 = vmatprep.mubr.f32.mxu0 0.0
    %877 = vmatmul.mubr.f32.gmra.mrb[0].mxu0 %v810
    %v878 = vpop.f32.mrb[0].mxu0
    %v879 = vadd.f32 %v84, %v878
    %v880 = vpop.f32.mrb[0].mxu0
    %881 = vdwg.mxu0
    %v882 = vtanh.pop %v879
    %v883 = vxor.u32 %v879, 2147483648
    %v884 = vmul.f32 %v883, 1.442695
    %v885 = vpow.pop %v884
    %v886 = vadd.f32 %v885, 1.0
    %v887 = vrcp.pop %v886
    %v888 = vmul.f32 1.0, %v887
    %v889 = vsel %vm78, %v882, %v888
    %891 = vrot.lane.b32.xlu0 %v790, 32
    %v892 = vpop.permute.xlu0 %891
    %v894 = vmul.f32 %v889, %v892
    %896 = vrot.lane.b32.xlu0 %v889, 64
    %v897 = vpop.permute.xlu0 %896
    %v899 = vmul.f32 %v889, %v897
    %901 = vrot.lane.b32.xlu0 %v899, 32
    %v902 = vpop.permute.xlu0 %901
    %v904 = vadd.f32 %v894, %v902
    %v905 = vtanh.pop %v904
    %907 = vrot.lane.b32.xlu0 %v905, 64
    %v908 = vpop.permute.xlu0 %907
    %v910 = vmul.f32 %v889, %v908
    %v911 = vsel %vm75, 5, 2
    %vm912 = vcmp.lt.s32.totalorder %v911, %v72
    %914 = vrot.lane.b32.xlu0 %v910, 32
    %v915 = vpop.permute.xlu0 %914
    %v917 = vsel %vm912, %v915, 0.0
    %s918 = scalar_lea.vmem [#allocation2], 20
    %919 = vst.msk [vmem:[%s918] sm:$0xf] %vm209, %v917
    %921 = vrot.lane.b32.xlu0 %v917, 112
    %v922 = vpop.permute.xlu0 %921
    %s924 = scalar_lea.vmem [#allocation3], 8
    %925 = vst.msk [vmem:[%s924] sm:$0xf] %vm209, %v922
    %v926 = vsel %vm912, %v915, %v785
    %928 = vrot.lane.b32.xlu0 %v904, 96
    %v929 = vpop.permute.xlu0 %928
    %v931 = vsel %vm912, %v929, %v790
    %v932 = vld [vmem:[%s224] sm:$0xf]
    %v933 = vld [vmem:[%s222] sm:$0xf]
    %935 = vrot.lane.b32.xlu0 %v933, 8
    %v936 = vpop.permute.xlu0 %935
    %939 = vrot.lane.b32.xlu0 %v926, 16
    %v940 = vpop.permute.xlu0 %939
    %v942 = vsel %vm93, %v932, %v936
    %v943 = vsel %vm95, %v942, %v940
    %v944 = vld [vmem:[#allocation7] sm:$0xff]
    %v945 = vld [vmem:[#allocation7 + $0x8] sm:$0xff]
    %v946 = vld [vmem:[#allocation7 + $0x10] sm:$0xff]
    %v947 = vld [vmem:[#allocation7 + $0x18] sm:$0xff]
    %v948 = vld [vmem:[#allocation7 + $0x20] sm:$0xff]
    %v949 = vld [vmem:[#allocation7 + $0x28] sm:$0xff]
    %v951 = vsel %vm103, %v943, 0
    %953 = vmatprep.subr.mxu0 0.0
    %954 = vmatpush1.msra.mxu0 %v944
    %955 = vmatprep.subr.mxu0 0.0
    %956 = vmatpush1.msra.mxu0 %v945
    %957 = vmatprep.subr.mxu0 0.0
    %958 = vmatpush1.msra.mxu0 %v946
    %959 = vmatprep.subr.mxu0 0.0
    %960 = vmatpush1.msra.mxu0 %v947
    %961 = vmatprep.subr.mxu0 0.0
    %962 = vmatpush1.msra.mxu0 %v948
    %963 = vmatprep.subr.mxu0 0.0
    %964 = vmatpush1.msra.mxu0 %v949
    %965 = vmatprep.subr.mxu0 0.0
    %966 = vmatpush1.msra.mxu0 0.0
    %967 = vmatprep.subr.mxu0 0.0
    %968 = vmatpush1.msra.mxu0 0.0
    %969 = vmatprep.subr.mxu0 0.0
    %970 = vmatpush1.msra.mxu0 0.0
    %971 = vmatprep.subr.mxu0 0.0
    %972 = vmatpush1.msra.mxu0 0.0
    %973 = vmatprep.subr.mxu0 0.0
    %974 = vmatpush1.msra.mxu0 0.0
    %975 = vmatprep.subr.mxu0 0.0
    %976 = vmatpush1.msra.mxu0 0.0
    %977 = vmatprep.subr.mxu0 0.0
    %978 = vmatpush1.msra.mxu0 0.0
    %979 = vmatprep.subr.mxu0 0.0
    %980 = vmatpush1.msra.mxu0 0.0
    %981 = vmatprep.subr.mxu0 0.0
    %982 = vmatpush1.msra.mxu0 0.0
    %983 = vmatprep.subr.mxu0 0.0
    %984 = vmatpush1.msra.mxu0 0.0
    %985 = vmatprep.subr.mxu0 0.0
    %986 = vmatpush1.msra.mxu0 0.0
    %987 = vmatprep.subr.mxu0 0.0
    %988 = vmatpush1.msra.mxu0 0.0
    %989 = vmatprep.subr.mxu0 0.0
    %990 = vmatpush1.msra.mxu0 0.0
    %991 = vmatprep.subr.mxu0 0.0
    %992 = vmatpush1.msra.mxu0 0.0
    %993 = vmatprep.subr.mxu0 0.0
    %994 = vmatpush1.msra.mxu0 0.0
    %995 = vmatprep.subr.mxu0 0.0
    %996 = vmatpush1.msra.mxu0 0.0
    %997 = vmatprep.subr.mxu0 0.0
    %998 = vmatpush1.msra.mxu0 0.0
    %999 = vmatprep.subr.mxu0 0.0
    %1000 = vmatpush1.msra.mxu0 0.0
    %1001 = vmatprep.subr.mxu0 0.0
    %1002 = vmatpush1.msra.mxu0 0.0
    %1003 = vmatprep.subr.mxu0 0.0
    %1004 = vmatpush1.msra.mxu0 0.0
    %1005 = vmatprep.subr.mxu0 0.0
    %1006 = vmatpush1.msra.mxu0 0.0
    %1007 = vmatprep.subr.mxu0 0.0
    %1008 = vmatpush1.msra.mxu0 0.0
    %1009 = vmatprep.subr.mxu0 0.0
    %1010 = vmatpush1.msra.mxu0 0.0
    %1011 = vmatprep.subr.mxu0 0.0
    %1012 = vmatpush1.msra.mxu0 0.0
    %1013 = vmatprep.subr.mxu0 0.0
    %1014 = vmatpush1.msra.mxu0 0.0
    %1015 = vmatprep.subr.mxu0 0.0
    %1016 = vmatpush1.msra.mxu0 0.0
    %1017 = vmatprep.mubr.f32.mxu0 0.0
    %1018 = vmatmul.mubr.f32.gmra.mrb[0].mxu0 %v951
    %v1019 = vpop.f32.mrb[0].mxu0
    %v1020 = vadd.f32 %v84, %v1019
    %v1021 = vpop.f32.mrb[0].mxu0
    %1022 = vdwg.mxu0
    %v1023 = vtanh.pop %v1020
    %v1024 = vxor.u32 %v1020, 2147483648
    %v1025 = vmul.f32 %v1024, 1.442695
    %v1026 = vpow.pop %v1025
    %v1027 = vadd.f32 %v1026, 1.0
    %v1028 = vrcp.pop %v1027
    %v1029 = vmul.f32 1.0, %v1028
    %v1030 = vsel %vm78, %v1023, %v1029
    %1032 = vrot.lane.b32.xlu0 %v931, 32
    %v1033 = vpop.permute.xlu0 %1032
    %v1035 = vmul.f32 %v1030, %v1033
    %1037 = vrot.lane.b32.xlu0 %v1030, 64
    %v1038 = vpop.permute.xlu0 %1037
    %v1040 = vmul.f32 %v1030, %v1038
    %1042 = vrot.lane.b32.xlu0 %v1040, 32
    %v1043 = vpop.permute.xlu0 %1042
    %v1045 = vadd.f32 %v1035, %v1043
    %v1046 = vtanh.pop %v1045
    %1048 = vrot.lane.b32.xlu0 %v1046, 64
    %v1049 = vpop.permute.xlu0 %1048
    %v1051 = vmul.f32 %v1030, %v1049
    %v1052 = vsel %vm75, 6, 1
    %vm1053 = vcmp.lt.s32.totalorder %v1052, %v72
    %1055 = vrot.lane.b32.xlu0 %v1051, 32
    %v1056 = vpop.permute.xlu0 %1055
    %v1058 = vsel %vm1053, %v1056, 0.0
    %s1059 = scalar_lea.vmem [#allocation2], 24
    %1060 = vst.msk [vmem:[%s1059] sm:$0xf] %vm209, %v1058
    %1062 = vrot.lane.b32.xlu0 %v1058, 112
    %v1063 = vpop.permute.xlu0 %1062
    %s1065 = scalar_lea.vmem [#allocation3], 4
    %1066 = vst.msk [vmem:[%s1065] sm:$0xf] %vm209, %v1063
    %v1067 = vsel %vm1053, %v1056, %v926
    %1069 = vrot.lane.b32.xlu0 %v1045, 96
    %v1070 = vpop.permute.xlu0 %1069
    %v1072 = vsel %vm1053, %v1070, %v931
    %v1073 = vld [vmem:[%s87] sm:$0xf]
    %v1074 = vld [vmem:[#allocation4] sm:$0xf]
    %1076 = vrot.lane.b32.xlu0 %v1074, 8
    %v1077 = vpop.permute.xlu0 %1076
    %1080 = vrot.lane.b32.xlu0 %v1067, 16
    %v1081 = vpop.permute.xlu0 %1080
    %v1083 = vsel %vm93, %v1073, %v1077
    %v1084 = vsel %vm95, %v1083, %v1081
    %v1085 = vld [vmem:[#allocation7] sm:$0xff]
    %v1086 = vld [vmem:[#allocation7 + $0x8] sm:$0xff]
    %v1087 = vld [vmem:[#allocation7 + $0x10] sm:$0xff]
    %v1088 = vld [vmem:[#allocation7 + $0x18] sm:$0xff]
    %v1089 = vld [vmem:[#allocation7 + $0x20] sm:$0xff]
    %v1090 = vld [vmem:[#allocation7 + $0x28] sm:$0xff]
    %v1092 = vsel %vm103, %v1084, 0
    %1094 = vmatprep.subr.mxu0 0.0
    %1095 = vmatpush1.msra.mxu0 %v1085
    %1096 = vmatprep.subr.mxu0 0.0
    %1097 = vmatpush1.msra.mxu0 %v1086
    %1098 = vmatprep.subr.mxu0 0.0
    %1099 = vmatpush1.msra.mxu0 %v1087
    %1100 = vmatprep.subr.mxu0 0.0
    %1101 = vmatpush1.msra.mxu0 %v1088
    %1102 = vmatprep.subr.mxu0 0.0
    %1103 = vmatpush1.msra.mxu0 %v1089
    %1104 = vmatprep.subr.mxu0 0.0
    %1105 = vmatpush1.msra.mxu0 %v1090
    %1106 = vmatprep.subr.mxu0 0.0
    %1107 = vmatpush1.msra.mxu0 0.0
    %1108 = vmatprep.subr.mxu0 0.0
    %1109 = vmatpush1.msra.mxu0 0.0
    %1110 = vmatprep.subr.mxu0 0.0
    %1111 = vmatpush1.msra.mxu0 0.0
    %1112 = vmatprep.subr.mxu0 0.0
    %1113 = vmatpush1.msra.mxu0 0.0
    %1114 = vmatprep.subr.mxu0 0.0
    %1115 = vmatpush1.msra.mxu0 0.0
    %1116 = vmatprep.subr.mxu0 0.0
    %1117 = vmatpush1.msra.mxu0 0.0
    %1118 = vmatprep.subr.mxu0 0.0
    %1119 = vmatpush1.msra.mxu0 0.0
    %1120 = vmatprep.subr.mxu0 0.0
    %1121 = vmatpush1.msra.mxu0 0.0
    %1122 = vmatprep.subr.mxu0 0.0
    %1123 = vmatpush1.msra.mxu0 0.0
    %1124 = vmatprep.subr.mxu0 0.0
    %1125 = vmatpush1.msra.mxu0 0.0
    %1126 = vmatprep.subr.mxu0 0.0
    %1127 = vmatpush1.msra.mxu0 0.0
    %1128 = vmatprep.subr.mxu0 0.0
    %1129 = vmatpush1.msra.mxu0 0.0
    %1130 = vmatprep.subr.mxu0 0.0
    %1131 = vmatpush1.msra.mxu0 0.0
    %1132 = vmatprep.subr.mxu0 0.0
    %1133 = vmatpush1.msra.mxu0 0.0
    %1134 = vmatprep.subr.mxu0 0.0
    %1135 = vmatpush1.msra.mxu0 0.0
    %1136 = vmatprep.subr.mxu0 0.0
    %1137 = vmatpush1.msra.mxu0 0.0
    %1138 = vmatprep.subr.mxu0 0.0
    %1139 = vmatpush1.msra.mxu0 0.0
    %1140 = vmatprep.subr.mxu0 0.0
    %1141 = vmatpush1.msra.mxu0 0.0
    %1142 = vmatprep.subr.mxu0 0.0
    %1143 = vmatpush1.msra.mxu0 0.0
    %1144 = vmatprep.subr.mxu0 0.0
    %1145 = vmatpush1.msra.mxu0 0.0
    %1146 = vmatprep.subr.mxu0 0.0
    %1147 = vmatpush1.msra.mxu0 0.0
    %1148 = vmatprep.subr.mxu0 0.0
    %1149 = vmatpush1.msra.mxu0 0.0
    %1150 = vmatprep.subr.mxu0 0.0
    %1151 = vmatpush1.msra.mxu0 0.0
    %1152 = vmatprep.subr.mxu0 0.0
    %1153 = vmatpush1.msra.mxu0 0.0
    %1154 = vmatprep.subr.mxu0 0.0
    %1155 = vmatpush1.msra.mxu0 0.0
    %1156 = vmatprep.subr.mxu0 0.0
    %1157 = vmatpush1.msra.mxu0 0.0
    %1158 = vmatprep.mubr.f32.mxu0 0.0
    %1159 = vmatmul.mubr.f32.gmra.mrb[0].mxu0 %v1092
    %v1160 = vpop.f32.mrb[0].mxu0
    %v1161 = vadd.f32 %v84, %v1160
    %v1162 = vpop.f32.mrb[0].mxu0
    %1163 = vdwg.mxu0
    %v1164 = vtanh.pop %v1161
    %v1165 = vxor.u32 %v1161, 2147483648
    %v1166 = vmul.f32 %v1165, 1.442695
    %v1167 = vpow.pop %v1166
    %v1168 = vadd.f32 %v1167, 1.0
    %v1169 = vrcp.pop %v1168
    %v1170 = vmul.f32 1.0, %v1169
    %v1171 = vsel %vm78, %v1164, %v1170
    %1173 = vrot.lane.b32.xlu0 %v1072, 32
    %v1174 = vpop.permute.xlu0 %1173
    %v1176 = vmul.f32 %v1171, %v1174
    %1178 = vrot.lane.b32.xlu0 %v1171, 64
    %v1179 = vpop.permute.xlu0 %1178
    %v1181 = vmul.f32 %v1171, %v1179
    %1183 = vrot.lane.b32.xlu0 %v1181, 32
    %v1184 = vpop.permute.xlu0 %1183
    %v1186 = vadd.f32 %v1176, %v1184
    %v1187 = vtanh.pop %v1186
    %1189 = vrot.lane.b32.xlu0 %v1187, 64
    %v1190 = vpop.permute.xlu0 %1189
    %v1192 = vmul.f32 %v1171, %v1190
    %v1193 = vsel %vm75, 7, 0
    %vm1194 = vcmp.lt.s32.totalorder %v1193, %v72
    %1196 = vrot.lane.b32.xlu0 %v1192, 32
    %v1197 = vpop.permute.xlu0 %1196
    %v1199 = vsel %vm1194, %v1197, 0.0
    %s1200 = scalar_lea.vmem [#allocation2], 28
    %1201 = vst.msk [vmem:[%s1200] sm:$0xf] %vm209, %v1199
    %1203 = vrot.lane.b32.xlu0 %v1199, 112
    %v1204 = vpop.permute.xlu0 %1203
    %1206 = vst.msk [vmem:[#allocation3] sm:$0xf] %vm209, %v1204
    %v1207 = vld [vmem:[%s5] sm:$0x1]
    %v1209 = vlaneseq
    %v1210 = vshrl.u32 %v1209, 7
    %v1211 = vsub.s32 0, %v1210
    %v1212 = vrot.slane %v1207, %v1211
    %v1214 = vld [vmem:[#allocation2] sm:$0xf]
    %v1215 = vld [vmem:[#allocation3] sm:$0xf]
    %v1216 = vld [vmem:[%s1200] sm:$0xf]
    %v1217 = vld [vmem:[%s215] sm:$0xf]
    %1219 = vrot.lane.b32.xlu0 %v1215, 16
    %v1220 = vpop.permute.xlu0 %1219
    %1223 = vrot.lane.b32.xlu0 %v1216, 32
    %v1224 = vpop.permute.xlu0 %1223
    %1227 = vrot.lane.b32.xlu0 %v1217, 48
    %v1228 = vpop.permute.xlu0 %1227
    %v1230 = vsel %vm95, %v1214, %v1220
    %vm1231 = vcmask 261120
    %v1232 = vsel %vm1231, %v1230, %v1224
    %v1233 = vsel %vm103, %v1232, %v1228
    %vm1234 = vcmask 523264
    %v1235 = vsel %vm1234, %v1233, 0.0
    %v1236 = vld [vmem:[#allocation9] sm:$0xff]
    %v1237 = vld [vmem:[#allocation9 + $0x8] sm:$0xff]
    %v1238 = vld [vmem:[#allocation9 + $0x10] sm:$0xff]
    %v1239 = vld [vmem:[#allocation9 + $0x18] sm:$0xff]
    %v1240 = vld [vmem:[#allocation9 + $0x20] sm:$0xff]
    %v1241 = vld [vmem:[#allocation9 + $0x28] sm:$0xff]
    %v1242 = vld [vmem:[#allocation9 + $0x30] sm:$0xff]
    %v1243 = vld [vmem:[#allocation9 + $0x38] sm:$0xff]
    %v1244 = vld [vmem:[#allocation9 + $0x40] sm:$0xff]
    %v1245 = vld [vmem:[#allocation9 + $0x48] sm:$0xff]
    %v1246 = vld [vmem:[#allocation9 + $0x50] sm:$0xff]
    %v1247 = vld [vmem:[#allocation9 + $0x58] sm:$0xff]
    %vm1248 = vcmask 785408
    %v1250 = vsel %vm1248, %v1235, 0
    %1252 = vmatprep.subr.mxu0 0.0
    %1253 = vmatpush1.msra.mxu0 %v1236
    %1254 = vmatprep.subr.mxu0 0.0
    %1255 = vmatpush1.msra.mxu0 %v1237
    %1256 = vmatprep.subr.mxu0 0.0
    %1257 = vmatpush1.msra.mxu0 %v1238
    %1258 = vmatprep.subr.mxu0 0.0
    %1259 = vmatpush1.msra.mxu0 %v1239
    %1260 = vmatprep.subr.mxu0 0.0
    %1261 = vmatpush1.msra.mxu0 %v1240
    %1262 = vmatprep.subr.mxu0 0.0
    %1263 = vmatpush1.msra.mxu0 %v1241
    %1264 = vmatprep.subr.mxu0 0.0
    %1265 = vmatpush1.msra.mxu0 %v1242
    %1266 = vmatprep.subr.mxu0 0.0
    %1267 = vmatpush1.msra.mxu0 %v1243
    %1268 = vmatprep.subr.mxu0 0.0
    %1269 = vmatpush1.msra.mxu0 %v1244
    %1270 = vmatprep.subr.mxu0 0.0
    %1271 = vmatpush1.msra.mxu0 %v1245
    %1272 = vmatprep.subr.mxu0 0.0
    %1273 = vmatpush1.msra.mxu0 %v1246
    %1274 = vmatprep.subr.mxu0 0.0
    %1275 = vmatpush1.msra.mxu0 %v1247
    %1276 = vmatprep.subr.mxu0 0.0
    %1277 = vmatpush1.msra.mxu0 0.0
    %1278 = vmatprep.subr.mxu0 0.0
    %1279 = vmatpush1.msra.mxu0 0.0
    %1280 = vmatprep.subr.mxu0 0.0
    %1281 = vmatpush1.msra.mxu0 0.0
    %1282 = vmatprep.subr.mxu0 0.0
    %1283 = vmatpush1.msra.mxu0 0.0
    %1284 = vmatprep.subr.mxu0 0.0
    %1285 = vmatpush1.msra.mxu0 0.0
    %1286 = vmatprep.subr.mxu0 0.0
    %1287 = vmatpush1.msra.mxu0 0.0
    %1288 = vmatprep.subr.mxu0 0.0
    %1289 = vmatpush1.msra.mxu0 0.0
    %1290 = vmatprep.subr.mxu0 0.0
    %1291 = vmatpush1.msra.mxu0 0.0
    %1292 = vmatprep.subr.mxu0 0.0
    %1293 = vmatpush1.msra.mxu0 0.0
    %1294 = vmatprep.subr.mxu0 0.0
    %1295 = vmatpush1.msra.mxu0 0.0
    %1296 = vmatprep.subr.mxu0 0.0
    %1297 = vmatpush1.msra.mxu0 0.0
    %1298 = vmatprep.subr.mxu0 0.0
    %1299 = vmatpush1.msra.mxu0 0.0
    %1300 = vmatprep.subr.mxu0 0.0
    %1301 = vmatpush1.msra.mxu0 0.0
    %1302 = vmatprep.subr.mxu0 0.0
    %1303 = vmatpush1.msra.mxu0 0.0
    %1304 = vmatprep.subr.mxu0 0.0
    %1305 = vmatpush1.msra.mxu0 0.0
    %1306 = vmatprep.subr.mxu0 0.0
    %1307 = vmatpush1.msra.mxu0 0.0
    %1308 = vmatprep.subr.mxu0 0.0
    %1309 = vmatpush1.msra.mxu0 0.0
    %1310 = vmatprep.subr.mxu0 0.0
    %1311 = vmatpush1.msra.mxu0 0.0
    %1312 = vmatprep.subr.mxu0 0.0
    %1313 = vmatpush1.msra.mxu0 0.0
    %1314 = vmatprep.subr.mxu0 0.0
    %1315 = vmatpush1.msra.mxu0 0.0
    %1316 = vmatprep.mubr.f32.mxu0 0.0
    %1317 = vmatmul.mubr.f32.gmra.mrb[0].mxu0 %v1250
    %v1318 = vpop.f32.mrb[0].mxu0
    %v1319 = vadd.f32 %v1212, %v1318
    %v1320 = vpop.f32.mrb[0].mxu0
    %1321 = vdwg.mxu0
    %v1322 = vtanh.pop %v1319
    %v1323 = vxor.u32 %v1319, 2147483648
    %v1324 = vmul.f32 %v1323, 1.442695
    %v1325 = vpow.pop %v1324
    %v1326 = vadd.f32 %v1325, 1.0
    %v1327 = vrcp.pop %v1326
    %v1328 = vmul.f32 1.0, %v1327
    %v1329 = vsel %vm78, %v1322, %v1328
    %v1330 = vmul.f32 %v1329, 0.0
    %1332 = vrot.lane.b32.xlu0 %v1329, 64
    %v1333 = vpop.permute.xlu0 %1332
    %v1335 = vmul.f32 %v1329, %v1333
    %1337 = vrot.lane.b32.xlu0 %v1335, 32
    %v1338 = vpop.permute.xlu0 %1337
    %v1340 = vadd.f32 %v1330, %v1338
    %v1341 = vtanh.pop %v1340
    %1343 = vrot.lane.b32.xlu0 %v1341, 64
    %v1344 = vpop.permute.xlu0 %1343
    %v1346 = vmul.f32 %v1329, %v1344
    %1348 = vrot.lane.b32.xlu0 %v1346, 32
    %v1349 = vpop.permute.xlu0 %1348
    %v1351 = vsel %vm203, %v1349, 0.0
    %1352 = vst.msk [vmem:[#allocation10] sm:$0xf] %vm209, %v1351
    %s1353 = scalar_lea.vmem [#allocation10], 28
    %vm1354 = vcmask 257152
    %1355 = vst.msk [vmem:[%s1353] sm:$0xf] %vm1354, %v1351
    %1357 = vrot.lane.b32.xlu0 %v1340, 96
    %v1358 = vpop.permute.xlu0 %1357
    %v1360 = vsel %vm203, %v1358, 0.0
    %v1361 = vld [vmem:[%s350] sm:$0xf]
    %v1362 = vld [vmem:[%s1065] sm:$0xf]
    %v1363 = vld [vmem:[%s1059] sm:$0xf]
    %v1364 = vld [vmem:[%s356] sm:$0xf]
    %1366 = vrot.lane.b32.xlu0 %v1362, 16
    %v1367 = vpop.permute.xlu0 %1366
    %1370 = vrot.lane.b32.xlu0 %v1363, 32
    %v1371 = vpop.permute.xlu0 %1370
    %1374 = vrot.lane.b32.xlu0 %v1364, 48
    %v1375 = vpop.permute.xlu0 %1374
    %1378 = vrot.lane.b32.xlu0 %v1351, 64
    %v1379 = vpop.permute.xlu0 %1378
    %v1381 = vsel %vm95, %v1361, %v1367
    %v1382 = vsel %vm1231, %v1381, %v1371
    %v1383 = vsel %vm103, %v1382, %v1375
    %v1384 = vsel %vm1234, %v1383, %v1379
    %v1385 = vld [vmem:[#allocation9] sm:$0xff]
    %v1386 = vld [vmem:[#allocation9 + $0x8] sm:$0xff]
    %v1387 = vld [vmem:[#allocation9 + $0x10] sm:$0xff]
    %v1388 = vld [vmem:[#allocation9 + $0x18] sm:$0xff]
    %v1389 = vld [vmem:[#allocation9 + $0x20] sm:$0xff]
    %v1390 = vld [vmem:[#allocation9 + $0x28] sm:$0xff]
    %v1391 = vld [vmem:[#allocation9 + $0x30] sm:$0xff]
    %v1392 = vld [vmem:[#allocation9 + $0x38] sm:$0xff]
    %v1393 = vld [vmem:[#allocation9 + $0x40] sm:$0xff]
    %v1394 = vld [vmem:[#allocation9 + $0x48] sm:$0xff]
    %v1395 = vld [vmem:[#allocation9 + $0x50] sm:$0xff]
    %v1396 = vld [vmem:[#allocation9 + $0x58] sm:$0xff]
    %v1398 = vsel %vm1248, %v1384, 0
    %1400 = vmatprep.subr.mxu0 0.0
    %1401 = vmatpush1.msra.mxu0 %v1385
    %1402 = vmatprep.subr.mxu0 0.0
    %1403 = vmatpush1.msra.mxu0 %v1386
    %1404 = vmatprep.subr.mxu0 0.0
    %1405 = vmatpush1.msra.mxu0 %v1387
    %1406 = vmatprep.subr.mxu0 0.0
    %1407 = vmatpush1.msra.mxu0 %v1388
    %1408 = vmatprep.subr.mxu0 0.0
    %1409 = vmatpush1.msra.mxu0 %v1389
    %1410 = vmatprep.subr.mxu0 0.0
    %1411 = vmatpush1.msra.mxu0 %v1390
    %1412 = vmatprep.subr.mxu0 0.0
    %1413 = vmatpush1.msra.mxu0 %v1391
    %1414 = vmatprep.subr.mxu0 0.0
    %1415 = vmatpush1.msra.mxu0 %v1392
    %1416 = vmatprep.subr.mxu0 0.0
    %1417 = vmatpush1.msra.mxu0 %v1393
    %1418 = vmatprep.subr.mxu0 0.0
    %1419 = vmatpush1.msra.mxu0 %v1394
    %1420 = vmatprep.subr.mxu0 0.0
    %1421 = vmatpush1.msra.mxu0 %v1395
    %1422 = vmatprep.subr.mxu0 0.0
    %1423 = vmatpush1.msra.mxu0 %v1396
    %1424 = vmatprep.subr.mxu0 0.0
    %1425 = vmatpush1.msra.mxu0 0.0
    %1426 = vmatprep.subr.mxu0 0.0
    %1427 = vmatpush1.msra.mxu0 0.0
    %1428 = vmatprep.subr.mxu0 0.0
    %1429 = vmatpush1.msra.mxu0 0.0
    %1430 = vmatprep.subr.mxu0 0.0
    %1431 = vmatpush1.msra.mxu0 0.0
    %1432 = vmatprep.subr.mxu0 0.0
    %1433 = vmatpush1.msra.mxu0 0.0
    %1434 = vmatprep.subr.mxu0 0.0
    %1435 = vmatpush1.msra.mxu0 0.0
    %1436 = vmatprep.subr.mxu0 0.0
    %1437 = vmatpush1.msra.mxu0 0.0
    %1438 = vmatprep.subr.mxu0 0.0
    %1439 = vmatpush1.msra.mxu0 0.0
    %1440 = vmatprep.subr.mxu0 0.0
    %1441 = vmatpush1.msra.mxu0 0.0
    %1442 = vmatprep.subr.mxu0 0.0
    %1443 = vmatpush1.msra.mxu0 0.0
    %1444 = vmatprep.subr.mxu0 0.0
    %1445 = vmatpush1.msra.mxu0 0.0
    %1446 = vmatprep.subr.mxu0 0.0
    %1447 = vmatpush1.msra.mxu0 0.0
    %1448 = vmatprep.subr.mxu0 0.0
    %1449 = vmatpush1.msra.mxu0 0.0
    %1450 = vmatprep.subr.mxu0 0.0
    %1451 = vmatpush1.msra.mxu0 0.0
    %1452 = vmatprep.subr.mxu0 0.0
    %1453 = vmatpush1.msra.mxu0 0.0
    %1454 = vmatprep.subr.mxu0 0.0
    %1455 = vmatpush1.msra.mxu0 0.0
    %1456 = vmatprep.subr.mxu0 0.0
    %1457 = vmatpush1.msra.mxu0 0.0
    %1458 = vmatprep.subr.mxu0 0.0
    %1459 = vmatpush1.msra.mxu0 0.0
    %1460 = vmatprep.subr.mxu0 0.0
    %1461 = vmatpush1.msra.mxu0 0.0
    %1462 = vmatprep.subr.mxu0 0.0
    %1463 = vmatpush1.msra.mxu0 0.0
    %1464 = vmatprep.mubr.f32.mxu0 0.0
    %1465 = vmatmul.mubr.f32.gmra.mrb[0].mxu0 %v1398
    %v1466 = vpop.f32.mrb[0].mxu0
    %v1467 = vadd.f32 %v1212, %v1466
    %v1468 = vpop.f32.mrb[0].mxu0
    %1469 = vdwg.mxu0
    %v1470 = vtanh.pop %v1467
    %v1471 = vxor.u32 %v1467, 2147483648
    %v1472 = vmul.f32 %v1471, 1.442695
    %v1473 = vpow.pop %v1472
    %v1474 = vadd.f32 %v1473, 1.0
    %v1475 = vrcp.pop %v1474
    %v1476 = vmul.f32 1.0, %v1475
    %v1477 = vsel %vm78, %v1470, %v1476
    %1479 = vrot.lane.b32.xlu0 %v1360, 32
    %v1480 = vpop.permute.xlu0 %1479
    %v1482 = vmul.f32 %v1477, %v1480
    %1484 = vrot.lane.b32.xlu0 %v1477, 64
    %v1485 = vpop.permute.xlu0 %1484
    %v1487 = vmul.f32 %v1477, %v1485
    %1489 = vrot.lane.b32.xlu0 %v1487, 32
    %v1490 = vpop.permute.xlu0 %1489
    %v1492 = vadd.f32 %v1482, %v1490
    %v1493 = vtanh.pop %v1492
    %1495 = vrot.lane.b32.xlu0 %v1493, 64
    %v1496 = vpop.permute.xlu0 %1495
    %v1498 = vmul.f32 %v1477, %v1496
    %1500 = vrot.lane.b32.xlu0 %v1498, 32
    %v1501 = vpop.permute.xlu0 %1500
    %v1503 = vsel %vm344, %v1501, 0.0
    %s1504 = scalar_lea.vmem [#allocation10], 4
    %1505 = vst.msk [vmem:[%s1504] sm:$0xf] %vm209, %v1503
    %s1506 = scalar_lea.vmem [#allocation10], 24
    %1507 = vst.msk [vmem:[%s1506] sm:$0xf] %vm1354, %v1503
    %v1508 = vsel %vm344, %v1501, %v1351
    %1510 = vrot.lane.b32.xlu0 %v1492, 96
    %v1511 = vpop.permute.xlu0 %1510
    %v1513 = vsel %vm344, %v1511, %v1360
    %v1514 = vld [vmem:[%s493] sm:$0xf]
    %v1515 = vld [vmem:[%s924] sm:$0xf]
    %v1516 = vld [vmem:[%s918] sm:$0xf]
    %v1517 = vld [vmem:[%s499] sm:$0xf]
    %1519 = vrot.lane.b32.xlu0 %v1515, 16
    %v1520 = vpop.permute.xlu0 %1519
    %1523 = vrot.lane.b32.xlu0 %v1516, 32
    %v1524 = vpop.permute.xlu0 %1523
    %1527 = vrot.lane.b32.xlu0 %v1517, 48
    %v1528 = vpop.permute.xlu0 %1527
    %1531 = vrot.lane.b32.xlu0 %v1508, 64
    %v1532 = vpop.permute.xlu0 %1531
    %v1534 = vsel %vm95, %v1514, %v1520
    %v1535 = vsel %vm1231, %v1534, %v1524
    %v1536 = vsel %vm103, %v1535, %v1528
    %v1537 = vsel %vm1234, %v1536, %v1532
    %v1538 = vld [vmem:[#allocation9] sm:$0xff]
    %v1539 = vld [vmem:[#allocation9 + $0x8] sm:$0xff]
    %v1540 = vld [vmem:[#allocation9 + $0x10] sm:$0xff]
    %v1541 = vld [vmem:[#allocation9 + $0x18] sm:$0xff]
    %v1542 = vld [vmem:[#allocation9 + $0x20] sm:$0xff]
    %v1543 = vld [vmem:[#allocation9 + $0x28] sm:$0xff]
    %v1544 = vld [vmem:[#allocation9 + $0x30] sm:$0xff]
    %v1545 = vld [vmem:[#allocation9 + $0x38] sm:$0xff]
    %v1546 = vld [vmem:[#allocation9 + $0x40] sm:$0xff]
    %v1547 = vld [vmem:[#allocation9 + $0x48] sm:$0xff]
    %v1548 = vld [vmem:[#allocation9 + $0x50] sm:$0xff]
    %v1549 = vld [vmem:[#allocation9 + $0x58] sm:$0xff]
    %v1551 = vsel %vm1248, %v1537, 0
    %1553 = vmatprep.subr.mxu0 0.0
    %1554 = vmatpush1.msra.mxu0 %v1538
    %1555 = vmatprep.subr.mxu0 0.0
    %1556 = vmatpush1.msra.mxu0 %v1539
    %1557 = vmatprep.subr.mxu0 0.0
    %1558 = vmatpush1.msra.mxu0 %v1540
    %1559 = vmatprep.subr.mxu0 0.0
    %1560 = vmatpush1.msra.mxu0 %v1541
    %1561 = vmatprep.subr.mxu0 0.0
    %1562 = vmatpush1.msra.mxu0 %v1542
    %1563 = vmatprep.subr.mxu0 0.0
    %1564 = vmatpush1.msra.mxu0 %v1543
    %1565 = vmatprep.subr.mxu0 0.0
    %1566 = vmatpush1.msra.mxu0 %v1544
    %1567 = vmatprep.subr.mxu0 0.0
    %1568 = vmatpush1.msra.mxu0 %v1545
    %1569 = vmatprep.subr.mxu0 0.0
    %1570 = vmatpush1.msra.mxu0 %v1546
    %1571 = vmatprep.subr.mxu0 0.0
    %1572 = vmatpush1.msra.mxu0 %v1547
    %1573 = vmatprep.subr.mxu0 0.0
    %1574 = vmatpush1.msra.mxu0 %v1548
    %1575 = vmatprep.subr.mxu0 0.0
    %1576 = vmatpush1.msra.mxu0 %v1549
    %1577 = vmatprep.subr.mxu0 0.0
    %1578 = vmatpush1.msra.mxu0 0.0
    %1579 = vmatprep.subr.mxu0 0.0
    %1580 = vmatpush1.msra.mxu0 0.0
    %1581 = vmatprep.subr.mxu0 0.0
    %1582 = vmatpush1.msra.mxu0 0.0
    %1583 = vmatprep.subr.mxu0 0.0
    %1584 = vmatpush1.msra.mxu0 0.0
    %1585 = vmatprep.subr.mxu0 0.0
    %1586 = vmatpush1.msra.mxu0 0.0
    %1587 = vmatprep.subr.mxu0 0.0
    %1588 = vmatpush1.msra.mxu0 0.0
    %1589 = vmatprep.subr.mxu0 0.0
    %1590 = vmatpush1.msra.mxu0 0.0
    %1591 = vmatprep.subr.mxu0 0.0
    %1592 = vmatpush1.msra.mxu0 0.0
    %1593 = vmatprep.subr.mxu0 0.0
    %1594 = vmatpush1.msra.mxu0 0.0
    %1595 = vmatprep.subr.mxu0 0.0
    %1596 = vmatpush1.msra.mxu0 0.0
    %1597 = vmatprep.subr.mxu0 0.0
    %1598 = vmatpush1.msra.mxu0 0.0
    %1599 = vmatprep.subr.mxu0 0.0
    %1600 = vmatpush1.msra.mxu0 0.0
    %1601 = vmatprep.subr.mxu0 0.0
    %1602 = vmatpush1.msra.mxu0 0.0
    %1603 = vmatprep.subr.mxu0 0.0
    %1604 = vmatpush1.msra.mxu0 0.0
    %1605 = vmatprep.subr.mxu0 0.0
    %1606 = vmatpush1.msra.mxu0 0.0
    %1607 = vmatprep.subr.mxu0 0.0
    %1608 = vmatpush1.msra.mxu0 0.0
    %1609 = vmatprep.subr.mxu0 0.0
    %1610 = vmatpush1.msra.mxu0 0.0
    %1611 = vmatprep.subr.mxu0 0.0
    %1612 = vmatpush1.msra.mxu0 0.0
    %1613 = vmatprep.subr.mxu0 0.0
    %1614 = vmatpush1.msra.mxu0 0.0
    %1615 = vmatprep.subr.mxu0 0.0
    %1616 = vmatpush1.msra.mxu0 0.0
    %1617 = vmatprep.mubr.f32.mxu0 0.0
    %1618 = vmatmul.mubr.f32.gmra.mrb[0].mxu0 %v1551
    %v1619 = vpop.f32.mrb[0].mxu0
    %v1620 = vadd.f32 %v1212, %v1619
    %v1621 = vpop.f32.mrb[0].mxu0
    %1622 = vdwg.mxu0
    %v1623 = vtanh.pop %v1620
    %v1624 = vxor.u32 %v1620, 2147483648
    %v1625 = vmul.f32 %v1624, 1.442695
    %v1626 = vpow.pop %v1625
    %v1627 = vadd.f32 %v1626, 1.0
    %v1628 = vrcp.pop %v1627
    %v1629 = vmul.f32 1.0, %v1628
    %v1630 = vsel %vm78, %v1623, %v1629
    %1632 = vrot.lane.b32.xlu0 %v1513, 32
    %v1633 = vpop.permute.xlu0 %1632
    %v1635 = vmul.f32 %v1630, %v1633
    %1637 = vrot.lane.b32.xlu0 %v1630, 64
    %v1638 = vpop.permute.xlu0 %1637
    %v1640 = vmul.f32 %v1630, %v1638
    %1642 = vrot.lane.b32.xlu0 %v1640, 32
    %v1643 = vpop.permute.xlu0 %1642
    %v1645 = vadd.f32 %v1635, %v1643
    %v1646 = vtanh.pop %v1645
    %1648 = vrot.lane.b32.xlu0 %v1646, 64
    %v1649 = vpop.permute.xlu0 %1648
    %v1651 = vmul.f32 %v1630, %v1649
    %1653 = vrot.lane.b32.xlu0 %v1651, 32
    %v1654 = vpop.permute.xlu0 %1653
    %v1656 = vsel %vm487, %v1654, 0.0
    %s1657 = scalar_lea.vmem [#allocation10], 8
    %1658 = vst.msk [vmem:[%s1657] sm:$0xf] %vm209, %v1656
    %s1659 = scalar_lea.vmem [#allocation10], 20
    %1660 = vst.msk [vmem:[%s1659] sm:$0xf] %vm1354, %v1656
    %v1661 = vsel %vm487, %v1654, %v1508
    %1663 = vrot.lane.b32.xlu0 %v1645, 96
    %v1664 = vpop.permute.xlu0 %1663
    %v1666 = vsel %vm487, %v1664, %v1513
    %v1667 = vld [vmem:[%s636] sm:$0xf]
    %v1668 = vld [vmem:[%s783] sm:$0xf]
    %v1669 = vld [vmem:[%s777] sm:$0xf]
    %v1670 = vld [vmem:[%s642] sm:$0xf]
    %1672 = vrot.lane.b32.xlu0 %v1668, 16
    %v1673 = vpop.permute.xlu0 %1672
    %1676 = vrot.lane.b32.xlu0 %v1669, 32
    %v1677 = vpop.permute.xlu0 %1676
    %1680 = vrot.lane.b32.xlu0 %v1670, 48
    %v1681 = vpop.permute.xlu0 %1680
    %1684 = vrot.lane.b32.xlu0 %v1661, 64
    %v1685 = vpop.permute.xlu0 %1684
    %v1687 = vsel %vm95, %v1667, %v1673
    %v1688 = vsel %vm1231, %v1687, %v1677
    %v1689 = vsel %vm103, %v1688, %v1681
    %v1690 = vsel %vm1234, %v1689, %v1685
    %v1691 = vld [vmem:[#allocation9] sm:$0xff]
    %v1692 = vld [vmem:[#allocation9 + $0x8] sm:$0xff]
    %v1693 = vld [vmem:[#allocation9 + $0x10] sm:$0xff]
    %v1694 = vld [vmem:[#allocation9 + $0x18] sm:$0xff]
    %v1695 = vld [vmem:[#allocation9 + $0x20] sm:$0xff]
    %v1696 = vld [vmem:[#allocation9 + $0x28] sm:$0xff]
    %v1697 = vld [vmem:[#allocation9 + $0x30] sm:$0xff]
    %v1698 = vld [vmem:[#allocation9 + $0x38] sm:$0xff]
    %v1699 = vld [vmem:[#allocation9 + $0x40] sm:$0xff]
    %v1700 = vld [vmem:[#allocation9 + $0x48] sm:$0xff]
    %v1701 = vld [vmem:[#allocation9 + $0x50] sm:$0xff]
    %v1702 = vld [vmem:[#allocation9 + $0x58] sm:$0xff]
    %v1704 = vsel %vm1248, %v1690, 0
    %1706 = vmatprep.subr.mxu0 0.0
    %1707 = vmatpush1.msra.mxu0 %v1691
    %1708 = vmatprep.subr.mxu0 0.0
    %1709 = vmatpush1.msra.mxu0 %v1692
    %1710 = vmatprep.subr.mxu0 0.0
    %1711 = vmatpush1.msra.mxu0 %v1693
    %1712 = vmatprep.subr.mxu0 0.0
    %1713 = vmatpush1.msra.mxu0 %v1694
    %1714 = vmatprep.subr.mxu0 0.0
    %1715 = vmatpush1.msra.mxu0 %v1695
    %1716 = vmatprep.subr.mxu0 0.0
    %1717 = vmatpush1.msra.mxu0 %v1696
    %1718 = vmatprep.subr.mxu0 0.0
    %1719 = vmatpush1.msra.mxu0 %v1697
    %1720 = vmatprep.subr.mxu0 0.0
    %1721 = vmatpush1.msra.mxu0 %v1698
    %1722 = vmatprep.subr.mxu0 0.0
    %1723 = vmatpush1.msra.mxu0 %v1699
    %1724 = vmatprep.subr.mxu0 0.0
    %1725 = vmatpush1.msra.mxu0 %v1700
    %1726 = vmatprep.subr.mxu0 0.0
    %1727 = vmatpush1.msra.mxu0 %v1701
    %1728 = vmatprep.subr.mxu0 0.0
    %1729 = vmatpush1.msra.mxu0 %v1702
    %1730 = vmatprep.subr.mxu0 0.0
    %1731 = vmatpush1.msra.mxu0 0.0
    %1732 = vmatprep.subr.mxu0 0.0
    %1733 = vmatpush1.msra.mxu0 0.0
    %1734 = vmatprep.subr.mxu0 0.0
    %1735 = vmatpush1.msra.mxu0 0.0
    %1736 = vmatprep.subr.mxu0 0.0
    %1737 = vmatpush1.msra.mxu0 0.0
    %1738 = vmatprep.subr.mxu0 0.0
    %1739 = vmatpush1.msra.mxu0 0.0
    %1740 = vmatprep.subr.mxu0 0.0
    %1741 = vmatpush1.msra.mxu0 0.0
    %1742 = vmatprep.subr.mxu0 0.0
    %1743 = vmatpush1.msra.mxu0 0.0
    %1744 = vmatprep.subr.mxu0 0.0
    %1745 = vmatpush1.msra.mxu0 0.0
    %1746 = vmatprep.subr.mxu0 0.0
    %1747 = vmatpush1.msra.mxu0 0.0
    %1748 = vmatprep.subr.mxu0 0.0
    %1749 = vmatpush1.msra.mxu0 0.0
    %1750 = vmatprep.subr.mxu0 0.0
    %1751 = vmatpush1.msra.mxu0 0.0
    %1752 = vmatprep.subr.mxu0 0.0
    %1753 = vmatpush1.msra.mxu0 0.0
    %1754 = vmatprep.subr.mxu0 0.0
    %1755 = vmatpush1.msra.mxu0 0.0
    %1756 = vmatprep.subr.mxu0 0.0
    %1757 = vmatpush1.msra.mxu0 0.0
    %1758 = vmatprep.subr.mxu0 0.0
    %1759 = vmatpush1.msra.mxu0 0.0
    %1760 = vmatprep.subr.mxu0 0.0
    %1761 = vmatpush1.msra.mxu0 0.0
    %1762 = vmatprep.subr.mxu0 0.0
    %1763 = vmatpush1.msra.mxu0 0.0
    %1764 = vmatprep.subr.mxu0 0.0
    %1765 = vmatpush1.msra.mxu0 0.0
    %1766 = vmatprep.subr.mxu0 0.0
    %1767 = vmatpush1.msra.mxu0 0.0
    %1768 = vmatprep.subr.mxu0 0.0
    %1769 = vmatpush1.msra.mxu0 0.0
    %1770 = vmatprep.mubr.f32.mxu0 0.0
    %1771 = vmatmul.mubr.f32.gmra.mrb[0].mxu0 %v1704
    %v1772 = vpop.f32.mrb[0].mxu0
    %v1773 = vadd.f32 %v1212, %v1772
    %v1774 = vpop.f32.mrb[0].mxu0
    %1775 = vdwg.mxu0
    %v1776 = vtanh.pop %v1773
    %v1777 = vxor.u32 %v1773, 2147483648
    %v1778 = vmul.f32 %v1777, 1.442695
    %v1779 = vpow.pop %v1778
    %v1780 = vadd.f32 %v1779, 1.0
    %v1781 = vrcp.pop %v1780
    %v1782 = vmul.f32 1.0, %v1781
    %v1783 = vsel %vm78, %v1776, %v1782
    %1785 = vrot.lane.b32.xlu0 %v1666, 32
    %v1786 = vpop.permute.xlu0 %1785
    %v1788 = vmul.f32 %v1783, %v1786
    %1790 = vrot.lane.b32.xlu0 %v1783, 64
    %v1791 = vpop.permute.xlu0 %1790
    %v1793 = vmul.f32 %v1783, %v1791
    %1795 = vrot.lane.b32.xlu0 %v1793, 32
    %v1796 = vpop.permute.xlu0 %1795
    %v1798 = vadd.f32 %v1788, %v1796
    %v1799 = vtanh.pop %v1798
    %1801 = vrot.lane.b32.xlu0 %v1799, 64
    %v1802 = vpop.permute.xlu0 %1801
    %v1804 = vmul.f32 %v1783, %v1802
    %1806 = vrot.lane.b32.xlu0 %v1804, 32
    %v1807 = vpop.permute.xlu0 %1806
    %v1809 = vsel %vm630, %v1807, 0.0
    %s1810 = scalar_lea.vmem [#allocation10], 12
    %1811 = vst.msk [vmem:[%s1810] sm:$0xf] %vm209, %v1809
    %s1812 = scalar_lea.vmem [#allocation10], 16
    %1813 = vst.msk [vmem:[%s1812] sm:$0xf] %vm1354, %v1809
    %v1814 = vsel %vm630, %v1807, %v1661
    %1816 = vrot.lane.b32.xlu0 %v1798, 96
    %v1817 = vpop.permute.xlu0 %1816
    %v1819 = vsel %vm630, %v1817, %v1666
    %v1820 = vld [vmem:[%s777] sm:$0xf]
    %v1821 = vld [vmem:[%s642] sm:$0xf]
    %v1822 = vld [vmem:[%s636] sm:$0xf]
    %v1823 = vld [vmem:[%s783] sm:$0xf]
    %1825 = vrot.lane.b32.xlu0 %v1821, 16
    %v1826 = vpop.permute.xlu0 %1825
    %1829 = vrot.lane.b32.xlu0 %v1822, 32
    %v1830 = vpop.permute.xlu0 %1829
    %1833 = vrot.lane.b32.xlu0 %v1823, 48
    %v1834 = vpop.permute.xlu0 %1833
    %1837 = vrot.lane.b32.xlu0 %v1814, 64
    %v1838 = vpop.permute.xlu0 %1837
    %v1840 = vsel %vm95, %v1820, %v1826
    %v1841 = vsel %vm1231, %v1840, %v1830
    %v1842 = vsel %vm103, %v1841, %v1834
    %v1843 = vsel %vm1234, %v1842, %v1838
    %v1844 = vld [vmem:[#allocation9] sm:$0xff]
    %v1845 = vld [vmem:[#allocation9 + $0x8] sm:$0xff]
    %v1846 = vld [vmem:[#allocation9 + $0x10] sm:$0xff]
    %v1847 = vld [vmem:[#allocation9 + $0x18] sm:$0xff]
    %v1848 = vld [vmem:[#allocation9 + $0x20] sm:$0xff]
    %v1849 = vld [vmem:[#allocation9 + $0x28] sm:$0xff]
    %v1850 = vld [vmem:[#allocation9 + $0x30] sm:$0xff]
    %v1851 = vld [vmem:[#allocation9 + $0x38] sm:$0xff]
    %v1852 = vld [vmem:[#allocation9 + $0x40] sm:$0xff]
    %v1853 = vld [vmem:[#allocation9 + $0x48] sm:$0xff]
    %v1854 = vld [vmem:[#allocation9 + $0x50] sm:$0xff]
    %v1855 = vld [vmem:[#allocation9 + $0x58] sm:$0xff]
    %v1857 = vsel %vm1248, %v1843, 0
    %1859 = vmatprep.subr.mxu0 0.0
    %1860 = vmatpush1.msra.mxu0 %v1844
    %1861 = vmatprep.subr.mxu0 0.0
    %1862 = vmatpush1.msra.mxu0 %v1845
    %1863 = vmatprep.subr.mxu0 0.0
    %1864 = vmatpush1.msra.mxu0 %v1846
    %1865 = vmatprep.subr.mxu0 0.0
    %1866 = vmatpush1.msra.mxu0 %v1847
    %1867 = vmatprep.subr.mxu0 0.0
    %1868 = vmatpush1.msra.mxu0 %v1848
    %1869 = vmatprep.subr.mxu0 0.0
    %1870 = vmatpush1.msra.mxu0 %v1849
    %1871 = vmatprep.subr.mxu0 0.0
    %1872 = vmatpush1.msra.mxu0 %v1850
    %1873 = vmatprep.subr.mxu0 0.0
    %1874 = vmatpush1.msra.mxu0 %v1851
    %1875 = vmatprep.subr.mxu0 0.0
    %1876 = vmatpush1.msra.mxu0 %v1852
    %1877 = vmatprep.subr.mxu0 0.0
    %1878 = vmatpush1.msra.mxu0 %v1853
    %1879 = vmatprep.subr.mxu0 0.0
    %1880 = vmatpush1.msra.mxu0 %v1854
    %1881 = vmatprep.subr.mxu0 0.0
    %1882 = vmatpush1.msra.mxu0 %v1855
    %1883 = vmatprep.subr.mxu0 0.0
    %1884 = vmatpush1.msra.mxu0 0.0
    %1885 = vmatprep.subr.mxu0 0.0
    %1886 = vmatpush1.msra.mxu0 0.0
    %1887 = vmatprep.subr.mxu0 0.0
    %1888 = vmatpush1.msra.mxu0 0.0
    %1889 = vmatprep.subr.mxu0 0.0
    %1890 = vmatpush1.msra.mxu0 0.0
    %1891 = vmatprep.subr.mxu0 0.0
    %1892 = vmatpush1.msra.mxu0 0.0
    %1893 = vmatprep.subr.mxu0 0.0
    %1894 = vmatpush1.msra.mxu0 0.0
    %1895 = vmatprep.subr.mxu0 0.0
    %1896 = vmatpush1.msra.mxu0 0.0
    %1897 = vmatprep.subr.mxu0 0.0
    %1898 = vmatpush1.msra.mxu0 0.0
    %1899 = vmatprep.subr.mxu0 0.0
    %1900 = vmatpush1.msra.mxu0 0.0
    %1901 = vmatprep.subr.mxu0 0.0
    %1902 = vmatpush1.msra.mxu0 0.0
    %1903 = vmatprep.subr.mxu0 0.0
    %1904 = vmatpush1.msra.mxu0 0.0
    %1905 = vmatprep.subr.mxu0 0.0
    %1906 = vmatpush1.msra.mxu0 0.0
    %1907 = vmatprep.subr.mxu0 0.0
    %1908 = vmatpush1.msra.mxu0 0.0
    %1909 = vmatprep.subr.mxu0 0.0
    %1910 = vmatpush1.msra.mxu0 0.0
    %1911 = vmatprep.subr.mxu0 0.0
    %1912 = vmatpush1.msra.mxu0 0.0
    %1913 = vmatprep.subr.mxu0 0.0
    %1914 = vmatpush1.msra.mxu0 0.0
    %1915 = vmatprep.subr.mxu0 0.0
    %1916 = vmatpush1.msra.mxu0 0.0
    %1917 = vmatprep.subr.mxu0 0.0
    %1918 = vmatpush1.msra.mxu0 0.0
    %1919 = vmatprep.subr.mxu0 0.0
    %1920 = vmatpush1.msra.mxu0 0.0
    %1921 = vmatprep.subr.mxu0 0.0
    %1922 = vmatpush1.msra.mxu0 0.0
    %1923 = vmatprep.mubr.f32.mxu0 0.0
    %1924 = vmatmul.mubr.f32.gmra.mrb[0].mxu0 %v1857
    %v1925 = vpop.f32.mrb[0].mxu0
    %v1926 = vadd.f32 %v1212, %v1925
    %v1927 = vpop.f32.mrb[0].mxu0
    %1928 = vdwg.mxu0
    %v1929 = vtanh.pop %v1926
    %v1930 = vxor.u32 %v1926, 2147483648
    %v1931 = vmul.f32 %v1930, 1.442695
    %v1932 = vpow.pop %v1931
    %v1933 = vadd.f32 %v1932, 1.0
    %v1934 = vrcp.pop %v1933
    %v1935 = vmul.f32 1.0, %v1934
    %v1936 = vsel %vm78, %v1929, %v1935
    %1938 = vrot.lane.b32.xlu0 %v1819, 32
    %v1939 = vpop.permute.xlu0 %1938
    %v1941 = vmul.f32 %v1936, %v1939
    %1943 = vrot.lane.b32.xlu0 %v1936, 64
    %v1944 = vpop.permute.xlu0 %1943
    %v1946 = vmul.f32 %v1936, %v1944
    %1948 = vrot.lane.b32.xlu0 %v1946, 32
    %v1949 = vpop.permute.xlu0 %1948
    %v1951 = vadd.f32 %v1941, %v1949
    %v1952 = vtanh.pop %v1951
    %1954 = vrot.lane.b32.xlu0 %v1952, 64
    %v1955 = vpop.permute.xlu0 %1954
    %v1957 = vmul.f32 %v1936, %v1955
    %1959 = vrot.lane.b32.xlu0 %v1957, 32
    %v1960 = vpop.permute.xlu0 %1959
    %v1962 = vsel %vm771, %v1960, 0.0
    %1963 = vst.msk [vmem:[%s1812] sm:$0xf] %vm209, %v1962
    %1964 = vst.msk [vmem:[%s1810] sm:$0xf] %vm1354, %v1962
    %v1965 = vsel %vm771, %v1960, %v1814
    %1967 = vrot.lane.b32.xlu0 %v1951, 96
    %v1968 = vpop.permute.xlu0 %1967
    %v1970 = vsel %vm771, %v1968, %v1819
    %v1971 = vld [vmem:[%s918] sm:$0xf]
    %v1972 = vld [vmem:[%s499] sm:$0xf]
    %v1973 = vld [vmem:[%s493] sm:$0xf]
    %v1974 = vld [vmem:[%s924] sm:$0xf]
    %1976 = vrot.lane.b32.xlu0 %v1972, 16
    %v1977 = vpop.permute.xlu0 %1976
    %1980 = vrot.lane.b32.xlu0 %v1973, 32
    %v1981 = vpop.permute.xlu0 %1980
    %1984 = vrot.lane.b32.xlu0 %v1974, 48
    %v1985 = vpop.permute.xlu0 %1984
    %1988 = vrot.lane.b32.xlu0 %v1965, 64
    %v1989 = vpop.permute.xlu0 %1988
    %v1991 = vsel %vm95, %v1971, %v1977
    %v1992 = vsel %vm1231, %v1991, %v1981
    %v1993 = vsel %vm103, %v1992, %v1985
    %v1994 = vsel %vm1234, %v1993, %v1989
    %v1995 = vld [vmem:[#allocation9] sm:$0xff]
    %v1996 = vld [vmem:[#allocation9 + $0x8] sm:$0xff]
    %v1997 = vld [vmem:[#allocation9 + $0x10] sm:$0xff]
    %v1998 = vld [vmem:[#allocation9 + $0x18] sm:$0xff]
    %v1999 = vld [vmem:[#allocation9 + $0x20] sm:$0xff]
    %v2000 = vld [vmem:[#allocation9 + $0x28] sm:$0xff]
    %v2001 = vld [vmem:[#allocation9 + $0x30] sm:$0xff]
    %v2002 = vld [vmem:[#allocation9 + $0x38] sm:$0xff]
    %v2003 = vld [vmem:[#allocation9 + $0x40] sm:$0xff]
    %v2004 = vld [vmem:[#allocation9 + $0x48] sm:$0xff]
    %v2005 = vld [vmem:[#allocation9 + $0x50] sm:$0xff]
    %v2006 = vld [vmem:[#allocation9 + $0x58] sm:$0xff]
    %v2008 = vsel %vm1248, %v1994, 0
    %2010 = vmatprep.subr.mxu0 0.0
    %2011 = vmatpush1.msra.mxu0 %v1995
    %2012 = vmatprep.subr.mxu0 0.0
    %2013 = vmatpush1.msra.mxu0 %v1996
    %2014 = vmatprep.subr.mxu0 0.0
    %2015 = vmatpush1.msra.mxu0 %v1997
    %2016 = vmatprep.subr.mxu0 0.0
    %2017 = vmatpush1.msra.mxu0 %v1998
    %2018 = vmatprep.subr.mxu0 0.0
    %2019 = vmatpush1.msra.mxu0 %v1999
    %2020 = vmatprep.subr.mxu0 0.0
    %2021 = vmatpush1.msra.mxu0 %v2000
    %2022 = vmatprep.subr.mxu0 0.0
    %2023 = vmatpush1.msra.mxu0 %v2001
    %2024 = vmatprep.subr.mxu0 0.0
    %2025 = vmatpush1.msra.mxu0 %v2002
    %2026 = vmatprep.subr.mxu0 0.0
    %2027 = vmatpush1.msra.mxu0 %v2003
    %2028 = vmatprep.subr.mxu0 0.0
    %2029 = vmatpush1.msra.mxu0 %v2004
    %2030 = vmatprep.subr.mxu0 0.0
    %2031 = vmatpush1.msra.mxu0 %v2005
    %2032 = vmatprep.subr.mxu0 0.0
    %2033 = vmatpush1.msra.mxu0 %v2006
    %2034 = vmatprep.subr.mxu0 0.0
    %2035 = vmatpush1.msra.mxu0 0.0
    %2036 = vmatprep.subr.mxu0 0.0
    %2037 = vmatpush1.msra.mxu0 0.0
    %2038 = vmatprep.subr.mxu0 0.0
    %2039 = vmatpush1.msra.mxu0 0.0
    %2040 = vmatprep.subr.mxu0 0.0
    %2041 = vmatpush1.msra.mxu0 0.0
    %2042 = vmatprep.subr.mxu0 0.0
    %2043 = vmatpush1.msra.mxu0 0.0
    %2044 = vmatprep.subr.mxu0 0.0
    %2045 = vmatpush1.msra.mxu0 0.0
    %2046 = vmatprep.subr.mxu0 0.0
    %2047 = vmatpush1.msra.mxu0 0.0
    %2048 = vmatprep.subr.mxu0 0.0
    %2049 = vmatpush1.msra.mxu0 0.0
    %2050 = vmatprep.subr.mxu0 0.0
    %2051 = vmatpush1.msra.mxu0 0.0
    %2052 = vmatprep.subr.mxu0 0.0
    %2053 = vmatpush1.msra.mxu0 0.0
    %2054 = vmatprep.subr.mxu0 0.0
    %2055 = vmatpush1.msra.mxu0 0.0
    %2056 = vmatprep.subr.mxu0 0.0
    %2057 = vmatpush1.msra.mxu0 0.0
    %2058 = vmatprep.subr.mxu0 0.0
    %2059 = vmatpush1.msra.mxu0 0.0
    %2060 = vmatprep.subr.mxu0 0.0
    %2061 = vmatpush1.msra.mxu0 0.0
    %2062 = vmatprep.subr.mxu0 0.0
    %2063 = vmatpush1.msra.mxu0 0.0
    %2064 = vmatprep.subr.mxu0 0.0
    %2065 = vmatpush1.msra.mxu0 0.0
    %2066 = vmatprep.subr.mxu0 0.0
    %2067 = vmatpush1.msra.mxu0 0.0
    %2068 = vmatprep.subr.mxu0 0.0
    %2069 = vmatpush1.msra.mxu0 0.0
    %2070 = vmatprep.subr.mxu0 0.0
    %2071 = vmatpush1.msra.mxu0 0.0
    %2072 = vmatprep.subr.mxu0 0.0
    %2073 = vmatpush1.msra.mxu0 0.0
    %2074 = vmatprep.mubr.f32.mxu0 0.0
    %2075 = vmatmul.mubr.f32.gmra.mrb[0].mxu0 %v2008
    %v2076 = vpop.f32.mrb[0].mxu0
    %v2077 = vadd.f32 %v1212, %v2076
    %v2078 = vpop.f32.mrb[0].mxu0
    %2079 = vdwg.mxu0
    %v2080 = vtanh.pop %v2077
    %v2081 = vxor.u32 %v2077, 2147483648
    %v2082 = vmul.f32 %v2081, 1.442695
    %v2083 = vpow.pop %v2082
    %v2084 = vadd.f32 %v2083, 1.0
    %v2085 = vrcp.pop %v2084
    %v2086 = vmul.f32 1.0, %v2085
    %v2087 = vsel %vm78, %v2080, %v2086
    %2089 = vrot.lane.b32.xlu0 %v1970, 32
    %v2090 = vpop.permute.xlu0 %2089
    %v2092 = vmul.f32 %v2087, %v2090
    %2094 = vrot.lane.b32.xlu0 %v2087, 64
    %v2095 = vpop.permute.xlu0 %2094
    %v2097 = vmul.f32 %v2087, %v2095
    %2099 = vrot.lane.b32.xlu0 %v2097, 32
    %v2100 = vpop.permute.xlu0 %2099
    %v2102 = vadd.f32 %v2092, %v2100
    %v2103 = vtanh.pop %v2102
    %2105 = vrot.lane.b32.xlu0 %v2103, 64
    %v2106 = vpop.permute.xlu0 %2105
    %v2108 = vmul.f32 %v2087, %v2106
    %2110 = vrot.lane.b32.xlu0 %v2108, 32
    %v2111 = vpop.permute.xlu0 %2110
    %v2113 = vsel %vm912, %v2111, 0.0
    %2114 = vst.msk [vmem:[%s1659] sm:$0xf] %vm209, %v2113
    %2115 = vst.msk [vmem:[%s1657] sm:$0xf] %vm1354, %v2113
    %v2116 = vsel %vm912, %v2111, %v1965
    %2118 = vrot.lane.b32.xlu0 %v2102, 96
    %v2119 = vpop.permute.xlu0 %2118
    %v2121 = vsel %vm912, %v2119, %v1970
    %v2122 = vld [vmem:[%s1059] sm:$0xf]
    %v2123 = vld [vmem:[%s356] sm:$0xf]
    %v2124 = vld [vmem:[%s350] sm:$0xf]
    %v2125 = vld [vmem:[%s1065] sm:$0xf]
    %2127 = vrot.lane.b32.xlu0 %v2123, 16
    %v2128 = vpop.permute.xlu0 %2127
    %2131 = vrot.lane.b32.xlu0 %v2124, 32
    %v2132 = vpop.permute.xlu0 %2131
    %2135 = vrot.lane.b32.xlu0 %v2125, 48
    %v2136 = vpop.permute.xlu0 %2135
    %2139 = vrot.lane.b32.xlu0 %v2116, 64
    %v2140 = vpop.permute.xlu0 %2139
    %v2142 = vsel %vm95, %v2122, %v2128
    %v2143 = vsel %vm1231, %v2142, %v2132
    %v2144 = vsel %vm103, %v2143, %v2136
    %v2145 = vsel %vm1234, %v2144, %v2140
    %v2146 = vld [vmem:[#allocation9] sm:$0xff]
    %v2147 = vld [vmem:[#allocation9 + $0x8] sm:$0xff]
    %v2148 = vld [vmem:[#allocation9 + $0x10] sm:$0xff]
    %v2149 = vld [vmem:[#allocation9 + $0x18] sm:$0xff]
    %v2150 = vld [vmem:[#allocation9 + $0x20] sm:$0xff]
    %v2151 = vld [vmem:[#allocation9 + $0x28] sm:$0xff]
    %v2152 = vld [vmem:[#allocation9 + $0x30] sm:$0xff]
    %v2153 = vld [vmem:[#allocation9 + $0x38] sm:$0xff]
    %v2154 = vld [vmem:[#allocation9 + $0x40] sm:$0xff]
    %v2155 = vld [vmem:[#allocation9 + $0x48] sm:$0xff]
    %v2156 = vld [vmem:[#allocation9 + $0x50] sm:$0xff]
    %v2157 = vld [vmem:[#allocation9 + $0x58] sm:$0xff]
    %v2159 = vsel %vm1248, %v2145, 0
    %2161 = vmatprep.subr.mxu0 0.0
    %2162 = vmatpush1.msra.mxu0 %v2146
    %2163 = vmatprep.subr.mxu0 0.0
    %2164 = vmatpush1.msra.mxu0 %v2147
    %2165 = vmatprep.subr.mxu0 0.0
    %2166 = vmatpush1.msra.mxu0 %v2148
    %2167 = vmatprep.subr.mxu0 0.0
    %2168 = vmatpush1.msra.mxu0 %v2149
    %2169 = vmatprep.subr.mxu0 0.0
    %2170 = vmatpush1.msra.mxu0 %v2150
    %2171 = vmatprep.subr.mxu0 0.0
    %2172 = vmatpush1.msra.mxu0 %v2151
    %2173 = vmatprep.subr.mxu0 0.0
    %2174 = vmatpush1.msra.mxu0 %v2152
    %2175 = vmatprep.subr.mxu0 0.0
    %2176 = vmatpush1.msra.mxu0 %v2153
    %2177 = vmatprep.subr.mxu0 0.0
    %2178 = vmatpush1.msra.mxu0 %v2154
    %2179 = vmatprep.subr.mxu0 0.0
    %2180 = vmatpush1.msra.mxu0 %v2155
    %2181 = vmatprep.subr.mxu0 0.0
    %2182 = vmatpush1.msra.mxu0 %v2156
    %2183 = vmatprep.subr.mxu0 0.0
    %2184 = vmatpush1.msra.mxu0 %v2157
    %2185 = vmatprep.subr.mxu0 0.0
    %2186 = vmatpush1.msra.mxu0 0.0
    %2187 = vmatprep.subr.mxu0 0.0
    %2188 = vmatpush1.msra.mxu0 0.0
    %2189 = vmatprep.subr.mxu0 0.0
    %2190 = vmatpush1.msra.mxu0 0.0
    %2191 = vmatprep.subr.mxu0 0.0
    %2192 = vmatpush1.msra.mxu0 0.0
    %2193 = vmatprep.subr.mxu0 0.0
    %2194 = vmatpush1.msra.mxu0 0.0
    %2195 = vmatprep.subr.mxu0 0.0
    %2196 = vmatpush1.msra.mxu0 0.0
    %2197 = vmatprep.subr.mxu0 0.0
    %2198 = vmatpush1.msra.mxu0 0.0
    %2199 = vmatprep.subr.mxu0 0.0
    %2200 = vmatpush1.msra.mxu0 0.0
    %2201 = vmatprep.subr.mxu0 0.0
    %2202 = vmatpush1.msra.mxu0 0.0
    %2203 = vmatprep.subr.mxu0 0.0
    %2204 = vmatpush1.msra.mxu0 0.0
    %2205 = vmatprep.subr.mxu0 0.0
    %2206 = vmatpush1.msra.mxu0 0.0
    %2207 = vmatprep.subr.mxu0 0.0
    %2208 = vmatpush1.msra.mxu0 0.0
    %2209 = vmatprep.subr.mxu0 0.0
    %2210 = vmatpush1.msra.mxu0 0.0
    %2211 = vmatprep.subr.mxu0 0.0
    %2212 = vmatpush1.msra.mxu0 0.0
    %2213 = vmatprep.subr.mxu0 0.0
    %2214 = vmatpush1.msra.mxu0 0.0
    %2215 = vmatprep.subr.mxu0 0.0
    %2216 = vmatpush1.msra.mxu0 0.0
    %2217 = vmatprep.subr.mxu0 0.0
    %2218 = vmatpush1.msra.mxu0 0.0
    %2219 = vmatprep.subr.mxu0 0.0
    %2220 = vmatpush1.msra.mxu0 0.0
    %2221 = vmatprep.subr.mxu0 0.0
    %2222 = vmatpush1.msra.mxu0 0.0
    %2223 = vmatprep.subr.mxu0 0.0
    %2224 = vmatpush1.msra.mxu0 0.0
    %2225 = vmatprep.mubr.f32.mxu0 0.0
    %2226 = vmatmul.mubr.f32.gmra.mrb[0].mxu0 %v2159
    %v2227 = vpop.f32.mrb[0].mxu0
    %v2228 = vadd.f32 %v1212, %v2227
    %v2229 = vpop.f32.mrb[0].mxu0
    %2230 = vdwg.mxu0
    %v2231 = vtanh.pop %v2228
    %v2232 = vxor.u32 %v2228, 2147483648
    %v2233 = vmul.f32 %v2232, 1.442695
    %v2234 = vpow.pop %v2233
    %v2235 = vadd.f32 %v2234, 1.0
    %v2236 = vrcp.pop %v2235
    %v2237 = vmul.f32 1.0, %v2236
    %v2238 = vsel %vm78, %v2231, %v2237
    %2240 = vrot.lane.b32.xlu0 %v2121, 32
    %v2241 = vpop.permute.xlu0 %2240
    %v2243 = vmul.f32 %v2238, %v2241
    %2245 = vrot.lane.b32.xlu0 %v2238, 64
    %v2246 = vpop.permute.xlu0 %2245
    %v2248 = vmul.f32 %v2238, %v2246
    %2250 = vrot.lane.b32.xlu0 %v2248, 32
    %v2251 = vpop.permute.xlu0 %2250
    %v2253 = vadd.f32 %v2243, %v2251
    %v2254 = vtanh.pop %v2253
    %2256 = vrot.lane.b32.xlu0 %v2254, 64
    %v2257 = vpop.permute.xlu0 %2256
    %v2259 = vmul.f32 %v2238, %v2257
    %2261 = vrot.lane.b32.xlu0 %v2259, 32
    %v2262 = vpop.permute.xlu0 %2261
    %v2264 = vsel %vm1053, %v2262, 0.0
    %2265 = vst.msk [vmem:[%s1506] sm:$0xf] %vm209, %v2264
    %2266 = vst.msk [vmem:[%s1504] sm:$0xf] %vm1354, %v2264
    %v2267 = vsel %vm1053, %v2262, %v2116
    %2269 = vrot.lane.b32.xlu0 %v2253, 96
    %v2270 = vpop.permute.xlu0 %2269
    %v2272 = vsel %vm1053, %v2270, %v2121
    %v2273 = vld [vmem:[%s1200] sm:$0xf]
    %v2274 = vld [vmem:[%s215] sm:$0xf]
    %v2275 = vld [vmem:[#allocation2] sm:$0xf]
    %v2276 = vld [vmem:[#allocation3] sm:$0xf]
    %2278 = vrot.lane.b32.xlu0 %v2274, 16
    %v2279 = vpop.permute.xlu0 %2278
    %2282 = vrot.lane.b32.xlu0 %v2275, 32
    %v2283 = vpop.permute.xlu0 %2282
    %2286 = vrot.lane.b32.xlu0 %v2276, 48
    %v2287 = vpop.permute.xlu0 %2286
    %2290 = vrot.lane.b32.xlu0 %v2267, 64
    %v2291 = vpop.permute.xlu0 %2290
    %v2293 = vsel %vm95, %v2273, %v2279
    %v2294 = vsel %vm1231, %v2293, %v2283
    %v2295 = vsel %vm103, %v2294, %v2287
    %v2296 = vsel %vm1234, %v2295, %v2291
    %v2297 = vld [vmem:[#allocation9] sm:$0xff]
    %v2298 = vld [vmem:[#allocation9 + $0x8] sm:$0xff]
    %v2299 = vld [vmem:[#allocation9 + $0x10] sm:$0xff]
    %v2300 = vld [vmem:[#allocation9 + $0x18] sm:$0xff]
    %v2301 = vld [vmem:[#allocation9 + $0x20] sm:$0xff]
    %v2302 = vld [vmem:[#allocation9 + $0x28] sm:$0xff]
    %v2303 = vld [vmem:[#allocation9 + $0x30] sm:$0xff]
    %v2304 = vld [vmem:[#allocation9 + $0x38] sm:$0xff]
    %v2305 = vld [vmem:[#allocation9 + $0x40] sm:$0xff]
    %v2306 = vld [vmem:[#allocation9 + $0x48] sm:$0xff]
    %v2307 = vld [vmem:[#allocation9 + $0x50] sm:$0xff]
    %v2308 = vld [vmem:[#allocation9 + $0x58] sm:$0xff]
    %v2310 = vsel %vm1248, %v2296, 0
    %2312 = vmatprep.subr.mxu0 0.0
    %2313 = vmatpush1.msra.mxu0 %v2297
    %2314 = vmatprep.subr.mxu0 0.0
    %2315 = vmatpush1.msra.mxu0 %v2298
    %2316 = vmatprep.subr.mxu0 0.0
    %2317 = vmatpush1.msra.mxu0 %v2299
    %2318 = vmatprep.subr.mxu0 0.0
    %2319 = vmatpush1.msra.mxu0 %v2300
    %2320 = vmatprep.subr.mxu0 0.0
    %2321 = vmatpush1.msra.mxu0 %v2301
    %2322 = vmatprep.subr.mxu0 0.0
    %2323 = vmatpush1.msra.mxu0 %v2302
    %2324 = vmatprep.subr.mxu0 0.0
    %2325 = vmatpush1.msra.mxu0 %v2303
    %2326 = vmatprep.subr.mxu0 0.0
    %2327 = vmatpush1.msra.mxu0 %v2304
    %2328 = vmatprep.subr.mxu0 0.0
    %2329 = vmatpush1.msra.mxu0 %v2305
    %2330 = vmatprep.subr.mxu0 0.0
    %2331 = vmatpush1.msra.mxu0 %v2306
    %2332 = vmatprep.subr.mxu0 0.0
    %2333 = vmatpush1.msra.mxu0 %v2307
    %2334 = vmatprep.subr.mxu0 0.0
    %2335 = vmatpush1.msra.mxu0 %v2308
    %2336 = vmatprep.subr.mxu0 0.0
    %2337 = vmatpush1.msra.mxu0 0.0
    %2338 = vmatprep.subr.mxu0 0.0
    %2339 = vmatpush1.msra.mxu0 0.0
    %2340 = vmatprep.subr.mxu0 0.0
    %2341 = vmatpush1.msra.mxu0 0.0
    %2342 = vmatprep.subr.mxu0 0.0
    %2343 = vmatpush1.msra.mxu0 0.0
    %2344 = vmatprep.subr.mxu0 0.0
    %2345 = vmatpush1.msra.mxu0 0.0
    %2346 = vmatprep.subr.mxu0 0.0
    %2347 = vmatpush1.msra.mxu0 0.0
    %2348 = vmatprep.subr.mxu0 0.0
    %2349 = vmatpush1.msra.mxu0 0.0
    %2350 = vmatprep.subr.mxu0 0.0
    %2351 = vmatpush1.msra.mxu0 0.0
    %2352 = vmatprep.subr.mxu0 0.0
    %2353 = vmatpush1.msra.mxu0 0.0
    %2354 = vmatprep.subr.mxu0 0.0
    %2355 = vmatpush1.msra.mxu0 0.0
    %2356 = vmatprep.subr.mxu0 0.0
    %2357 = vmatpush1.msra.mxu0 0.0
    %2358 = vmatprep.subr.mxu0 0.0
    %2359 = vmatpush1.msra.mxu0 0.0
    %2360 = vmatprep.subr.mxu0 0.0
    %2361 = vmatpush1.msra.mxu0 0.0
    %2362 = vmatprep.subr.mxu0 0.0
    %2363 = vmatpush1.msra.mxu0 0.0
    %2364 = vmatprep.subr.mxu0 0.0
    %2365 = vmatpush1.msra.mxu0 0.0
    %2366 = vmatprep.subr.mxu0 0.0
    %2367 = vmatpush1.msra.mxu0 0.0
    %2368 = vmatprep.subr.mxu0 0.0
    %2369 = vmatpush1.msra.mxu0 0.0
    %2370 = vmatprep.subr.mxu0 0.0
    %2371 = vmatpush1.msra.mxu0 0.0
    %2372 = vmatprep.subr.mxu0 0.0
    %2373 = vmatpush1.msra.mxu0 0.0
    %2374 = vmatprep.subr.mxu0 0.0
    %2375 = vmatpush1.msra.mxu0 0.0
    %2376 = vmatprep.mubr.f32.mxu0 0.0
    %2377 = vmatmul.mubr.f32.gmra.mrb[0].mxu0 %v2310
    %v2378 = vpop.f32.mrb[0].mxu0
    %v2379 = vadd.f32 %v1212, %v2378
    %v2380 = vpop.f32.mrb[0].mxu0
    %2381 = vdwg.mxu0
    %v2382 = vtanh.pop %v2379
    %v2383 = vxor.u32 %v2379, 2147483648
    %v2384 = vmul.f32 %v2383, 1.442695
    %v2385 = vpow.pop %v2384
    %v2386 = vadd.f32 %v2385, 1.0
    %v2387 = vrcp.pop %v2386
    %v2388 = vmul.f32 1.0, %v2387
    %v2389 = vsel %vm78, %v2382, %v2388
    %2391 = vrot.lane.b32.xlu0 %v2272, 32
    %v2392 = vpop.permute.xlu0 %2391
    %v2394 = vmul.f32 %v2389, %v2392
    %2396 = vrot.lane.b32.xlu0 %v2389, 64
    %v2397 = vpop.permute.xlu0 %2396
    %v2399 = vmul.f32 %v2389, %v2397
    %2401 = vrot.lane.b32.xlu0 %v2399, 32
    %v2402 = vpop.permute.xlu0 %2401
    %v2404 = vadd.f32 %v2394, %v2402
    %v2405 = vtanh.pop %v2404
    %2407 = vrot.lane.b32.xlu0 %v2405, 64
    %v2408 = vpop.permute.xlu0 %2407
    %v2410 = vmul.f32 %v2389, %v2408
    %2412 = vrot.lane.b32.xlu0 %v2410, 32
    %v2413 = vpop.permute.xlu0 %2412
    %v2415 = vsel %vm1194, %v2413, 0.0
    %2416 = vst.msk [vmem:[%s1353] sm:$0xf] %vm209, %v2415
    %2417 = vst.msk [vmem:[#allocation10] sm:$0xf] %vm1354, %v2415
    %v2418 = vsel %vm1194, %v2413, %v2267
    %2420 = vrot.lane.b32.xlu0 %v2404, 96
    %v2421 = vpop.permute.xlu0 %2420
    %v2423 = vsel %vm1194, %v2421, %v2272
    %2425 = vrot.lane.b32.xlu0 %v2418, 112
    %v2426 = vpop.permute.xlu0 %2425
    %2428 = vst.msk [vmem:[#allocation11] sm:$0xf] %vm209, %v2426
    %2429 = vrot.lane.b32.xlu0 %v2418, 16
    %v2430 = vpop.permute.xlu0 %2429
    %2432 = vst.msk [vmem:[#allocation11] sm:$0xf] %vm1354, %v2430
    %2434 = vrot.lane.b32.xlu0 %v2423, 112
    %v2435 = vpop.permute.xlu0 %2434
    %2437 = vst.msk [vmem:[#allocation13] sm:$0xf] %vm209, %v2435
    %2438 = vrot.lane.b32.xlu0 %v2423, 16
    %v2439 = vpop.permute.xlu0 %2438
    %2441 = vst.msk [vmem:[#allocation13] sm:$0xf] %vm1354, %v2439
    // Predicated region
    $region38: #{tpu_custom_call.1} parent=1 // pred_check
      _
    $region39: #{tpu_custom_call.1} parent=1 // pred_check_branch
      %2443 = sbr.rel (0) target = $region41
    $region40: #{tpu_custom_call.1} parent=1 // pred_region
      %s2445 = ssub.s32 512, 512
      %2446 = vsyncadd [#allocation6], %s2445
      %s2447 = sshll.u32 [#allocation10], 4
      %s2448 = int_to_ptr.vmem [resolvable:$true] %s2447
      %2453 = dma.vmem_to_hbm [thread:$0]  %s2448, 512, %s6, [#allocation6], 64, 64, 4
    $region41: #{tpu_custom_call.1} parent=1 // pred_fallthru
      _
    // Predicated region
    $region42: #{tpu_custom_call.1} parent=1 // pred_check
      _
    $region43: #{tpu_custom_call.1} parent=1 // pred_check_branch
      %2455 = sbr.rel (0) target = $region45
    $region44: #{tpu_custom_call.1} parent=1 // pred_region
      %s2457 = ssub.s32 64, 64
      %2458 = vsyncadd [#allocation12], %s2457
      %s2460 = sshll.u32 [#allocation11], 4
      %s2461 = int_to_ptr.vmem [resolvable:$true] %s2460
      %2463 = dma.vmem_to_hbm [thread:$0]  %s2461, 64, %s7, [#allocation12]
    $region45: #{tpu_custom_call.1} parent=1 // pred_fallthru
      _
    // Predicated region
    $region46: #{tpu_custom_call.1} parent=1 // pred_check
      _
    $region47: #{tpu_custom_call.1} parent=1 // pred_check_branch
      %2465 = sbr.rel (0) target = $region49
    $region48: #{tpu_custom_call.1} parent=1 // pred_region
      %s2467 = ssub.s32 64, 64
      %2468 = vsyncadd [#allocation12], %s2467
      %s2470 = sshll.u32 [#allocation13], 4
      %s2471 = int_to_ptr.vmem [resolvable:$true] %s2470
      %2473 = dma.vmem_to_hbm [thread:$0]  %s2471, 64, %s8, [#allocation12]
    $region49: #{tpu_custom_call.1} parent=1 // pred_fallthru
      _
    // Predicated region
    $region50: #{tpu_custom_call.1} parent=1 // pred_check
      _
    $region51: #{tpu_custom_call.1} parent=1 // pred_check_branch
      %2475 = sbr.rel (0) target = $region53
    $region52: #{tpu_custom_call.1} parent=1 // pred_region
      %2476 = dma.done [#allocation6], 512
    $region53: #{tpu_custom_call.1} parent=1 // pred_fallthru
      _
    // Predicated region
    $region54: #{tpu_custom_call.1} parent=1 // pred_check
      _
    $region55: #{tpu_custom_call.1} parent=1 // pred_check_branch
      %2478 = sbr.rel (0) target = $region57
    $region56: #{tpu_custom_call.1} parent=1 // pred_region
      %2479 = dma.done [#allocation12], 64
    $region57: #{tpu_custom_call.1} parent=1 // pred_fallthru
      _
    // Predicated region
    $region58: #{tpu_custom_call.1} parent=1 // pred_check
      _
    $region59: #{tpu_custom_call.1} parent=1 // pred_check_branch
      %2481 = sbr.rel (0) target = $region61
    $region60: #{tpu_custom_call.1} parent=1 // pred_region
      %2482 = dma.done [#allocation12], 64
    $region61: #{tpu_custom_call.1} parent=1 // pred_fallthru
      _
    %2483 = vsyncpa [#allocation5], 1
    %2484 = vsyncpa [#allocation8], 1
    %2485 = vsyncpa [#allocation6], 1
    %2486 = vsyncpa [#allocation12], 1

</llo_original>
